<compile_context>
chip_gen: v7x
topology: tpu7x:2x2x1
jax: 0.10.0
libtpu: 0.0.40
codegen_flags: <defaults>
</compile_context>

<pallas_src>
import functools

import jax
import jax.numpy as jnp
from jax import lax
from jax.experimental import pallas as pl
from jax.experimental.pallas import tpu as pltpu


LANE = 128                  # channel axes zero-padded to this lane width
MXU_DTYPE = jnp.bfloat16    # MXU input dtype (accumulation is always f32)


def _rup(n, m):
    return ((n + m - 1) // m) * m


# ----------------------------------------------------------------------------
# Fused kernel: the entire bottleneck block in one invocation (grid = ()).
# ----------------------------------------------------------------------------
def _bottleneck_kernel(*refs, stride, eps, shortcut_mode):
    o_ref, h1pad_ref, acc_ref = refs[-3:]
    if shortcut_mode == "proj":
        (x_ref, w1_ref, g1_ref, b1_ref, w2_ref, g2_ref, b2_ref,
         w3_ref, g3_ref, b3_ref, wsc_ref) = refs[:-3]
    else:
        (x_ref, w1_ref, g1_ref, b1_ref, w2_ref, g2_ref, b2_ref,
         w3_ref, g3_ref, b3_ref) = refs[:-3]
        wsc_ref = None

    N, H, W, cin_p = x_ref.shape
    cb_p, cout_p = w3_ref.shape
    _, Ho, Wo, _ = o_ref.shape
    s = stride
    rows_in = N * H * W
    rows_out = N * Ho * Wo

    def bn(y2d, g_ref, b_ref):
        # Training-mode batch norm (biased variance), one pass, folded affine.
        # Padded (all-zero gamma/beta) channels stay exactly zero.
        inv_rows = 1.0 / y2d.shape[0]
        mean = jnp.sum(y2d, axis=0, keepdims=True) * inv_rows
        ex2 = jnp.sum(y2d * y2d, axis=0, keepdims=True) * inv_rows
        var = ex2 - mean * mean
        scale = g_ref[...] * lax.rsqrt(var + eps)
        shift = b_ref[...] - mean * scale
        return y2d * scale + shift

    def ds(start, size):
        return pl.ds(start, size) if s == 1 else pl.ds(start, size, stride=s)

    def mm(a, b):
        return jnp.dot(a, b, preferred_element_type=jnp.float32)

    # ---- C1 (1x1)  [+ fused shortcut projection when stride==1] --------------
    x2d = x_ref[...].reshape(rows_in, cin_p)
    x_mx = x2d.astype(MXU_DTYPE)
    if shortcut_mode == "fused":
        y = mm(x_mx, w1_ref[...])              # (rows_in, cb_p + cout_p)
        c1 = y[:, :cb_p]
        short = y[:, cb_p:]
    else:
        c1 = mm(x_mx, w1_ref[...])             # (rows_in, cb_p)
        if shortcut_mode == "identity":
            short = x2d                        # f32 passthrough (stride 1)
        else:                                  # "proj": strided 1x1 projection
            xs = x_ref[:, ds(0, Ho), ds(0, Wo), :].reshape(rows_out, cin_p)
            short = mm(xs.astype(MXU_DTYPE), wsc_ref[...])

    # ---- BN1 + ReLU, stage into the pad=1 VMEM scratch ------------------------
    h1 = jnp.maximum(bn(c1, g1_ref, b1_ref), 0.0)
    Wp = h1pad_ref.shape[2]
    zrow = jnp.zeros((N, 1, Wp, cb_p), h1pad_ref.dtype)
    h1pad_ref[:, 0:1, :, :] = zrow                                   # top halo
    h1pad_ref[:, H + 1:H + 2, :, :] = zrow                           # bottom halo
    h1pad_ref[:, 1:H + 1, 0:1, :] = jnp.zeros((N, H, 1, cb_p), h1pad_ref.dtype)
    h1pad_ref[:, 1:H + 1, W + 1:Wp, :] = jnp.zeros(
        (N, H, Wp - (W + 1), cb_p), h1pad_ref.dtype)                 # right halo
    h1pad_ref[:, 1:H + 1, 1:W + 1, :] = h1.reshape(N, H, W, cb_p)    # interior

    # ---- C2 (3x3, stride s, pad 1) + BN2 + ReLU -------------------------------
    # Conv bias intentionally dropped: it cancels under training-mode BN.
    for kh in range(3):
        for kw in range(3):
            tap = h1pad_ref[:, ds(kh, Ho), ds(kw, Wo), :]            # (N,Ho,Wo,cb_p)
            part = mm(tap.reshape(rows_out, cb_p).astype(MXU_DTYPE), w2_ref[kh, kw])
            if kh == 0 and kw == 0:
                acc_ref[...] = part
            else:
                acc_ref[...] += part
    h2 = jnp.maximum(bn(acc_ref[...], g2_ref, b2_ref), 0.0)

    # ---- C3 (1x1) + BN3 + residual + ReLU --------------------------------------
    h3 = bn(mm(h2.astype(MXU_DTYPE), w3_ref[...]), g3_ref, b3_ref)
    out = jnp.maximum(h3 + short, 0.0)
    o_ref[...] = out.reshape(N, Ho, Wo, cout_p).astype(o_ref.dtype)


# ----------------------------------------------------------------------------
# Parameters (PyTorch OIHW layout) + one-time kernel-layout preparation
# ----------------------------------------------------------------------------
def init_bottleneck_params(key, indim, outdim):
    bdim = outdim // 4
    ks = jax.random.split(key, 11)

    def conv_w(k, cout, cin, ksz):
        n = ksz * ksz * cout                      # init_layer: N(0, sqrt(2/n))
        return jax.random.normal(k, (cout, cin, ksz, ksz), jnp.float32) * jnp.sqrt(2.0 / n)

    def affine(kg, kb, c):
        # init_layer uses gamma=1 / beta=0; perturb so the check exercises BN affine.
        return (1.0 + 0.1 * jax.random.normal(kg, (c,), jnp.float32),
                0.1 * jax.random.normal(kb, (c,), jnp.float32))

    g1, b1 = affine(ks[1], ks[2], bdim)
    g2, b2 = affine(ks[5], ks[6], bdim)
    g3, b3 = affine(ks[8], ks[9], outdim)
    params = dict(
        w1=conv_w(ks[0], bdim, indim, 1), g1=g1, b1=b1,
        w2=conv_w(ks[3], bdim, bdim, 3),
        cb2=0.1 * jax.random.normal(ks[4], (bdim,), jnp.float32),
        g2=g2, b2=b2,
        w3=conv_w(ks[7], outdim, bdim, 1), g3=g3, b3=b3,
    )
    if indim != outdim:
        params["wsc"] = conv_w(ks[10], outdim, indim, 1)
    return params


def _pad2d(a, rows, cols):
    return jnp.zeros((rows, cols), jnp.float32).at[:a.shape[0], :a.shape[1]].set(a)


def prepare_kernel_params(params, indim, outdim, half_res):
    """One-time (outside the jitted hot path): transpose weights to matmul
    layout, zero-pad channel axes to 128 lanes, cast MXU weights to bf16, and
    fuse the C1 + shortcut projections when stride == 1."""
    bdim = outdim // 4
    cin_p, cb_p, cout_p = _rup(indim, LANE), _rup(bdim, LANE), _rup(outdim, LANE)

    def vec(v, width):
        return _pad2d(v.reshape(1, -1), 1, width)

    w1 = _pad2d(params["w1"].reshape(bdim, indim).T, cin_p, cb_p)
    w2 = jnp.transpose(params["w2"], (2, 3, 1, 0))            # OIHW -> HWIO
    w2p = jnp.zeros((3, 3, cb_p, cb_p), jnp.float32).at[:, :, :bdim, :bdim].set(w2)
    w3 = _pad2d(params["w3"].reshape(outdim, bdim).T, cb_p, cout_p)

    kp = dict(
        g1=vec(params["g1"], cb_p), b1=vec(params["b1"], cb_p),
        g2=vec(params["g2"], cb_p), b2=vec(params["b2"], cb_p),
        g3=vec(params["g3"], cout_p), b3=vec(params["b3"], cout_p),
        w2=w2p.astype(MXU_DTYPE), w3=w3.astype(MXU_DTYPE),
    )
    # NOTE: params["cb2"] (C2 conv bias) is intentionally NOT exported -- it
    # cancels exactly under training-mode BN mean subtraction (dead compute).
    # TODO(synk): export it again if eval-mode BN (running stats) is added.

    if indim != outdim:
        wsc = _pad2d(params["wsc"].reshape(outdim, indim).T, cin_p, cout_p)
        if not half_res:
            # stride-1 projection: fuse with C1 into one 256-wide matmul.
            kp["w1"] = jnp.concatenate([w1, wsc], axis=1).astype(MXU_DTYPE)
        else:
            kp["w1"] = w1.astype(MXU_DTYPE)
            kp["wsc"] = wsc.astype(MXU_DTYPE)
    else:
        kp["w1"] = w1.astype(MXU_DTYPE)        # identity shortcut: no wsc at all
    return kp


# ----------------------------------------------------------------------------
# Forward wrapper
# ----------------------------------------------------------------------------
def _vmem_spec(shape):
    return pl.BlockSpec(shape, lambda: (0,) * len(shape))


@functools.partial(jax.jit, static_argnames=("outdim", "half_res"))
def bottleneck_forward(kp, x, *, outdim, half_res):
    """x: (N, indim, H, W) NCHW like the PyTorch module.  Returns NCHW."""
    N, cin, H, W = x.shape
    s = 2 if half_res else 1
    Ho = (H - 1) // s + 1
    Wo = (W - 1) // s + 1
    cin_p = kp["w1"].shape[0]
    cb_p, cout_p = kp["w3"].shape

    if W % 8 or Wo % 8:
        # TODO(synk): odd spatial widths would make in-kernel reshapes materialize copies.
        raise ValueError("W and W_out must be multiples of 8")

    # Static shortcut mode, derived from the prepared-parameter structure.
    if "wsc" in kp:
        shortcut_mode = "proj"
    elif kp["w1"].shape[1] == cb_p + cout_p:
        shortcut_mode = "fused"
        assert not half_res
    else:
        shortcut_mode = "identity"
        assert not half_res and cin_p == cout_p, "identity shortcut needs stride 1"

    # NHWC + lane padding: the only layout glue outside the kernel.  In a full
    # network keep lane-padded NHWC as the persistent activation format and do
    # this conversion only at the network boundary.
    x_nhwc = jnp.transpose(x, (0, 2, 3, 1))
    x_p = jnp.zeros((N, H, W, cin_p), jnp.float32).at[..., :cin].set(x_nhwc)

    args = [x_p, kp["w1"], kp["g1"], kp["b1"], kp["w2"], kp["g2"], kp["b2"],
            kp["w3"], kp["g3"], kp["b3"]]
    if shortcut_mode == "proj":
        args.append(kp["wsc"])

    h1pad_shape = (N, H + 2, _rup(W + 2, 8), cb_p)
    acc_shape = (N * Ho * Wo, cb_p)
    scratch_shapes = [pltpu.VMEM(h1pad_shape, jnp.float32),
                      pltpu.VMEM(acc_shape, jnp.float32)]

    # Explicit scoped-VMEM budget (default 16/32 MiB limits are hit long before
    # physical VMEM on larger shapes).
    footprint = sum(int(a.size) * a.dtype.itemsize for a in args)
    footprint += N * Ho * Wo * cout_p * 4                       # output
    for shp in (h1pad_shape, acc_shape):                        # scratch
        n = 1
        for d in shp:
            n *= d
        footprint += n * 4
    vmem_limit = int(max(32 << 20, 2 * footprint + (8 << 20)))

    out = pl.pallas_call(
        functools.partial(_bottleneck_kernel, stride=s, eps=1e-5,
                          shortcut_mode=shortcut_mode),
        out_shape=jax.ShapeDtypeStruct((N, Ho, Wo, cout_p), jnp.float32),
        in_specs=[_vmem_spec(a.shape) for a in args],
        out_specs=_vmem_spec((N, Ho, Wo, cout_p)),
        scratch_shapes=scratch_shapes,
        compiler_params=pltpu.CompilerParams(vmem_limit_bytes=vmem_limit),
    )(*args)

    out = out[..., :outdim]                      # drop lane padding
    return jnp.transpose(out, (0, 3, 1, 2))      # back to NCHW


# ----------------------------------------------------------------------------
# Pure-JAX reference (training-mode batch norm), for a silent correctness check
# ----------------------------------------------------------------------------
def bottleneck_reference(params, x, *, half_res, eps=1e-5):
    strides = (2, 2) if half_res else (1, 1)
    conv = functools.partial(lax.conv_general_dilated,
                             dimension_numbers=("NCHW", "OIHW", "NCHW"),
                             precision=lax.Precision.HIGHEST)

    def bn(y, g, b):
        m = jnp.mean(y, axis=(0, 2, 3), keepdims=True)
        v = jnp.mean(jnp.square(y - m), axis=(0, 2, 3), keepdims=True)
        return (y - m) / jnp.sqrt(v + eps) * g[None, :, None, None] + b[None, :, None, None]

    out = conv(x, params["w1"], window_strides=(1, 1), padding="VALID")
    out = jax.nn.relu(bn(out, params["g1"], params["b1"]))
    out = conv(out, params["w2"], window_strides=strides, padding=((1, 1), (1, 1)))
    out = out + params["cb2"][None, :, None, None]
    out = jax.nn.relu(bn(out, params["g2"], params["b2"]))
    out = conv(out, params["w3"], window_strides=(1, 1), padding="VALID")
    out = bn(out, params["g3"], params["b3"])
    short = (conv(x, params["wsc"], window_strides=strides, padding="VALID")
             if "wsc" in params else x)
    return jax.nn.relu(out + short)


def _run_and_check(kp_key, kx_key, indim, outdim, half_res, *, batch=2, spatial=16):
    params = init_bottleneck_params(kp_key, indim, outdim)
    kp = prepare_kernel_params(params, indim, outdim, half_res)
    x = jax.random.normal(kx_key, (batch, indim, spatial, spatial), jnp.float32)
    out = jax.block_until_ready(
        bottleneck_forward(kp, x, outdim=outdim, half_res=half_res))
    ref = bottleneck_reference(params, x, half_res=half_res)
    s = 2 if half_res else 1
    assert out.shape == (batch, outdim, spatial // s, spatial // s), out.shape
    # bf16 MXU inputs (f32 accumulation) vs a Precision.HIGHEST f32 reference.
    max_err = float(jnp.max(jnp.abs(out - ref)))
    assert jnp.allclose(out, ref, atol=5e-2, rtol=5e-2), max_err


if __name__ == "__main__":
    key = jax.random.PRNGKey(0)
    k_a, k_xa, k_b, k_xb, k_c, k_xc = jax.random.split(key, 6)

    # Config A: 1x1 projection shortcut + spatial downsampling (stride 2).
    _run_and_check(k_a, k_xa, indim=16, outdim=32, half_res=True)

    # Config B: identity shortcut (f32 passthrough, no matmul), stride 1.
    _run_and_check(k_b, k_xb, indim=32, outdim=32, half_res=False)

    # Config C: projection shortcut, stride 1 -> fused C1+shortcut matmul path.
    _run_and_check(k_c, k_xc, indim=16, outdim=32, half_res=False)

    print("KERNEL_OK")
</pallas_src>

<mosaic_0001>
module attributes {stable_mosaic.version = 11 : i64} {
  func.func @_bottleneck_kernel(%arg0: memref<2x16x16x128xf32, #tpu.memory_space<vmem>>, %arg1: memref<128x128xbf16, #tpu.memory_space<vmem>>, %arg2: memref<1x128xf32, #tpu.memory_space<vmem>>, %arg3: memref<1x128xf32, #tpu.memory_space<vmem>>, %arg4: memref<3x3x128x128xbf16, #tpu.memory_space<vmem>>, %arg5: memref<1x128xf32, #tpu.memory_space<vmem>>, %arg6: memref<1x128xf32, #tpu.memory_space<vmem>>, %arg7: memref<128x128xbf16, #tpu.memory_space<vmem>>, %arg8: memref<1x128xf32, #tpu.memory_space<vmem>>, %arg9: memref<1x128xf32, #tpu.memory_space<vmem>>, %arg10: memref<128x128xbf16, #tpu.memory_space<vmem>>, %arg11: memref<2x8x8x128xf32, #tpu.memory_space<vmem>>, %arg12: memref<2x18x24x128xf32, #tpu.memory_space<vmem>>, %arg13: memref<128x128xf32, #tpu.memory_space<vmem>>) attributes {dimension_semantics = [], scalar_prefetch = 0 : i64, scratch_operands = 2 : i64, tpu.core_type = #tpu.core_type<tc>} {
    %c0 = arith.constant 0 : index
    %c0_0 = arith.constant 0 : index
    %c0_1 = arith.constant 0 : index
    %c0_2 = arith.constant 0 : index
    %0 = vector.load %arg0[%c0, %c0_0, %c0_1, %c0_2] : memref<2x16x16x128xf32, #tpu.memory_space<vmem>>, vector<2x16x16x128xf32>
    %1 = vector.shape_cast %0 : vector<2x16x16x128xf32> to vector<512x128xf32>
    %2 = arith.truncf %1 : vector<512x128xf32> to vector<512x128xbf16>
    %c0_3 = arith.constant 0 : index
    %c0_4 = arith.constant 0 : index
    %3 = vector.load %arg1[%c0_3, %c0_4] : memref<128x128xbf16, #tpu.memory_space<vmem>>, vector<128x128xbf16>
    %cst = arith.constant dense<0.000000e+00> : vector<512x128xf32>
    %4 = tpu.matmul %2, %3, %cst {dimension_numbers = #tpu.dot_dimension_numbers<[1], [0], [0], [1], [0, 0, 1, 1], [], []>} : vector<512x128xbf16>, vector<128x128xbf16>, vector<512x128xf32> -> vector<512x128xf32>
    %c0_5 = arith.constant 0 : index
    %c0_6 = arith.constant 0 : index
    %c0_7 = arith.constant 0 : index
    %c0_8 = arith.constant 0 : index
    %5 = tpu.strided_load %arg0[%c0_5, %c0_6, %c0_7, %c0_8] {strides = array<i32: 1, 2, 2, 1>} : memref<2x16x16x128xf32, #tpu.memory_space<vmem>>, vector<2x8x8x128xf32>
    %6 = vector.shape_cast %5 : vector<2x8x8x128xf32> to vector<128x128xf32>
    %7 = arith.truncf %6 : vector<128x128xf32> to vector<128x128xbf16>
    %c0_9 = arith.constant 0 : index
    %c0_10 = arith.constant 0 : index
    %8 = vector.load %arg10[%c0_9, %c0_10] : memref<128x128xbf16, #tpu.memory_space<vmem>>, vector<128x128xbf16>
    %cst_11 = arith.constant dense<0.000000e+00> : vector<128x128xf32>
    %9 = tpu.matmul %7, %8, %cst_11 {dimension_numbers = #tpu.dot_dimension_numbers<[1], [0], [0], [1], [0, 0, 1, 1], [], []>} : vector<128x128xbf16>, vector<128x128xbf16>, vector<128x128xf32> -> vector<128x128xf32>
    %cst_12 = arith.constant dense<0.000000e+00> : vector<128xf32>
    %10 = vector.multi_reduction <add>, %4, %cst_12 [0] : vector<512x128xf32> to vector<128xf32>
    %11 = vector.shape_cast %10 : vector<128xf32> to vector<1x128xf32>
    %cst_13 = arith.constant 0.001953125 : f32
    %12 = vector.broadcast %cst_13 : f32 to vector<1x128xf32>
    %13 = arith.mulf %11, %12 : vector<1x128xf32>
    %14 = arith.mulf %4, %4 : vector<512x128xf32>
    %cst_14 = arith.constant dense<0.000000e+00> : vector<128xf32>
    %15 = vector.multi_reduction <add>, %14, %cst_14 [0] : vector<512x128xf32> to vector<128xf32>
    %16 = vector.shape_cast %15 : vector<128xf32> to vector<1x128xf32>
    %cst_15 = arith.constant 0.001953125 : f32
    %17 = vector.broadcast %cst_15 : f32 to vector<1x128xf32>
    %18 = arith.mulf %16, %17 : vector<1x128xf32>
    %19 = arith.mulf %13, %13 : vector<1x128xf32>
    %20 = arith.subf %18, %19 : vector<1x128xf32>
    %c0_16 = arith.constant 0 : index
    %c0_17 = arith.constant 0 : index
    %21 = vector.load %arg2[%c0_16, %c0_17] : memref<1x128xf32, #tpu.memory_space<vmem>>, vector<1x128xf32>
    %cst_18 = arith.constant 9.99999974E-6 : f32
    %22 = vector.broadcast %cst_18 : f32 to vector<1x128xf32>
    %23 = arith.addf %20, %22 : vector<1x128xf32>
    %24 = math.rsqrt %23 : vector<1x128xf32>
    %25 = arith.mulf %21, %24 : vector<1x128xf32>
    %c0_19 = arith.constant 0 : index
    %c0_20 = arith.constant 0 : index
    %26 = vector.load %arg3[%c0_19, %c0_20] : memref<1x128xf32, #tpu.memory_space<vmem>>, vector<1x128xf32>
    %27 = arith.mulf %13, %25 : vector<1x128xf32>
    %28 = arith.subf %26, %27 : vector<1x128xf32>
    %29 = vector.broadcast %25 : vector<1x128xf32> to vector<512x128xf32>
    %30 = arith.mulf %4, %29 : vector<512x128xf32>
    %31 = vector.broadcast %28 : vector<1x128xf32> to vector<512x128xf32>
    %32 = arith.addf %30, %31 : vector<512x128xf32>
    %cst_21 = arith.constant 0.000000e+00 : f32
    %33 = vector.broadcast %cst_21 : f32 to vector<512x128xf32>
    %34 = arith.maximumf %32, %33 : vector<512x128xf32>
    %cst_22 = arith.constant 0.000000e+00 : f32
    %35 = vector.broadcast %cst_22 : f32 to vector<2x1x24x128xf32>
    %c0_23 = arith.constant 0 : index
    %c0_24 = arith.constant 0 : index
    %c0_25 = arith.constant 0 : index
    %c0_26 = arith.constant 0 : index
    %36 = vector.load %arg12[%c0_23, %c0_24, %c0_25, %c0_26] : memref<2x18x24x128xf32, #tpu.memory_space<vmem>>, vector<2x1x24x128xf32>
    tpu.vector_store %arg12[%c0_23, %c0_24, %c0_25, %c0_26], %35 {strides = array<i32>} : memref<2x18x24x128xf32, #tpu.memory_space<vmem>>, vector<2x1x24x128xf32>,
    %c0_27 = arith.constant 0 : index
    %c17 = arith.constant 17 : index
    %c0_28 = arith.constant 0 : index
    %c0_29 = arith.constant 0 : index
    %37 = vector.load %arg12[%c0_27, %c17, %c0_28, %c0_29] : memref<2x18x24x128xf32, #tpu.memory_space<vmem>>, vector<2x1x24x128xf32>
    tpu.vector_store %arg12[%c0_27, %c17, %c0_28, %c0_29], %35 {strides = array<i32>} : memref<2x18x24x128xf32, #tpu.memory_space<vmem>>, vector<2x1x24x128xf32>,
    %cst_30 = arith.constant 0.000000e+00 : f32
    %38 = vector.broadcast %cst_30 : f32 to vector<2x16x1x128xf32>
    %c0_31 = arith.constant 0 : index
    %c1 = arith.constant 1 : index
    %c0_32 = arith.constant 0 : index
    %c0_33 = arith.constant 0 : index
    %39 = vector.load %arg12[%c0_31, %c1, %c0_32, %c0_33] : memref<2x18x24x128xf32, #tpu.memory_space<vmem>>, vector<2x16x1x128xf32>
    tpu.vector_store %arg12[%c0_31, %c1, %c0_32, %c0_33], %38 {strides = array<i32>} : memref<2x18x24x128xf32, #tpu.memory_space<vmem>>, vector<2x16x1x128xf32>,
    %cst_34 = arith.constant 0.000000e+00 : f32
    %40 = vector.broadcast %cst_34 : f32 to vector<2x16x7x128xf32>
    %c0_35 = arith.constant 0 : index
    %c1_36 = arith.constant 1 : index
    %c17_37 = arith.constant 17 : index
    %c0_38 = arith.constant 0 : index
    %41 = vector.load %arg12[%c0_35, %c1_36, %c17_37, %c0_38] : memref<2x18x24x128xf32, #tpu.memory_space<vmem>>, vector<2x16x7x128xf32>
    tpu.vector_store %arg12[%c0_35, %c1_36, %c17_37, %c0_38], %40 {strides = array<i32>} : memref<2x18x24x128xf32, #tpu.memory_space<vmem>>, vector<2x16x7x128xf32>,
    %42 = vector.shape_cast %34 : vector<512x128xf32> to vector<2x16x16x128xf32>
    %c0_39 = arith.constant 0 : index
    %c1_40 = arith.constant 1 : index
    %c1_41 = arith.constant 1 : index
    %c0_42 = arith.constant 0 : index
    %43 = vector.load %arg12[%c0_39, %c1_40, %c1_41, %c0_42] : memref<2x18x24x128xf32, #tpu.memory_space<vmem>>, vector<2x16x16x128xf32>
    tpu.vector_store %arg12[%c0_39, %c1_40, %c1_41, %c0_42], %42 {strides = array<i32>} : memref<2x18x24x128xf32, #tpu.memory_space<vmem>>, vector<2x16x16x128xf32>,
    %c0_43 = arith.constant 0 : index
    %c0_44 = arith.constant 0 : index
    %c0_45 = arith.constant 0 : index
    %c0_46 = arith.constant 0 : index
    %44 = tpu.strided_load %arg12[%c0_43, %c0_44, %c0_45, %c0_46] {strides = array<i32: 1, 2, 2, 1>} : memref<2x18x24x128xf32, #tpu.memory_space<vmem>>, vector<2x8x8x128xf32>
    %45 = vector.shape_cast %44 : vector<2x8x8x128xf32> to vector<128x128xf32>
    %46 = arith.truncf %45 : vector<128x128xf32> to vector<128x128xbf16>
    %c0_47 = arith.constant 0 : index
    %c0_48 = arith.constant 0 : index
    %c0_49 = arith.constant 0 : index
    %c0_50 = arith.constant 0 : index
    %47 = vector.load %arg4[%c0_47, %c0_48, %c0_49, %c0_50] : memref<3x3x128x128xbf16, #tpu.memory_space<vmem>>, vector<1x1x128x128xbf16>
    %48 = vector.shape_cast %47 : vector<1x1x128x128xbf16> to vector<128x128xbf16>
    %cst_51 = arith.constant dense<0.000000e+00> : vector<128x128xf32>
    %49 = tpu.matmul %46, %48, %cst_51 {dimension_numbers = #tpu.dot_dimension_numbers<[1], [0], [0], [1], [0, 0, 1, 1], [], []>} : vector<128x128xbf16>, vector<128x128xbf16>, vector<128x128xf32> -> vector<128x128xf32>
    %c0_52 = arith.constant 0 : index
    %c0_53 = arith.constant 0 : index
    %50 = vector.load %arg13[%c0_52, %c0_53] : memref<128x128xf32, #tpu.memory_space<vmem>>, vector<128x128xf32>
    tpu.vector_store %arg13[%c0_52, %c0_53], %49 {strides = array<i32>} : memref<128x128xf32, #tpu.memory_space<vmem>>, vector<128x128xf32>,
    %c0_54 = arith.constant 0 : index
    %c0_55 = arith.constant 0 : index
    %c1_56 = arith.constant 1 : index
    %c0_57 = arith.constant 0 : index
    %51 = tpu.strided_load %arg12[%c0_54, %c0_55, %c1_56, %c0_57] {strides = array<i32: 1, 2, 2, 1>} : memref<2x18x24x128xf32, #tpu.memory_space<vmem>>, vector<2x8x8x128xf32>
    %52 = vector.shape_cast %51 : vector<2x8x8x128xf32> to vector<128x128xf32>
    %53 = arith.truncf %52 : vector<128x128xf32> to vector<128x128xbf16>
    %c0_58 = arith.constant 0 : index
    %c1_59 = arith.constant 1 : index
    %c0_60 = arith.constant 0 : index
    %c0_61 = arith.constant 0 : index
    %54 = vector.load %arg4[%c0_58, %c1_59, %c0_60, %c0_61] : memref<3x3x128x128xbf16, #tpu.memory_space<vmem>>, vector<1x1x128x128xbf16>
    %55 = vector.shape_cast %54 : vector<1x1x128x128xbf16> to vector<128x128xbf16>
    %cst_62 = arith.constant dense<0.000000e+00> : vector<128x128xf32>
    %56 = tpu.matmul %53, %55, %cst_62 {dimension_numbers = #tpu.dot_dimension_numbers<[1], [0], [0], [1], [0, 0, 1, 1], [], []>} : vector<128x128xbf16>, vector<128x128xbf16>, vector<128x128xf32> -> vector<128x128xf32>
    %c0_63 = arith.constant 0 : index
    %c0_64 = arith.constant 0 : index
    %57 = vector.load %arg13[%c0_63, %c0_64] : memref<128x128xf32, #tpu.memory_space<vmem>>, vector<128x128xf32>
    %58 = arith.addf %57, %56 : vector<128x128xf32>
    %c0_65 = arith.constant 0 : index
    %c0_66 = arith.constant 0 : index
    %59 = vector.load %arg13[%c0_65, %c0_66] : memref<128x128xf32, #tpu.memory_space<vmem>>, vector<128x128xf32>
    tpu.vector_store %arg13[%c0_65, %c0_66], %58 {strides = array<i32>} : memref<128x128xf32, #tpu.memory_space<vmem>>, vector<128x128xf32>,
    %c0_67 = arith.constant 0 : index
    %c0_68 = arith.constant 0 : index
    %c2 = arith.constant 2 : index
    %c0_69 = arith.constant 0 : index
    %60 = tpu.strided_load %arg12[%c0_67, %c0_68, %c2, %c0_69] {strides = array<i32: 1, 2, 2, 1>} : memref<2x18x24x128xf32, #tpu.memory_space<vmem>>, vector<2x8x8x128xf32>
    %61 = vector.shape_cast %60 : vector<2x8x8x128xf32> to vector<128x128xf32>
    %62 = arith.truncf %61 : vector<128x128xf32> to vector<128x128xbf16>
    %c0_70 = arith.constant 0 : index
    %c2_71 = arith.constant 2 : index
    %c0_72 = arith.constant 0 : index
    %c0_73 = arith.constant 0 : index
    %63 = vector.load %arg4[%c0_70, %c2_71, %c0_72, %c0_73] : memref<3x3x128x128xbf16, #tpu.memory_space<vmem>>, vector<1x1x128x128xbf16>
    %64 = vector.shape_cast %63 : vector<1x1x128x128xbf16> to vector<128x128xbf16>
    %cst_74 = arith.constant dense<0.000000e+00> : vector<128x128xf32>
    %65 = tpu.matmul %62, %64, %cst_74 {dimension_numbers = #tpu.dot_dimension_numbers<[1], [0], [0], [1], [0, 0, 1, 1], [], []>} : vector<128x128xbf16>, vector<128x128xbf16>, vector<128x128xf32> -> vector<128x128xf32>
    %c0_75 = arith.constant 0 : index
    %c0_76 = arith.constant 0 : index
    %66 = vector.load %arg13[%c0_75, %c0_76] : memref<128x128xf32, #tpu.memory_space<vmem>>, vector<128x128xf32>
    %67 = arith.addf %66, %65 : vector<128x128xf32>
    %c0_77 = arith.constant 0 : index
    %c0_78 = arith.constant 0 : index
    %68 = vector.load %arg13[%c0_77, %c0_78] : memref<128x128xf32, #tpu.memory_space<vmem>>, vector<128x128xf32>
    tpu.vector_store %arg13[%c0_77, %c0_78], %67 {strides = array<i32>} : memref<128x128xf32, #tpu.memory_space<vmem>>, vector<128x128xf32>,
    %c0_79 = arith.constant 0 : index
    %c1_80 = arith.constant 1 : index
    %c0_81 = arith.constant 0 : index
    %c0_82 = arith.constant 0 : index
    %69 = tpu.strided_load %arg12[%c0_79, %c1_80, %c0_81, %c0_82] {strides = array<i32: 1, 2, 2, 1>} : memref<2x18x24x128xf32, #tpu.memory_space<vmem>>, vector<2x8x8x128xf32>
    %70 = vector.shape_cast %69 : vector<2x8x8x128xf32> to vector<128x128xf32>
    %71 = arith.truncf %70 : vector<128x128xf32> to vector<128x128xbf16>
    %c1_83 = arith.constant 1 : index
    %c0_84 = arith.constant 0 : index
    %c0_85 = arith.constant 0 : index
    %c0_86 = arith.constant 0 : index
    %72 = vector.load %arg4[%c1_83, %c0_84, %c0_85, %c0_86] : memref<3x3x128x128xbf16, #tpu.memory_space<vmem>>, vector<1x1x128x128xbf16>
    %73 = vector.shape_cast %72 : vector<1x1x128x128xbf16> to vector<128x128xbf16>
    %cst_87 = arith.constant dense<0.000000e+00> : vector<128x128xf32>
    %74 = tpu.matmul %71, %73, %cst_87 {dimension_numbers = #tpu.dot_dimension_numbers<[1], [0], [0], [1], [0, 0, 1, 1], [], []>} : vector<128x128xbf16>, vector<128x128xbf16>, vector<128x128xf32> -> vector<128x128xf32>
    %c0_88 = arith.constant 0 : index
    %c0_89 = arith.constant 0 : index
    %75 = vector.load %arg13[%c0_88, %c0_89] : memref<128x128xf32, #tpu.memory_space<vmem>>, vector<128x128xf32>
    %76 = arith.addf %75, %74 : vector<128x128xf32>
    %c0_90 = arith.constant 0 : index
    %c0_91 = arith.constant 0 : index
    %77 = vector.load %arg13[%c0_90, %c0_91] : memref<128x128xf32, #tpu.memory_space<vmem>>, vector<128x128xf32>
    tpu.vector_store %arg13[%c0_90, %c0_91], %76 {strides = array<i32>} : memref<128x128xf32, #tpu.memory_space<vmem>>, vector<128x128xf32>,
    %c0_92 = arith.constant 0 : index
    %c1_93 = arith.constant 1 : index
    %c1_94 = arith.constant 1 : index
    %c0_95 = arith.constant 0 : index
    %78 = tpu.strided_load %arg12[%c0_92, %c1_93, %c1_94, %c0_95] {strides = array<i32: 1, 2, 2, 1>} : memref<2x18x24x128xf32, #tpu.memory_space<vmem>>, vector<2x8x8x128xf32>
    %79 = vector.shape_cast %78 : vector<2x8x8x128xf32> to vector<128x128xf32>
    %80 = arith.truncf %79 : vector<128x128xf32> to vector<128x128xbf16>
    %c1_96 = arith.constant 1 : index
    %c1_97 = arith.constant 1 : index
    %c0_98 = arith.constant 0 : index
    %c0_99 = arith.constant 0 : index
    %81 = vector.load %arg4[%c1_96, %c1_97, %c0_98, %c0_99] : memref<3x3x128x128xbf16, #tpu.memory_space<vmem>>, vector<1x1x128x128xbf16>
    %82 = vector.shape_cast %81 : vector<1x1x128x128xbf16> to vector<128x128xbf16>
    %cst_100 = arith.constant dense<0.000000e+00> : vector<128x128xf32>
    %83 = tpu.matmul %80, %82, %cst_100 {dimension_numbers = #tpu.dot_dimension_numbers<[1], [0], [0], [1], [0, 0, 1, 1], [], []>} : vector<128x128xbf16>, vector<128x128xbf16>, vector<128x128xf32> -> vector<128x128xf32>
    %c0_101 = arith.constant 0 : index
    %c0_102 = arith.constant 0 : index
    %84 = vector.load %arg13[%c0_101, %c0_102] : memref<128x128xf32, #tpu.memory_space<vmem>>, vector<128x128xf32>
    %85 = arith.addf %84, %83 : vector<128x128xf32>
    %c0_103 = arith.constant 0 : index
    %c0_104 = arith.constant 0 : index
    %86 = vector.load %arg13[%c0_103, %c0_104] : memref<128x128xf32, #tpu.memory_space<vmem>>, vector<128x128xf32>
    tpu.vector_store %arg13[%c0_103, %c0_104], %85 {strides = array<i32>} : memref<128x128xf32, #tpu.memory_space<vmem>>, vector<128x128xf32>,
    %c0_105 = arith.constant 0 : index
    %c1_106 = arith.constant 1 : index
    %c2_107 = arith.constant 2 : index
    %c0_108 = arith.constant 0 : index
    %87 = tpu.strided_load %arg12[%c0_105, %c1_106, %c2_107, %c0_108] {strides = array<i32: 1, 2, 2, 1>} : memref<2x18x24x128xf32, #tpu.memory_space<vmem>>, vector<2x8x8x128xf32>
    %88 = vector.shape_cast %87 : vector<2x8x8x128xf32> to vector<128x128xf32>
    %89 = arith.truncf %88 : vector<128x128xf32> to vector<128x128xbf16>
    %c1_109 = arith.constant 1 : index
    %c2_110 = arith.constant 2 : index
    %c0_111 = arith.constant 0 : index
    %c0_112 = arith.constant 0 : index
    %90 = vector.load %arg4[%c1_109, %c2_110, %c0_111, %c0_112] : memref<3x3x128x128xbf16, #tpu.memory_space<vmem>>, vector<1x1x128x128xbf16>
    %91 = vector.shape_cast %90 : vector<1x1x128x128xbf16> to vector<128x128xbf16>
    %cst_113 = arith.constant dense<0.000000e+00> : vector<128x128xf32>
    %92 = tpu.matmul %89, %91, %cst_113 {dimension_numbers = #tpu.dot_dimension_numbers<[1], [0], [0], [1], [0, 0, 1, 1], [], []>} : vector<128x128xbf16>, vector<128x128xbf16>, vector<128x128xf32> -> vector<128x128xf32>
    %c0_114 = arith.constant 0 : index
    %c0_115 = arith.constant 0 : index
    %93 = vector.load %arg13[%c0_114, %c0_115] : memref<128x128xf32, #tpu.memory_space<vmem>>, vector<128x128xf32>
    %94 = arith.addf %93, %92 : vector<128x128xf32>
    %c0_116 = arith.constant 0 : index
    %c0_117 = arith.constant 0 : index
    %95 = vector.load %arg13[%c0_116, %c0_117] : memref<128x128xf32, #tpu.memory_space<vmem>>, vector<128x128xf32>
    tpu.vector_store %arg13[%c0_116, %c0_117], %94 {strides = array<i32>} : memref<128x128xf32, #tpu.memory_space<vmem>>, vector<128x128xf32>,
    %c0_118 = arith.constant 0 : index
    %c2_119 = arith.constant 2 : index
    %c0_120 = arith.constant 0 : index
    %c0_121 = arith.constant 0 : index
    %96 = tpu.strided_load %arg12[%c0_118, %c2_119, %c0_120, %c0_121] {strides = array<i32: 1, 2, 2, 1>} : memref<2x18x24x128xf32, #tpu.memory_space<vmem>>, vector<2x8x8x128xf32>
    %97 = vector.shape_cast %96 : vector<2x8x8x128xf32> to vector<128x128xf32>
    %98 = arith.truncf %97 : vector<128x128xf32> to vector<128x128xbf16>
    %c2_122 = arith.constant 2 : index
    %c0_123 = arith.constant 0 : index
    %c0_124 = arith.constant 0 : index
    %c0_125 = arith.constant 0 : index
    %99 = vector.load %arg4[%c2_122, %c0_123, %c0_124, %c0_125] : memref<3x3x128x128xbf16, #tpu.memory_space<vmem>>, vector<1x1x128x128xbf16>
    %100 = vector.shape_cast %99 : vector<1x1x128x128xbf16> to vector<128x128xbf16>
    %cst_126 = arith.constant dense<0.000000e+00> : vector<128x128xf32>
    %101 = tpu.matmul %98, %100, %cst_126 {dimension_numbers = #tpu.dot_dimension_numbers<[1], [0], [0], [1], [0, 0, 1, 1], [], []>} : vector<128x128xbf16>, vector<128x128xbf16>, vector<128x128xf32> -> vector<128x128xf32>
    %c0_127 = arith.constant 0 : index
    %c0_128 = arith.constant 0 : index
    %102 = vector.load %arg13[%c0_127, %c0_128] : memref<128x128xf32, #tpu.memory_space<vmem>>, vector<128x128xf32>
    %103 = arith.addf %102, %101 : vector<128x128xf32>
    %c0_129 = arith.constant 0 : index
    %c0_130 = arith.constant 0 : index
    %104 = vector.load %arg13[%c0_129, %c0_130] : memref<128x128xf32, #tpu.memory_space<vmem>>, vector<128x128xf32>
    tpu.vector_store %arg13[%c0_129, %c0_130], %103 {strides = array<i32>} : memref<128x128xf32, #tpu.memory_space<vmem>>, vector<128x128xf32>,
    %c0_131 = arith.constant 0 : index
    %c2_132 = arith.constant 2 : index
    %c1_133 = arith.constant 1 : index
    %c0_134 = arith.constant 0 : index
    %105 = tpu.strided_load %arg12[%c0_131, %c2_132, %c1_133, %c0_134] {strides = array<i32: 1, 2, 2, 1>} : memref<2x18x24x128xf32, #tpu.memory_space<vmem>>, vector<2x8x8x128xf32>
    %106 = vector.shape_cast %105 : vector<2x8x8x128xf32> to vector<128x128xf32>
    %107 = arith.truncf %106 : vector<128x128xf32> to vector<128x128xbf16>
    %c2_135 = arith.constant 2 : index
    %c1_136 = arith.constant 1 : index
    %c0_137 = arith.constant 0 : index
    %c0_138 = arith.constant 0 : index
    %108 = vector.load %arg4[%c2_135, %c1_136, %c0_137, %c0_138] : memref<3x3x128x128xbf16, #tpu.memory_space<vmem>>, vector<1x1x128x128xbf16>
    %109 = vector.shape_cast %108 : vector<1x1x128x128xbf16> to vector<128x128xbf16>
    %cst_139 = arith.constant dense<0.000000e+00> : vector<128x128xf32>
    %110 = tpu.matmul %107, %109, %cst_139 {dimension_numbers = #tpu.dot_dimension_numbers<[1], [0], [0], [1], [0, 0, 1, 1], [], []>} : vector<128x128xbf16>, vector<128x128xbf16>, vector<128x128xf32> -> vector<128x128xf32>
    %c0_140 = arith.constant 0 : index
    %c0_141 = arith.constant 0 : index
    %111 = vector.load %arg13[%c0_140, %c0_141] : memref<128x128xf32, #tpu.memory_space<vmem>>, vector<128x128xf32>
    %112 = arith.addf %111, %110 : vector<128x128xf32>
    %c0_142 = arith.constant 0 : index
    %c0_143 = arith.constant 0 : index
    %113 = vector.load %arg13[%c0_142, %c0_143] : memref<128x128xf32, #tpu.memory_space<vmem>>, vector<128x128xf32>
    tpu.vector_store %arg13[%c0_142, %c0_143], %112 {strides = array<i32>} : memref<128x128xf32, #tpu.memory_space<vmem>>, vector<128x128xf32>,
    %c0_144 = arith.constant 0 : index
    %c2_145 = arith.constant 2 : index
    %c2_146 = arith.constant 2 : index
    %c0_147 = arith.constant 0 : index
    %114 = tpu.strided_load %arg12[%c0_144, %c2_145, %c2_146, %c0_147] {strides = array<i32: 1, 2, 2, 1>} : memref<2x18x24x128xf32, #tpu.memory_space<vmem>>, vector<2x8x8x128xf32>
    %115 = vector.shape_cast %114 : vector<2x8x8x128xf32> to vector<128x128xf32>
    %116 = arith.truncf %115 : vector<128x128xf32> to vector<128x128xbf16>
    %c2_148 = arith.constant 2 : index
    %c2_149 = arith.constant 2 : index
    %c0_150 = arith.constant 0 : index
    %c0_151 = arith.constant 0 : index
    %117 = vector.load %arg4[%c2_148, %c2_149, %c0_150, %c0_151] : memref<3x3x128x128xbf16, #tpu.memory_space<vmem>>, vector<1x1x128x128xbf16>
    %118 = vector.shape_cast %117 : vector<1x1x128x128xbf16> to vector<128x128xbf16>
    %cst_152 = arith.constant dense<0.000000e+00> : vector<128x128xf32>
    %119 = tpu.matmul %116, %118, %cst_152 {dimension_numbers = #tpu.dot_dimension_numbers<[1], [0], [0], [1], [0, 0, 1, 1], [], []>} : vector<128x128xbf16>, vector<128x128xbf16>, vector<128x128xf32> -> vector<128x128xf32>
    %c0_153 = arith.constant 0 : index
    %c0_154 = arith.constant 0 : index
    %120 = vector.load %arg13[%c0_153, %c0_154] : memref<128x128xf32, #tpu.memory_space<vmem>>, vector<128x128xf32>
    %121 = arith.addf %120, %119 : vector<128x128xf32>
    %c0_155 = arith.constant 0 : index
    %c0_156 = arith.constant 0 : index
    %122 = vector.load %arg13[%c0_155, %c0_156] : memref<128x128xf32, #tpu.memory_space<vmem>>, vector<128x128xf32>
    tpu.vector_store %arg13[%c0_155, %c0_156], %121 {strides = array<i32>} : memref<128x128xf32, #tpu.memory_space<vmem>>, vector<128x128xf32>,
    %c0_157 = arith.constant 0 : index
    %c0_158 = arith.constant 0 : index
    %123 = vector.load %arg13[%c0_157, %c0_158] : memref<128x128xf32, #tpu.memory_space<vmem>>, vector<128x128xf32>
    %cst_159 = arith.constant dense<0.000000e+00> : vector<128xf32>
    %124 = vector.multi_reduction <add>, %123, %cst_159 [0] : vector<128x128xf32> to vector<128xf32>
    %125 = vector.shape_cast %124 : vector<128xf32> to vector<1x128xf32>
    %cst_160 = arith.constant 7.812500e-03 : f32
    %126 = vector.broadcast %cst_160 : f32 to vector<1x128xf32>
    %127 = arith.mulf %125, %126 : vector<1x128xf32>
    %128 = arith.mulf %123, %123 : vector<128x128xf32>
    %cst_161 = arith.constant dense<0.000000e+00> : vector<128xf32>
    %129 = vector.multi_reduction <add>, %128, %cst_161 [0] : vector<128x128xf32> to vector<128xf32>
    %130 = vector.shape_cast %129 : vector<128xf32> to vector<1x128xf32>
    %cst_162 = arith.constant 7.812500e-03 : f32
    %131 = vector.broadcast %cst_162 : f32 to vector<1x128xf32>
    %132 = arith.mulf %130, %131 : vector<1x128xf32>
    %133 = arith.mulf %127, %127 : vector<1x128xf32>
    %134 = arith.subf %132, %133 : vector<1x128xf32>
    %c0_163 = arith.constant 0 : index
    %c0_164 = arith.constant 0 : index
    %135 = vector.load %arg5[%c0_163, %c0_164] : memref<1x128xf32, #tpu.memory_space<vmem>>, vector<1x128xf32>
    %cst_165 = arith.constant 9.99999974E-6 : f32
    %136 = vector.broadcast %cst_165 : f32 to vector<1x128xf32>
    %137 = arith.addf %134, %136 : vector<1x128xf32>
    %138 = math.rsqrt %137 : vector<1x128xf32>
    %139 = arith.mulf %135, %138 : vector<1x128xf32>
    %c0_166 = arith.constant 0 : index
    %c0_167 = arith.constant 0 : index
    %140 = vector.load %arg6[%c0_166, %c0_167] : memref<1x128xf32, #tpu.memory_space<vmem>>, vector<1x128xf32>
    %141 = arith.mulf %127, %139 : vector<1x128xf32>
    %142 = arith.subf %140, %141 : vector<1x128xf32>
    %143 = vector.broadcast %139 : vector<1x128xf32> to vector<128x128xf32>
    %144 = arith.mulf %123, %143 : vector<128x128xf32>
    %145 = vector.broadcast %142 : vector<1x128xf32> to vector<128x128xf32>
    %146 = arith.addf %144, %145 : vector<128x128xf32>
    %cst_168 = arith.constant 0.000000e+00 : f32
    %147 = vector.broadcast %cst_168 : f32 to vector<128x128xf32>
    %148 = arith.maximumf %146, %147 : vector<128x128xf32>
    %149 = arith.truncf %148 : vector<128x128xf32> to vector<128x128xbf16>
    %c0_169 = arith.constant 0 : index
    %c0_170 = arith.constant 0 : index
    %150 = vector.load %arg7[%c0_169, %c0_170] : memref<128x128xbf16, #tpu.memory_space<vmem>>, vector<128x128xbf16>
    %cst_171 = arith.constant dense<0.000000e+00> : vector<128x128xf32>
    %151 = tpu.matmul %149, %150, %cst_171 {dimension_numbers = #tpu.dot_dimension_numbers<[1], [0], [0], [1], [0, 0, 1, 1], [], []>} : vector<128x128xbf16>, vector<128x128xbf16>, vector<128x128xf32> -> vector<128x128xf32>
    %cst_172 = arith.constant dense<0.000000e+00> : vector<128xf32>
    %152 = vector.multi_reduction <add>, %151, %cst_172 [0] : vector<128x128xf32> to vector<128xf32>
    %153 = vector.shape_cast %152 : vector<128xf32> to vector<1x128xf32>
    %cst_173 = arith.constant 7.812500e-03 : f32
    %154 = vector.broadcast %cst_173 : f32 to vector<1x128xf32>
    %155 = arith.mulf %153, %154 : vector<1x128xf32>
    %156 = arith.mulf %151, %151 : vector<128x128xf32>
    %cst_174 = arith.constant dense<0.000000e+00> : vector<128xf32>
    %157 = vector.multi_reduction <add>, %156, %cst_174 [0] : vector<128x128xf32> to vector<128xf32>
    %158 = vector.shape_cast %157 : vector<128xf32> to vector<1x128xf32>
    %cst_175 = arith.constant 7.812500e-03 : f32
    %159 = vector.broadcast %cst_175 : f32 to vector<1x128xf32>
    %160 = arith.mulf %158, %159 : vector<1x128xf32>
    %161 = arith.mulf %155, %155 : vector<1x128xf32>
    %162 = arith.subf %160, %161 : vector<1x128xf32>
    %c0_176 = arith.constant 0 : index
    %c0_177 = arith.constant 0 : index
    %163 = vector.load %arg8[%c0_176, %c0_177] : memref<1x128xf32, #tpu.memory_space<vmem>>, vector<1x128xf32>
    %cst_178 = arith.constant 9.99999974E-6 : f32
    %164 = vector.broadcast %cst_178 : f32 to vector<1x128xf32>
    %165 = arith.addf %162, %164 : vector<1x128xf32>
    %166 = math.rsqrt %165 : vector<1x128xf32>
    %167 = arith.mulf %163, %166 : vector<1x128xf32>
    %c0_179 = arith.constant 0 : index
    %c0_180 = arith.constant 0 : index
    %168 = vector.load %arg9[%c0_179, %c0_180] : memref<1x128xf32, #tpu.memory_space<vmem>>, vector<1x128xf32>
    %169 = arith.mulf %155, %167 : vector<1x128xf32>
    %170 = arith.subf %168, %169 : vector<1x128xf32>
    %171 = vector.broadcast %167 : vector<1x128xf32> to vector<128x128xf32>
    %172 = arith.mulf %151, %171 : vector<128x128xf32>
    %173 = vector.broadcast %170 : vector<1x128xf32> to vector<128x128xf32>
    %174 = arith.addf %172, %173 : vector<128x128xf32>
    %175 = arith.addf %174, %9 : vector<128x128xf32>
    %cst_181 = arith.constant 0.000000e+00 : f32
    %176 = vector.broadcast %cst_181 : f32 to vector<128x128xf32>
    %177 = arith.maximumf %175, %176 : vector<128x128xf32>
    %178 = vector.shape_cast %177 : vector<128x128xf32> to vector<2x8x8x128xf32>
    %c0_182 = arith.constant 0 : index
    %c0_183 = arith.constant 0 : index
    %c0_184 = arith.constant 0 : index
    %c0_185 = arith.constant 0 : index
    %179 = vector.load %arg11[%c0_182, %c0_183, %c0_184, %c0_185] : memref<2x8x8x128xf32, #tpu.memory_space<vmem>>, vector<2x8x8x128xf32>
    tpu.vector_store %arg11[%c0_182, %c0_183, %c0_184, %c0_185], %178 {strides = array<i32>} : memref<2x8x8x128xf32, #tpu.memory_space<vmem>>, vector<2x8x8x128xf32>,
    return
  }
}

</mosaic_0001>

<llo_original>
// kernel: bottleneck_forward.1
$region0: #{bottleneck_forward.1}
  #allocation0 [shape = 'u32[]', space=smem, size = 0x4, offset = 0x4, fixed_abs, tag = 'smem constant byte address 0x4 - core index']
  #allocation1 [shape = 'u32[144,128]{1,0:T(1,128)}', space=vmem, size = 0x12000, scoped, tag = 'internal scratch']
  #allocation2 [shape = 'f32[2,18,24,128]{3,2,1,0:T(8,128)}', space=vmem, size = 0x6c000, scoped, tag = 'scratch operand']
  #allocation3 [shape = 'f32[128,128]{1,0:T(8,128)}', space=vmem, size = 0x10000, scoped, tag = 'scratch operand']
  %s0 = inlined_call_operand.vmem [shape: f32[2,16,16,128], index: 0, kind: input, shape index: {}]
  %s1 = inlined_call_operand.vmem [shape: bf16[128,128], index: 1, kind: input, shape index: {}]
  %s2 = inlined_call_operand.vmem [shape: f32[1,128], index: 2, kind: input, shape index: {}]
  %s3 = inlined_call_operand.vmem [shape: f32[1,128], index: 3, kind: input, shape index: {}]
  %s4 = inlined_call_operand.vmem [shape: bf16[3,3,128,128], index: 4, kind: input, shape index: {}]
  %s5 = inlined_call_operand.vmem [shape: f32[1,128], index: 5, kind: input, shape index: {}]
  %s6 = inlined_call_operand.vmem [shape: f32[1,128], index: 6, kind: input, shape index: {}]
  %s7 = inlined_call_operand.vmem [shape: bf16[128,128], index: 7, kind: input, shape index: {}]
  %s8 = inlined_call_operand.vmem [shape: f32[1,128], index: 8, kind: input, shape index: {}]
  %s9 = inlined_call_operand.vmem [shape: f32[1,128], index: 9, kind: input, shape index: {}]
  %s10 = inlined_call_operand.vmem [shape: bf16[128,128], index: 10, kind: input, shape index: {}]
  %s11 = inlined_call_operand.vmem [shape: f32[2,8,8,128], index: 11, kind: output, shape index: {}]
  %s12 = sld [smem:[#allocation0]]
  $region54: #{bottleneck_forward.1} parent=0
    _
  %s14 = ssub.s32 1, %s12
  %s15 = scalar_select 0, %s14, %s12
  // Predicated region
  $region2: #{bottleneck_forward.1} parent=0 // pred_check
    _
  $region3: #{bottleneck_forward.1} parent=0 // pred_check_branch
    %17 = sbr.rel (0) target = $region5
  $region4: #{bottleneck_forward.1} parent=0 // pred_region
    _
  $region5: #{bottleneck_forward.1} parent=0 // pred_fallthru
    _
  // Predicated region
  $region6: #{bottleneck_forward.1} parent=0 // pred_check
    _
  $region7: #{bottleneck_forward.1} parent=0 // pred_check_branch
    %19 = sbr.rel (0) target = $region9
  $region8: #{bottleneck_forward.1} parent=0 // pred_region
    _
  $region9: #{bottleneck_forward.1} parent=0 // pred_fallthru
    _
  // Predicated region
  $region10: #{bottleneck_forward.1} parent=0 // pred_check
    _
  $region11: #{bottleneck_forward.1} parent=0 // pred_check_branch
    %21 = sbr.rel (0) target = $region13
  $region12: #{bottleneck_forward.1} parent=0 // pred_region
    _
  $region13: #{bottleneck_forward.1} parent=0 // pred_fallthru
    _
  // Predicated region
  $region14: #{bottleneck_forward.1} parent=0 // pred_check
    _
  $region15: #{bottleneck_forward.1} parent=0 // pred_check_branch
    %23 = sbr.rel (0) target = $region17
  $region16: #{bottleneck_forward.1} parent=0 // pred_region
    _
  $region17: #{bottleneck_forward.1} parent=0 // pred_fallthru
    _
  // Predicated region
  $region18: #{bottleneck_forward.1} parent=0 // pred_check
    _
  $region19: #{bottleneck_forward.1} parent=0 // pred_check_branch
    %25 = sbr.rel (0) target = $region21
  $region20: #{bottleneck_forward.1} parent=0 // pred_region
    _
  $region21: #{bottleneck_forward.1} parent=0 // pred_fallthru
    _
  // Predicated region
  $region22: #{bottleneck_forward.1} parent=0 // pred_check
    _
  $region23: #{bottleneck_forward.1} parent=0 // pred_check_branch
    %27 = sbr.rel (0) target = $region25
  $region24: #{bottleneck_forward.1} parent=0 // pred_region
    _
  $region25: #{bottleneck_forward.1} parent=0 // pred_fallthru
    _
  // Predicated region
  $region26: #{bottleneck_forward.1} parent=0 // pred_check
    _
  $region27: #{bottleneck_forward.1} parent=0 // pred_check_branch
    %29 = sbr.rel (0) target = $region29
  $region28: #{bottleneck_forward.1} parent=0 // pred_region
    _
  $region29: #{bottleneck_forward.1} parent=0 // pred_fallthru
    _
  // Predicated region
  $region30: #{bottleneck_forward.1} parent=0 // pred_check
    _
  $region31: #{bottleneck_forward.1} parent=0 // pred_check_branch
    %31 = sbr.rel (0) target = $region33
  $region32: #{bottleneck_forward.1} parent=0 // pred_region
    _
  $region33: #{bottleneck_forward.1} parent=0 // pred_fallthru
    _
  // Predicated region
  $region34: #{bottleneck_forward.1} parent=0 // pred_check
    _
  $region35: #{bottleneck_forward.1} parent=0 // pred_check_branch
    %33 = sbr.rel (0) target = $region37
  $region36: #{bottleneck_forward.1} parent=0 // pred_region
    _
  $region37: #{bottleneck_forward.1} parent=0 // pred_fallthru
    _
  // Predicated region
  $region38: #{bottleneck_forward.1} parent=0 // pred_check
    _
  $region39: #{bottleneck_forward.1} parent=0 // pred_check_branch
    %35 = sbr.rel (0) target = $region41
  $region40: #{bottleneck_forward.1} parent=0 // pred_region
    _
  $region41: #{bottleneck_forward.1} parent=0 // pred_fallthru
    _
  // Predicated region
  $region42: #{bottleneck_forward.1} parent=0 // pred_check
    _
  $region43: #{bottleneck_forward.1} parent=0 // pred_check_branch
    %37 = sbr.rel (0) target = $region45
  $region44: #{bottleneck_forward.1} parent=0 // pred_region
    _
  $region45: #{bottleneck_forward.1} parent=0 // pred_fallthru
    _
  %v39 = vld [vmem:[%s0] sm:$0xff]
  %v40 = vld [vmem:[%s0 + $0x8] sm:$0xff]
  %v41 = vld [vmem:[%s0 + $0x10] sm:$0xff]
  %v42 = vld [vmem:[%s0 + $0x18] sm:$0xff]
  %v43 = vld [vmem:[%s0 + $0x20] sm:$0xff]
  %v44 = vld [vmem:[%s0 + $0x28] sm:$0xff]
  %v45 = vld [vmem:[%s0 + $0x30] sm:$0xff]
  %v46 = vld [vmem:[%s0 + $0x38] sm:$0xff]
  %v47 = vld [vmem:[%s0 + $0x40] sm:$0xff]
  %v48 = vld [vmem:[%s0 + $0x48] sm:$0xff]
  %v49 = vld [vmem:[%s0 + $0x50] sm:$0xff]
  %v50 = vld [vmem:[%s0 + $0x58] sm:$0xff]
  %v51 = vld [vmem:[%s0 + $0x60] sm:$0xff]
  %v52 = vld [vmem:[%s0 + $0x68] sm:$0xff]
  %v53 = vld [vmem:[%s0 + $0x70] sm:$0xff]
  %v54 = vld [vmem:[%s0 + $0x78] sm:$0xff]
  %v55 = vld [vmem:[%s0 + $0x80] sm:$0xff]
  %v56 = vld [vmem:[%s0 + $0x88] sm:$0xff]
  %v57 = vld [vmem:[%s0 + $0x90] sm:$0xff]
  %v58 = vld [vmem:[%s0 + $0x98] sm:$0xff]
  %v59 = vld [vmem:[%s0 + $0xa0] sm:$0xff]
  %v60 = vld [vmem:[%s0 + $0xa8] sm:$0xff]
  %v61 = vld [vmem:[%s0 + $0xb0] sm:$0xff]
  %v62 = vld [vmem:[%s0 + $0xb8] sm:$0xff]
  %v63 = vld [vmem:[%s0 + $0xc0] sm:$0xff]
  %v64 = vld [vmem:[%s0 + $0xc8] sm:$0xff]
  %v65 = vld [vmem:[%s0 + $0xd0] sm:$0xff]
  %v66 = vld [vmem:[%s0 + $0xd8] sm:$0xff]
  %v67 = vld [vmem:[%s0 + $0xe0] sm:$0xff]
  %v68 = vld [vmem:[%s0 + $0xe8] sm:$0xff]
  %v69 = vld [vmem:[%s0 + $0xf0] sm:$0xff]
  %v70 = vld [vmem:[%s0 + $0xf8] sm:$0xff]
  %v71 = vld [vmem:[%s0 + $0x100] sm:$0xff]
  %v72 = vld [vmem:[%s0 + $0x108] sm:$0xff]
  %v73 = vld [vmem:[%s0 + $0x110] sm:$0xff]
  %v74 = vld [vmem:[%s0 + $0x118] sm:$0xff]
  %v75 = vld [vmem:[%s0 + $0x120] sm:$0xff]
  %v76 = vld [vmem:[%s0 + $0x128] sm:$0xff]
  %v77 = vld [vmem:[%s0 + $0x130] sm:$0xff]
  %v78 = vld [vmem:[%s0 + $0x138] sm:$0xff]
  %v79 = vld [vmem:[%s0 + $0x140] sm:$0xff]
  %v80 = vld [vmem:[%s0 + $0x148] sm:$0xff]
  %v81 = vld [vmem:[%s0 + $0x150] sm:$0xff]
  %v82 = vld [vmem:[%s0 + $0x158] sm:$0xff]
  %v83 = vld [vmem:[%s0 + $0x160] sm:$0xff]
  %v84 = vld [vmem:[%s0 + $0x168] sm:$0xff]
  %v85 = vld [vmem:[%s0 + $0x170] sm:$0xff]
  %v86 = vld [vmem:[%s0 + $0x178] sm:$0xff]
  %v87 = vld [vmem:[%s0 + $0x180] sm:$0xff]
  %v88 = vld [vmem:[%s0 + $0x188] sm:$0xff]
  %v89 = vld [vmem:[%s0 + $0x190] sm:$0xff]
  %v90 = vld [vmem:[%s0 + $0x198] sm:$0xff]
  %v91 = vld [vmem:[%s0 + $0x1a0] sm:$0xff]
  %v92 = vld [vmem:[%s0 + $0x1a8] sm:$0xff]
  %v93 = vld [vmem:[%s0 + $0x1b0] sm:$0xff]
  %v94 = vld [vmem:[%s0 + $0x1b8] sm:$0xff]
  %v95 = vld [vmem:[%s0 + $0x1c0] sm:$0xff]
  %v96 = vld [vmem:[%s0 + $0x1c8] sm:$0xff]
  %v97 = vld [vmem:[%s0 + $0x1d0] sm:$0xff]
  %v98 = vld [vmem:[%s0 + $0x1d8] sm:$0xff]
  %v99 = vld [vmem:[%s0 + $0x1e0] sm:$0xff]
  %v100 = vld [vmem:[%s0 + $0x1e8] sm:$0xff]
  %v101 = vld [vmem:[%s0 + $0x1f0] sm:$0xff]
  %v102 = vld [vmem:[%s0 + $0x1f8] sm:$0xff]
  %v103 = vpack.c.bf16 %v40, %v39
  %v104 = vpack.c.bf16 %v42, %v41
  %v105 = vpack.c.bf16 %v44, %v43
  %v106 = vpack.c.bf16 %v46, %v45
  %v107 = vpack.c.bf16 %v48, %v47
  %v108 = vpack.c.bf16 %v50, %v49
  %v109 = vpack.c.bf16 %v52, %v51
  %v110 = vpack.c.bf16 %v54, %v53
  %v111 = vpack.c.bf16 %v56, %v55
  %v112 = vpack.c.bf16 %v58, %v57
  %v113 = vpack.c.bf16 %v60, %v59
  %v114 = vpack.c.bf16 %v62, %v61
  %v115 = vpack.c.bf16 %v64, %v63
  %v116 = vpack.c.bf16 %v66, %v65
  %v117 = vpack.c.bf16 %v68, %v67
  %v118 = vpack.c.bf16 %v70, %v69
  %v119 = vpack.c.bf16 %v72, %v71
  %v120 = vpack.c.bf16 %v74, %v73
  %v121 = vpack.c.bf16 %v76, %v75
  %v122 = vpack.c.bf16 %v78, %v77
  %v123 = vpack.c.bf16 %v80, %v79
  %v124 = vpack.c.bf16 %v82, %v81
  %v125 = vpack.c.bf16 %v84, %v83
  %v126 = vpack.c.bf16 %v86, %v85
  %v127 = vpack.c.bf16 %v88, %v87
  %v128 = vpack.c.bf16 %v90, %v89
  %v129 = vpack.c.bf16 %v92, %v91
  %v130 = vpack.c.bf16 %v94, %v93
  %v131 = vpack.c.bf16 %v96, %v95
  %v132 = vpack.c.bf16 %v98, %v97
  %v133 = vpack.c.bf16 %v100, %v99
  %v134 = vpack.c.bf16 %v102, %v101
  %v135 = vld [vmem:[%s1] sm:$0xf]
  %v136 = vld [vmem:[%s1 + $0x4] sm:$0xf]
  %v137 = vld [vmem:[%s1 + $0x8] sm:$0xf]
  %v138 = vld [vmem:[%s1 + $0xc] sm:$0xf]
  %v139 = vld [vmem:[%s1 + $0x10] sm:$0xf]
  %v140 = vld [vmem:[%s1 + $0x14] sm:$0xf]
  %v141 = vld [vmem:[%s1 + $0x18] sm:$0xf]
  %v142 = vld [vmem:[%s1 + $0x1c] sm:$0xf]
  %v143 = vld [vmem:[%s1 + $0x20] sm:$0xf]
  %v144 = vld [vmem:[%s1 + $0x24] sm:$0xf]
  %v145 = vld [vmem:[%s1 + $0x28] sm:$0xf]
  %v146 = vld [vmem:[%s1 + $0x2c] sm:$0xf]
  %v147 = vld [vmem:[%s1 + $0x30] sm:$0xf]
  %v148 = vld [vmem:[%s1 + $0x34] sm:$0xf]
  %v149 = vld [vmem:[%s1 + $0x38] sm:$0xf]
  %v150 = vld [vmem:[%s1 + $0x3c] sm:$0xf]
  %v167 = vunpack.c.l.b16 %v135
  %v168 = vunpack.c.l.b16 %v136
  %v169 = vunpack.c.l.b16 %v137
  %v170 = vunpack.c.l.b16 %v138
  %v171 = vunpack.c.l.b16 %v139
  %v172 = vunpack.c.l.b16 %v140
  %v173 = vunpack.c.l.b16 %v141
  %v174 = vunpack.c.l.b16 %v142
  %v175 = vunpack.c.l.b16 %v143
  %v176 = vunpack.c.l.b16 %v144
  %v177 = vunpack.c.l.b16 %v145
  %v178 = vunpack.c.l.b16 %v146
  %v179 = vunpack.c.l.b16 %v147
  %v180 = vunpack.c.l.b16 %v148
  %v181 = vunpack.c.l.b16 %v149
  %v182 = vunpack.c.l.b16 %v150
  %v183 = vpack.c.b16 %v168, %v167
  %v184 = vpack.c.b16 %v170, %v169
  %v185 = vpack.c.b16 %v172, %v171
  %v186 = vpack.c.b16 %v174, %v173
  %v187 = vpack.c.b16 %v176, %v175
  %v188 = vpack.c.b16 %v178, %v177
  %v189 = vpack.c.b16 %v180, %v179
  %v190 = vpack.c.b16 %v182, %v181
  %199 = vmatprep.subr.bf16.mxu0 0
  %200 = vmatpush1.bf16.msra.mxu0 %v183
  %201 = vmatprep.subr.bf16.mxu0 0
  %202 = vmatpush1.bf16.msra.mxu0 %v184
  %203 = vmatprep.subr.bf16.mxu0 0
  %204 = vmatpush1.bf16.msra.mxu0 %v185
  %205 = vmatprep.subr.bf16.mxu0 0
  %206 = vmatpush1.bf16.msra.mxu0 %v186
  %207 = vmatprep.subr.bf16.mxu0 0
  %208 = vmatpush1.bf16.msra.mxu0 %v187
  %209 = vmatprep.subr.bf16.mxu0 0
  %210 = vmatpush1.bf16.msra.mxu0 %v188
  %211 = vmatprep.subr.bf16.mxu0 0
  %212 = vmatpush1.bf16.msra.mxu0 %v189
  %213 = vmatprep.subr.bf16.mxu0 0
  %214 = vmatpush1.bf16.msra.mxu0 %v190
  %215 = vmatprep.subr.bf16.mxu0 0
  %216 = vmatpush1.bf16.msra.mxu0 0
  %217 = vmatprep.subr.bf16.mxu0 0
  %218 = vmatpush1.bf16.msra.mxu0 0
  %219 = vmatprep.subr.bf16.mxu0 0
  %220 = vmatpush1.bf16.msra.mxu0 0
  %221 = vmatprep.subr.bf16.mxu0 0
  %222 = vmatpush1.bf16.msra.mxu0 0
  %223 = vmatprep.subr.bf16.mxu0 0
  %224 = vmatpush1.bf16.msra.mxu0 0
  %225 = vmatprep.subr.bf16.mxu0 0
  %226 = vmatpush1.bf16.msra.mxu0 0
  %227 = vmatprep.subr.bf16.mxu0 0
  %228 = vmatpush1.bf16.msra.mxu0 0
  %229 = vmatprep.subr.bf16.mxu0 0
  %230 = vmatpush1.bf16.msra.mxu0 0
  %231 = vmatprep.mubr.bf16.mxu0 0
  %232 = vmatmul.mubr.bf16.gmra.mrb[0].mxu0 %v103
  %v233 = vpop.f32.mrb[0].mxu0
  %v234 = vadd.f32 0.0, %v233
  %v235 = vpop.f32.mrb[0].mxu0
  %v236 = vpop.f32.mrb[0].mxu0
  %v237 = vadd.f32 0.0, %v236
  %v238 = vpop.f32.mrb[0].mxu0
  %239 = vmatprep.mubr.bf16.mxu0 0
  %240 = vmatmul.mubr.bf16.gmra.mrb[0].mxu0 %v104
  %v241 = vpop.f32.mrb[0].mxu0
  %v242 = vadd.f32 0.0, %v241
  %v243 = vpop.f32.mrb[0].mxu0
  %v244 = vpop.f32.mrb[0].mxu0
  %v245 = vadd.f32 0.0, %v244
  %v246 = vpop.f32.mrb[0].mxu0
  %247 = vmatprep.mubr.bf16.mxu0 0
  %248 = vmatmul.mubr.bf16.gmra.mrb[0].mxu0 %v105
  %v249 = vpop.f32.mrb[0].mxu0
  %v250 = vadd.f32 0.0, %v249
  %v251 = vpop.f32.mrb[0].mxu0
  %v252 = vpop.f32.mrb[0].mxu0
  %v253 = vadd.f32 0.0, %v252
  %v254 = vpop.f32.mrb[0].mxu0
  %255 = vmatprep.mubr.bf16.mxu0 0
  %256 = vmatmul.mubr.bf16.gmra.mrb[0].mxu0 %v106
  %v257 = vpop.f32.mrb[0].mxu0
  %v258 = vadd.f32 0.0, %v257
  %v259 = vpop.f32.mrb[0].mxu0
  %v260 = vpop.f32.mrb[0].mxu0
  %v261 = vadd.f32 0.0, %v260
  %v262 = vpop.f32.mrb[0].mxu0
  %263 = vmatprep.mubr.bf16.mxu0 0
  %264 = vmatmul.mubr.bf16.gmra.mrb[0].mxu0 %v107
  %v265 = vpop.f32.mrb[0].mxu0
  %v266 = vadd.f32 0.0, %v265
  %v267 = vpop.f32.mrb[0].mxu0
  %v268 = vpop.f32.mrb[0].mxu0
  %v269 = vadd.f32 0.0, %v268
  %v270 = vpop.f32.mrb[0].mxu0
  %271 = vmatprep.mubr.bf16.mxu0 0
  %272 = vmatmul.mubr.bf16.gmra.mrb[0].mxu0 %v108
  %v273 = vpop.f32.mrb[0].mxu0
  %v274 = vadd.f32 0.0, %v273
  %v275 = vpop.f32.mrb[0].mxu0
  %v276 = vpop.f32.mrb[0].mxu0
  %v277 = vadd.f32 0.0, %v276
  %v278 = vpop.f32.mrb[0].mxu0
  %279 = vmatprep.mubr.bf16.mxu0 0
  %280 = vmatmul.mubr.bf16.gmra.mrb[0].mxu0 %v109
  %v281 = vpop.f32.mrb[0].mxu0
  %v282 = vadd.f32 0.0, %v281
  %v283 = vpop.f32.mrb[0].mxu0
  %v284 = vpop.f32.mrb[0].mxu0
  %v285 = vadd.f32 0.0, %v284
  %v286 = vpop.f32.mrb[0].mxu0
  %287 = vmatprep.mubr.bf16.mxu0 0
  %288 = vmatmul.mubr.bf16.gmra.mrb[0].mxu0 %v110
  %v289 = vpop.f32.mrb[0].mxu0
  %v290 = vadd.f32 0.0, %v289
  %v291 = vpop.f32.mrb[0].mxu0
  %v292 = vpop.f32.mrb[0].mxu0
  %v293 = vadd.f32 0.0, %v292
  %v294 = vpop.f32.mrb[0].mxu0
  %295 = vmatprep.mubr.bf16.mxu0 0
  %296 = vmatmul.mubr.bf16.gmra.mrb[0].mxu0 %v111
  %v297 = vpop.f32.mrb[0].mxu0
  %v298 = vadd.f32 0.0, %v297
  %v299 = vpop.f32.mrb[0].mxu0
  %v300 = vpop.f32.mrb[0].mxu0
  %v301 = vadd.f32 0.0, %v300
  %v302 = vpop.f32.mrb[0].mxu0
  %303 = vmatprep.mubr.bf16.mxu0 0
  %304 = vmatmul.mubr.bf16.gmra.mrb[0].mxu0 %v112
  %v305 = vpop.f32.mrb[0].mxu0
  %v306 = vadd.f32 0.0, %v305
  %v307 = vpop.f32.mrb[0].mxu0
  %v308 = vpop.f32.mrb[0].mxu0
  %v309 = vadd.f32 0.0, %v308
  %v310 = vpop.f32.mrb[0].mxu0
  %311 = vmatprep.mubr.bf16.mxu0 0
  %312 = vmatmul.mubr.bf16.gmra.mrb[0].mxu0 %v113
  %v313 = vpop.f32.mrb[0].mxu0
  %v314 = vadd.f32 0.0, %v313
  %v315 = vpop.f32.mrb[0].mxu0
  %v316 = vpop.f32.mrb[0].mxu0
  %v317 = vadd.f32 0.0, %v316
  %v318 = vpop.f32.mrb[0].mxu0
  %319 = vmatprep.mubr.bf16.mxu0 0
  %320 = vmatmul.mubr.bf16.gmra.mrb[0].mxu0 %v114
  %v321 = vpop.f32.mrb[0].mxu0
  %v322 = vadd.f32 0.0, %v321
  %v323 = vpop.f32.mrb[0].mxu0
  %v324 = vpop.f32.mrb[0].mxu0
  %v325 = vadd.f32 0.0, %v324
  %v326 = vpop.f32.mrb[0].mxu0
  %327 = vmatprep.mubr.bf16.mxu0 0
  %328 = vmatmul.mubr.bf16.gmra.mrb[0].mxu0 %v115
  %v329 = vpop.f32.mrb[0].mxu0
  %v330 = vadd.f32 0.0, %v329
  %v331 = vpop.f32.mrb[0].mxu0
  %v332 = vpop.f32.mrb[0].mxu0
  %v333 = vadd.f32 0.0, %v332
  %v334 = vpop.f32.mrb[0].mxu0
  %335 = vmatprep.mubr.bf16.mxu0 0
  %336 = vmatmul.mubr.bf16.gmra.mrb[0].mxu0 %v116
  %v337 = vpop.f32.mrb[0].mxu0
  %v338 = vadd.f32 0.0, %v337
  %v339 = vpop.f32.mrb[0].mxu0
  %v340 = vpop.f32.mrb[0].mxu0
  %v341 = vadd.f32 0.0, %v340
  %v342 = vpop.f32.mrb[0].mxu0
  %343 = vmatprep.mubr.bf16.mxu0 0
  %344 = vmatmul.mubr.bf16.gmra.mrb[0].mxu0 %v117
  %v345 = vpop.f32.mrb[0].mxu0
  %v346 = vadd.f32 0.0, %v345
  %v347 = vpop.f32.mrb[0].mxu0
  %v348 = vpop.f32.mrb[0].mxu0
  %v349 = vadd.f32 0.0, %v348
  %v350 = vpop.f32.mrb[0].mxu0
  %351 = vmatprep.mubr.bf16.mxu0 0
  %352 = vmatmul.mubr.bf16.gmra.mrb[0].mxu0 %v118
  %v353 = vpop.f32.mrb[0].mxu0
  %v354 = vadd.f32 0.0, %v353
  %v355 = vpop.f32.mrb[0].mxu0
  %v356 = vpop.f32.mrb[0].mxu0
  %v357 = vadd.f32 0.0, %v356
  %v358 = vpop.f32.mrb[0].mxu0
  %359 = vmatprep.mubr.bf16.mxu0 0
  %360 = vmatmul.mubr.bf16.gmra.mrb[0].mxu0 %v119
  %v361 = vpop.f32.mrb[0].mxu0
  %v362 = vadd.f32 0.0, %v361
  %v363 = vpop.f32.mrb[0].mxu0
  %v364 = vpop.f32.mrb[0].mxu0
  %v365 = vadd.f32 0.0, %v364
  %v366 = vpop.f32.mrb[0].mxu0
  %367 = vmatprep.mubr.bf16.mxu0 0
  %368 = vmatmul.mubr.bf16.gmra.mrb[0].mxu0 %v120
  %v369 = vpop.f32.mrb[0].mxu0
  %v370 = vadd.f32 0.0, %v369
  %v371 = vpop.f32.mrb[0].mxu0
  %v372 = vpop.f32.mrb[0].mxu0
  %v373 = vadd.f32 0.0, %v372
  %v374 = vpop.f32.mrb[0].mxu0
  %375 = vmatprep.mubr.bf16.mxu0 0
  %376 = vmatmul.mubr.bf16.gmra.mrb[0].mxu0 %v121
  %v377 = vpop.f32.mrb[0].mxu0
  %v378 = vadd.f32 0.0, %v377
  %v379 = vpop.f32.mrb[0].mxu0
  %v380 = vpop.f32.mrb[0].mxu0
  %v381 = vadd.f32 0.0, %v380
  %v382 = vpop.f32.mrb[0].mxu0
  %383 = vmatprep.mubr.bf16.mxu0 0
  %384 = vmatmul.mubr.bf16.gmra.mrb[0].mxu0 %v122
  %v385 = vpop.f32.mrb[0].mxu0
  %v386 = vadd.f32 0.0, %v385
  %v387 = vpop.f32.mrb[0].mxu0
  %v388 = vpop.f32.mrb[0].mxu0
  %v389 = vadd.f32 0.0, %v388
  %v390 = vpop.f32.mrb[0].mxu0
  %391 = vmatprep.mubr.bf16.mxu0 0
  %392 = vmatmul.mubr.bf16.gmra.mrb[0].mxu0 %v123
  %v393 = vpop.f32.mrb[0].mxu0
  %v394 = vadd.f32 0.0, %v393
  %v395 = vpop.f32.mrb[0].mxu0
  %v396 = vpop.f32.mrb[0].mxu0
  %v397 = vadd.f32 0.0, %v396
  %v398 = vpop.f32.mrb[0].mxu0
  %399 = vmatprep.mubr.bf16.mxu0 0
  %400 = vmatmul.mubr.bf16.gmra.mrb[0].mxu0 %v124
  %v401 = vpop.f32.mrb[0].mxu0
  %v402 = vadd.f32 0.0, %v401
  %v403 = vpop.f32.mrb[0].mxu0
  %v404 = vpop.f32.mrb[0].mxu0
  %v405 = vadd.f32 0.0, %v404
  %v406 = vpop.f32.mrb[0].mxu0
  %407 = vmatprep.mubr.bf16.mxu0 0
  %408 = vmatmul.mubr.bf16.gmra.mrb[0].mxu0 %v125
  %v409 = vpop.f32.mrb[0].mxu0
  %v410 = vadd.f32 0.0, %v409
  %v411 = vpop.f32.mrb[0].mxu0
  %v412 = vpop.f32.mrb[0].mxu0
  %v413 = vadd.f32 0.0, %v412
  %v414 = vpop.f32.mrb[0].mxu0
  %415 = vmatprep.mubr.bf16.mxu0 0
  %416 = vmatmul.mubr.bf16.gmra.mrb[0].mxu0 %v126
  %v417 = vpop.f32.mrb[0].mxu0
  %v418 = vadd.f32 0.0, %v417
  %v419 = vpop.f32.mrb[0].mxu0
  %v420 = vpop.f32.mrb[0].mxu0
  %v421 = vadd.f32 0.0, %v420
  %v422 = vpop.f32.mrb[0].mxu0
  %423 = vmatprep.mubr.bf16.mxu0 0
  %424 = vmatmul.mubr.bf16.gmra.mrb[0].mxu0 %v127
  %v425 = vpop.f32.mrb[0].mxu0
  %v426 = vadd.f32 0.0, %v425
  %v427 = vpop.f32.mrb[0].mxu0
  %v428 = vpop.f32.mrb[0].mxu0
  %v429 = vadd.f32 0.0, %v428
  %v430 = vpop.f32.mrb[0].mxu0
  %431 = vmatprep.mubr.bf16.mxu0 0
  %432 = vmatmul.mubr.bf16.gmra.mrb[0].mxu0 %v128
  %v433 = vpop.f32.mrb[0].mxu0
  %v434 = vadd.f32 0.0, %v433
  %v435 = vpop.f32.mrb[0].mxu0
  %v436 = vpop.f32.mrb[0].mxu0
  %v437 = vadd.f32 0.0, %v436
  %v438 = vpop.f32.mrb[0].mxu0
  %439 = vmatprep.mubr.bf16.mxu0 0
  %440 = vmatmul.mubr.bf16.gmra.mrb[0].mxu0 %v129
  %v441 = vpop.f32.mrb[0].mxu0
  %v442 = vadd.f32 0.0, %v441
  %v443 = vpop.f32.mrb[0].mxu0
  %v444 = vpop.f32.mrb[0].mxu0
  %v445 = vadd.f32 0.0, %v444
  %v446 = vpop.f32.mrb[0].mxu0
  %447 = vmatprep.mubr.bf16.mxu0 0
  %448 = vmatmul.mubr.bf16.gmra.mrb[0].mxu0 %v130
  %v449 = vpop.f32.mrb[0].mxu0
  %v450 = vadd.f32 0.0, %v449
  %v451 = vpop.f32.mrb[0].mxu0
  %v452 = vpop.f32.mrb[0].mxu0
  %v453 = vadd.f32 0.0, %v452
  %v454 = vpop.f32.mrb[0].mxu0
  %455 = vmatprep.mubr.bf16.mxu0 0
  %456 = vmatmul.mubr.bf16.gmra.mrb[0].mxu0 %v131
  %v457 = vpop.f32.mrb[0].mxu0
  %v458 = vadd.f32 0.0, %v457
  %v459 = vpop.f32.mrb[0].mxu0
  %v460 = vpop.f32.mrb[0].mxu0
  %v461 = vadd.f32 0.0, %v460
  %v462 = vpop.f32.mrb[0].mxu0
  %463 = vmatprep.mubr.bf16.mxu0 0
  %464 = vmatmul.mubr.bf16.gmra.mrb[0].mxu0 %v132
  %v465 = vpop.f32.mrb[0].mxu0
  %v466 = vadd.f32 0.0, %v465
  %v467 = vpop.f32.mrb[0].mxu0
  %v468 = vpop.f32.mrb[0].mxu0
  %v469 = vadd.f32 0.0, %v468
  %v470 = vpop.f32.mrb[0].mxu0
  %471 = vmatprep.mubr.bf16.mxu0 0
  %472 = vmatmul.mubr.bf16.gmra.mrb[0].mxu0 %v133
  %v473 = vpop.f32.mrb[0].mxu0
  %v474 = vadd.f32 0.0, %v473
  %v475 = vpop.f32.mrb[0].mxu0
  %v476 = vpop.f32.mrb[0].mxu0
  %v477 = vadd.f32 0.0, %v476
  %v478 = vpop.f32.mrb[0].mxu0
  %479 = vmatprep.mubr.bf16.mxu0 0
  %480 = vmatmul.mubr.bf16.gmra.mrb[0].mxu0 %v134
  %v481 = vpop.f32.mrb[0].mxu0
  %v482 = vadd.f32 0.0, %v481
  %v483 = vpop.f32.mrb[0].mxu0
  %v484 = vpop.f32.mrb[0].mxu0
  %v485 = vadd.f32 0.0, %v484
  %v486 = vpop.f32.mrb[0].mxu0
  %487 = vdwg.mxu0
  %v488 = vld [vmem:[%s0] ss:$2 sm:$0xff]
  %s489 = scalar_lea.vmem %s0, 32
  %v490 = vld [vmem:[%s489] ss:$2 sm:$0xff]
  %s491 = scalar_lea.vmem %s0, 64
  %v492 = vld [vmem:[%s491] ss:$2 sm:$0xff]
  %s493 = scalar_lea.vmem %s0, 96
  %v494 = vld [vmem:[%s493] ss:$2 sm:$0xff]
  %s495 = scalar_lea.vmem %s0, 128
  %v496 = vld [vmem:[%s495] ss:$2 sm:$0xff]
  %s497 = scalar_lea.vmem %s0, 160
  %v498 = vld [vmem:[%s497] ss:$2 sm:$0xff]
  %s499 = scalar_lea.vmem %s0, 192
  %v500 = vld [vmem:[%s499] ss:$2 sm:$0xff]
  %s501 = scalar_lea.vmem %s0, 224
  %v502 = vld [vmem:[%s501] ss:$2 sm:$0xff]
  %s503 = scalar_lea.vmem %s0, 256
  %v504 = vld [vmem:[%s503] ss:$2 sm:$0xff]
  %s505 = scalar_lea.vmem %s0, 288
  %v506 = vld [vmem:[%s505] ss:$2 sm:$0xff]
  %s507 = scalar_lea.vmem %s0, 320
  %v508 = vld [vmem:[%s507] ss:$2 sm:$0xff]
  %s509 = scalar_lea.vmem %s0, 352
  %v510 = vld [vmem:[%s509] ss:$2 sm:$0xff]
  %s511 = scalar_lea.vmem %s0, 384
  %v512 = vld [vmem:[%s511] ss:$2 sm:$0xff]
  %s513 = scalar_lea.vmem %s0, 416
  %v514 = vld [vmem:[%s513] ss:$2 sm:$0xff]
  %s515 = scalar_lea.vmem %s0, 448
  %v516 = vld [vmem:[%s515] ss:$2 sm:$0xff]
  %s517 = scalar_lea.vmem %s0, 480
  %v518 = vld [vmem:[%s517] ss:$2 sm:$0xff]
  %v519 = vpack.c.bf16 %v490, %v488
  %v520 = vpack.c.bf16 %v494, %v492
  %v521 = vpack.c.bf16 %v498, %v496
  %v522 = vpack.c.bf16 %v502, %v500
  %v523 = vpack.c.bf16 %v506, %v504
  %v524 = vpack.c.bf16 %v510, %v508
  %v525 = vpack.c.bf16 %v514, %v512
  %v526 = vpack.c.bf16 %v518, %v516
  %v527 = vld [vmem:[%s10] sm:$0xf]
  %v528 = vld [vmem:[%s10 + $0x4] sm:$0xf]
  %v529 = vld [vmem:[%s10 + $0x8] sm:$0xf]
  %v530 = vld [vmem:[%s10 + $0xc] sm:$0xf]
  %v531 = vld [vmem:[%s10 + $0x10] sm:$0xf]
  %v532 = vld [vmem:[%s10 + $0x14] sm:$0xf]
  %v533 = vld [vmem:[%s10 + $0x18] sm:$0xf]
  %v534 = vld [vmem:[%s10 + $0x1c] sm:$0xf]
  %v535 = vld [vmem:[%s10 + $0x20] sm:$0xf]
  %v536 = vld [vmem:[%s10 + $0x24] sm:$0xf]
  %v537 = vld [vmem:[%s10 + $0x28] sm:$0xf]
  %v538 = vld [vmem:[%s10 + $0x2c] sm:$0xf]
  %v539 = vld [vmem:[%s10 + $0x30] sm:$0xf]
  %v540 = vld [vmem:[%s10 + $0x34] sm:$0xf]
  %v541 = vld [vmem:[%s10 + $0x38] sm:$0xf]
  %v542 = vld [vmem:[%s10 + $0x3c] sm:$0xf]
  %v559 = vunpack.c.l.b16 %v527
  %v560 = vunpack.c.l.b16 %v528
  %v561 = vunpack.c.l.b16 %v529
  %v562 = vunpack.c.l.b16 %v530
  %v563 = vunpack.c.l.b16 %v531
  %v564 = vunpack.c.l.b16 %v532
  %v565 = vunpack.c.l.b16 %v533
  %v566 = vunpack.c.l.b16 %v534
  %v567 = vunpack.c.l.b16 %v535
  %v568 = vunpack.c.l.b16 %v536
  %v569 = vunpack.c.l.b16 %v537
  %v570 = vunpack.c.l.b16 %v538
  %v571 = vunpack.c.l.b16 %v539
  %v572 = vunpack.c.l.b16 %v540
  %v573 = vunpack.c.l.b16 %v541
  %v574 = vunpack.c.l.b16 %v542
  %v575 = vpack.c.b16 %v560, %v559
  %v576 = vpack.c.b16 %v562, %v561
  %v577 = vpack.c.b16 %v564, %v563
  %v578 = vpack.c.b16 %v566, %v565
  %v579 = vpack.c.b16 %v568, %v567
  %v580 = vpack.c.b16 %v570, %v569
  %v581 = vpack.c.b16 %v572, %v571
  %v582 = vpack.c.b16 %v574, %v573
  %591 = vmatprep.subr.bf16.mxu0 0
  %592 = vmatpush1.bf16.msra.mxu0 %v575
  %593 = vmatprep.subr.bf16.mxu0 0
  %594 = vmatpush1.bf16.msra.mxu0 %v576
  %595 = vmatprep.subr.bf16.mxu0 0
  %596 = vmatpush1.bf16.msra.mxu0 %v577
  %597 = vmatprep.subr.bf16.mxu0 0
  %598 = vmatpush1.bf16.msra.mxu0 %v578
  %599 = vmatprep.subr.bf16.mxu0 0
  %600 = vmatpush1.bf16.msra.mxu0 %v579
  %601 = vmatprep.subr.bf16.mxu0 0
  %602 = vmatpush1.bf16.msra.mxu0 %v580
  %603 = vmatprep.subr.bf16.mxu0 0
  %604 = vmatpush1.bf16.msra.mxu0 %v581
  %605 = vmatprep.subr.bf16.mxu0 0
  %606 = vmatpush1.bf16.msra.mxu0 %v582
  %607 = vmatprep.subr.bf16.mxu0 0
  %608 = vmatpush1.bf16.msra.mxu0 0
  %609 = vmatprep.subr.bf16.mxu0 0
  %610 = vmatpush1.bf16.msra.mxu0 0
  %611 = vmatprep.subr.bf16.mxu0 0
  %612 = vmatpush1.bf16.msra.mxu0 0
  %613 = vmatprep.subr.bf16.mxu0 0
  %614 = vmatpush1.bf16.msra.mxu0 0
  %615 = vmatprep.subr.bf16.mxu0 0
  %616 = vmatpush1.bf16.msra.mxu0 0
  %617 = vmatprep.subr.bf16.mxu0 0
  %618 = vmatpush1.bf16.msra.mxu0 0
  %619 = vmatprep.subr.bf16.mxu0 0
  %620 = vmatpush1.bf16.msra.mxu0 0
  %621 = vmatprep.subr.bf16.mxu0 0
  %622 = vmatpush1.bf16.msra.mxu0 0
  %623 = vmatprep.mubr.bf16.mxu0 0
  %624 = vmatmul.mubr.bf16.gmra.mrb[0].mxu0 %v519
  %v625 = vpop.f32.mrb[0].mxu0
  %v626 = vadd.f32 0.0, %v625
  %v627 = vpop.f32.mrb[0].mxu0
  %v628 = vpop.f32.mrb[0].mxu0
  %v629 = vadd.f32 0.0, %v628
  %v630 = vpop.f32.mrb[0].mxu0
  %631 = vmatprep.mubr.bf16.mxu0 0
  %632 = vmatmul.mubr.bf16.gmra.mrb[0].mxu0 %v520
  %v633 = vpop.f32.mrb[0].mxu0
  %v634 = vadd.f32 0.0, %v633
  %v635 = vpop.f32.mrb[0].mxu0
  %v636 = vpop.f32.mrb[0].mxu0
  %v637 = vadd.f32 0.0, %v636
  %v638 = vpop.f32.mrb[0].mxu0
  %639 = vmatprep.mubr.bf16.mxu0 0
  %640 = vmatmul.mubr.bf16.gmra.mrb[0].mxu0 %v521
  %v641 = vpop.f32.mrb[0].mxu0
  %v642 = vadd.f32 0.0, %v641
  %v643 = vpop.f32.mrb[0].mxu0
  %v644 = vpop.f32.mrb[0].mxu0
  %v645 = vadd.f32 0.0, %v644
  %v646 = vpop.f32.mrb[0].mxu0
  %647 = vmatprep.mubr.bf16.mxu0 0
  %648 = vmatmul.mubr.bf16.gmra.mrb[0].mxu0 %v522
  %v649 = vpop.f32.mrb[0].mxu0
  %v650 = vadd.f32 0.0, %v649
  %v651 = vpop.f32.mrb[0].mxu0
  %v652 = vpop.f32.mrb[0].mxu0
  %v653 = vadd.f32 0.0, %v652
  %v654 = vpop.f32.mrb[0].mxu0
  %655 = vmatprep.mubr.bf16.mxu0 0
  %656 = vmatmul.mubr.bf16.gmra.mrb[0].mxu0 %v523
  %v657 = vpop.f32.mrb[0].mxu0
  %v658 = vadd.f32 0.0, %v657
  %v659 = vpop.f32.mrb[0].mxu0
  %v660 = vpop.f32.mrb[0].mxu0
  %v661 = vadd.f32 0.0, %v660
  %v662 = vpop.f32.mrb[0].mxu0
  %663 = vmatprep.mubr.bf16.mxu0 0
  %664 = vmatmul.mubr.bf16.gmra.mrb[0].mxu0 %v524
  %v665 = vpop.f32.mrb[0].mxu0
  %v666 = vadd.f32 0.0, %v665
  %v667 = vpop.f32.mrb[0].mxu0
  %v668 = vpop.f32.mrb[0].mxu0
  %v669 = vadd.f32 0.0, %v668
  %v670 = vpop.f32.mrb[0].mxu0
  %671 = vmatprep.mubr.bf16.mxu0 0
  %672 = vmatmul.mubr.bf16.gmra.mrb[0].mxu0 %v525
  %v673 = vpop.f32.mrb[0].mxu0
  %v674 = vadd.f32 0.0, %v673
  %v675 = vpop.f32.mrb[0].mxu0
  %v676 = vpop.f32.mrb[0].mxu0
  %v677 = vadd.f32 0.0, %v676
  %v678 = vpop.f32.mrb[0].mxu0
  %679 = vmatprep.mubr.bf16.mxu0 0
  %680 = vmatmul.mubr.bf16.gmra.mrb[0].mxu0 %v526
  %v681 = vpop.f32.mrb[0].mxu0
  %v682 = vadd.f32 0.0, %v681
  %v683 = vpop.f32.mrb[0].mxu0
  %v684 = vpop.f32.mrb[0].mxu0
  %v685 = vadd.f32 0.0, %v684
  %v686 = vpop.f32.mrb[0].mxu0
  %687 = vdwg.mxu0
  %v688 = vadd.f32 %v234, %v237
  %v689 = vadd.f32 %v688, %v242
  %v690 = vadd.f32 %v689, %v245
  %v691 = vadd.f32 %v690, %v250
  %v692 = vadd.f32 %v691, %v253
  %v693 = vadd.f32 %v692, %v258
  %v694 = vadd.f32 %v693, %v261
  %v695 = vadd.f32 %v694, %v266
  %v696 = vadd.f32 %v695, %v269
  %v697 = vadd.f32 %v696, %v274
  %v698 = vadd.f32 %v697, %v277
  %v699 = vadd.f32 %v698, %v282
  %v700 = vadd.f32 %v699, %v285
  %v701 = vadd.f32 %v700, %v290
  %v702 = vadd.f32 %v701, %v293
  %v703 = vadd.f32 %v702, %v298
  %v704 = vadd.f32 %v703, %v301
  %v705 = vadd.f32 %v704, %v306
  %v706 = vadd.f32 %v705, %v309
  %v707 = vadd.f32 %v706, %v314
  %v708 = vadd.f32 %v707, %v317
  %v709 = vadd.f32 %v708, %v322
  %v710 = vadd.f32 %v709, %v325
  %v711 = vadd.f32 %v710, %v330
  %v712 = vadd.f32 %v711, %v333
  %v713 = vadd.f32 %v712, %v338
  %v714 = vadd.f32 %v713, %v341
  %v715 = vadd.f32 %v714, %v346
  %v716 = vadd.f32 %v715, %v349
  %v717 = vadd.f32 %v716, %v354
  %v718 = vadd.f32 %v717, %v357
  %v719 = vadd.f32 %v718, %v362
  %v720 = vadd.f32 %v719, %v365
  %v721 = vadd.f32 %v720, %v370
  %v722 = vadd.f32 %v721, %v373
  %v723 = vadd.f32 %v722, %v378
  %v724 = vadd.f32 %v723, %v381
  %v725 = vadd.f32 %v724, %v386
  %v726 = vadd.f32 %v725, %v389
  %v727 = vadd.f32 %v726, %v394
  %v728 = vadd.f32 %v727, %v397
  %v729 = vadd.f32 %v728, %v402
  %v730 = vadd.f32 %v729, %v405
  %v731 = vadd.f32 %v730, %v410
  %v732 = vadd.f32 %v731, %v413
  %v733 = vadd.f32 %v732, %v418
  %v734 = vadd.f32 %v733, %v421
  %v735 = vadd.f32 %v734, %v426
  %v736 = vadd.f32 %v735, %v429
  %v737 = vadd.f32 %v736, %v434
  %v738 = vadd.f32 %v737, %v437
  %v739 = vadd.f32 %v738, %v442
  %v740 = vadd.f32 %v739, %v445
  %v741 = vadd.f32 %v740, %v450
  %v742 = vadd.f32 %v741, %v453
  %v743 = vadd.f32 %v742, %v458
  %v744 = vadd.f32 %v743, %v461
  %v745 = vadd.f32 %v744, %v466
  %v746 = vadd.f32 %v745, %v469
  %v747 = vadd.f32 %v746, %v474
  %v748 = vadd.f32 %v747, %v477
  %v749 = vadd.f32 %v748, %v482
  %v750 = vadd.f32 %v749, %v485
  %v751 = vrot.slane %v750, 4
  %v752 = vadd.f32 %v750, %v751
  %v753 = vrot.slane %v752, 2
  %v754 = vadd.f32 %v752, %v753
  %v755 = vrot.slane %v754, 1
  %v756 = vadd.f32 %v754, %v755
  %v757 = vmul.f32 %v756, 0.001953125
  %v758 = vmul.f32 %v234, %v234
  %v759 = vmul.f32 %v237, %v237
  %v760 = vmul.f32 %v242, %v242
  %v761 = vmul.f32 %v245, %v245
  %v762 = vmul.f32 %v250, %v250
  %v763 = vmul.f32 %v253, %v253
  %v764 = vmul.f32 %v258, %v258
  %v765 = vmul.f32 %v261, %v261
  %v766 = vmul.f32 %v266, %v266
  %v767 = vmul.f32 %v269, %v269
  %v768 = vmul.f32 %v274, %v274
  %v769 = vmul.f32 %v277, %v277
  %v770 = vmul.f32 %v282, %v282
  %v771 = vmul.f32 %v285, %v285
  %v772 = vmul.f32 %v290, %v290
  %v773 = vmul.f32 %v293, %v293
  %v774 = vmul.f32 %v298, %v298
  %v775 = vmul.f32 %v301, %v301
  %v776 = vmul.f32 %v306, %v306
  %v777 = vmul.f32 %v309, %v309
  %v778 = vmul.f32 %v314, %v314
  %v779 = vmul.f32 %v317, %v317
  %v780 = vmul.f32 %v322, %v322
  %v781 = vmul.f32 %v325, %v325
  %v782 = vmul.f32 %v330, %v330
  %v783 = vmul.f32 %v333, %v333
  %v784 = vmul.f32 %v338, %v338
  %v785 = vmul.f32 %v341, %v341
  %v786 = vmul.f32 %v346, %v346
  %v787 = vmul.f32 %v349, %v349
  %v788 = vmul.f32 %v354, %v354
  %v789 = vmul.f32 %v357, %v357
  %v790 = vmul.f32 %v362, %v362
  %v791 = vmul.f32 %v365, %v365
  %v792 = vmul.f32 %v370, %v370
  %v793 = vmul.f32 %v373, %v373
  %v794 = vmul.f32 %v378, %v378
  %v795 = vmul.f32 %v381, %v381
  %v796 = vmul.f32 %v386, %v386
  %v797 = vmul.f32 %v389, %v389
  %v798 = vmul.f32 %v394, %v394
  %v799 = vmul.f32 %v397, %v397
  %v800 = vmul.f32 %v402, %v402
  %v801 = vmul.f32 %v405, %v405
  %v802 = vmul.f32 %v410, %v410
  %v803 = vmul.f32 %v413, %v413
  %v804 = vmul.f32 %v418, %v418
  %v805 = vmul.f32 %v421, %v421
  %v806 = vmul.f32 %v426, %v426
  %v807 = vmul.f32 %v429, %v429
  %v808 = vmul.f32 %v434, %v434
  %v809 = vmul.f32 %v437, %v437
  %v810 = vmul.f32 %v442, %v442
  %v811 = vmul.f32 %v445, %v445
  %v812 = vmul.f32 %v450, %v450
  %v813 = vmul.f32 %v453, %v453
  %v814 = vmul.f32 %v458, %v458
  %v815 = vmul.f32 %v461, %v461
  %v816 = vmul.f32 %v466, %v466
  %v817 = vmul.f32 %v469, %v469
  %v818 = vmul.f32 %v474, %v474
  %v819 = vmul.f32 %v477, %v477
  %v820 = vmul.f32 %v482, %v482
  %v821 = vmul.f32 %v485, %v485
  %v822 = vadd.f32 %v758, %v759
  %v823 = vadd.f32 %v822, %v760
  %v824 = vadd.f32 %v823, %v761
  %v825 = vadd.f32 %v824, %v762
  %v826 = vadd.f32 %v825, %v763
  %v827 = vadd.f32 %v826, %v764
  %v828 = vadd.f32 %v827, %v765
  %v829 = vadd.f32 %v828, %v766
  %v830 = vadd.f32 %v829, %v767
  %v831 = vadd.f32 %v830, %v768
  %v832 = vadd.f32 %v831, %v769
  %v833 = vadd.f32 %v832, %v770
  %v834 = vadd.f32 %v833, %v771
  %v835 = vadd.f32 %v834, %v772
  %v836 = vadd.f32 %v835, %v773
  %v837 = vadd.f32 %v836, %v774
  %v838 = vadd.f32 %v837, %v775
  %v839 = vadd.f32 %v838, %v776
  %v840 = vadd.f32 %v839, %v777
  %v841 = vadd.f32 %v840, %v778
  %v842 = vadd.f32 %v841, %v779
  %v843 = vadd.f32 %v842, %v780
  %v844 = vadd.f32 %v843, %v781
  %v845 = vadd.f32 %v844, %v782
  %v846 = vadd.f32 %v845, %v783
  %v847 = vadd.f32 %v846, %v784
  %v848 = vadd.f32 %v847, %v785
  %v849 = vadd.f32 %v848, %v786
  %v850 = vadd.f32 %v849, %v787
  %v851 = vadd.f32 %v850, %v788
  %v852 = vadd.f32 %v851, %v789
  %v853 = vadd.f32 %v852, %v790
  %v854 = vadd.f32 %v853, %v791
  %v855 = vadd.f32 %v854, %v792
  %v856 = vadd.f32 %v855, %v793
  %v857 = vadd.f32 %v856, %v794
  %v858 = vadd.f32 %v857, %v795
  %v859 = vadd.f32 %v858, %v796
  %v860 = vadd.f32 %v859, %v797
  %v861 = vadd.f32 %v860, %v798
  %v862 = vadd.f32 %v861, %v799
  %v863 = vadd.f32 %v862, %v800
  %v864 = vadd.f32 %v863, %v801
  %v865 = vadd.f32 %v864, %v802
  %v866 = vadd.f32 %v865, %v803
  %v867 = vadd.f32 %v866, %v804
  %v868 = vadd.f32 %v867, %v805
  %v869 = vadd.f32 %v868, %v806
  %v870 = vadd.f32 %v869, %v807
  %v871 = vadd.f32 %v870, %v808
  %v872 = vadd.f32 %v871, %v809
  %v873 = vadd.f32 %v872, %v810
  %v874 = vadd.f32 %v873, %v811
  %v875 = vadd.f32 %v874, %v812
  %v876 = vadd.f32 %v875, %v813
  %v877 = vadd.f32 %v876, %v814
  %v878 = vadd.f32 %v877, %v815
  %v879 = vadd.f32 %v878, %v816
  %v880 = vadd.f32 %v879, %v817
  %v881 = vadd.f32 %v880, %v818
  %v882 = vadd.f32 %v881, %v819
  %v883 = vadd.f32 %v882, %v820
  %v884 = vadd.f32 %v883, %v821
  %v885 = vrot.slane %v884, 4
  %v886 = vadd.f32 %v884, %v885
  %v887 = vrot.slane %v886, 2
  %v888 = vadd.f32 %v886, %v887
  %v889 = vrot.slane %v888, 1
  %v890 = vadd.f32 %v888, %v889
  %v891 = vmul.f32 %v890, 0.001953125
  %v892 = vmul.f32 %v757, %v757
  %v893 = vsub.f32 %v891, %v892
  %v894 = vld [vmem:[%s2] sm:$0x1]
  %v895 = vadd.f32 %v893, 1e-05
  %v896 = vrsqrt.pop %v895
  %v897 = vmul.f32 %v894, %v896
  %v898 = vld [vmem:[%s3] sm:$0x1]
  %v899 = vmul.f32 %v757, %v897
  %v900 = vsub.f32 %v898, %v899
  %v902 = vlaneseq
  %v903 = vshrl.u32 %v902, 7
  %v904 = vsub.s32 0, %v903
  %v905 = vrot.slane %v897, %v904
  %v907 = vmul.f32 %v234, %v905
  %v908 = vmul.f32 %v237, %v905
  %v909 = vmul.f32 %v242, %v905
  %v910 = vmul.f32 %v245, %v905
  %v911 = vmul.f32 %v250, %v905
  %v912 = vmul.f32 %v253, %v905
  %v913 = vmul.f32 %v258, %v905
  %v914 = vmul.f32 %v261, %v905
  %v915 = vmul.f32 %v266, %v905
  %v916 = vmul.f32 %v269, %v905
  %v917 = vmul.f32 %v274, %v905
  %v918 = vmul.f32 %v277, %v905
  %v919 = vmul.f32 %v282, %v905
  %v920 = vmul.f32 %v285, %v905
  %v921 = vmul.f32 %v290, %v905
  %v922 = vmul.f32 %v293, %v905
  %v923 = vmul.f32 %v298, %v905
  %v924 = vmul.f32 %v301, %v905
  %v925 = vmul.f32 %v306, %v905
  %v926 = vmul.f32 %v309, %v905
  %v927 = vmul.f32 %v314, %v905
  %v928 = vmul.f32 %v317, %v905
  %v929 = vmul.f32 %v322, %v905
  %v930 = vmul.f32 %v325, %v905
  %v931 = vmul.f32 %v330, %v905
  %v932 = vmul.f32 %v333, %v905
  %v933 = vmul.f32 %v338, %v905
  %v934 = vmul.f32 %v341, %v905
  %v935 = vmul.f32 %v346, %v905
  %v936 = vmul.f32 %v349, %v905
  %v937 = vmul.f32 %v354, %v905
  %v938 = vmul.f32 %v357, %v905
  %v939 = vmul.f32 %v362, %v905
  %v940 = vmul.f32 %v365, %v905
  %v941 = vmul.f32 %v370, %v905
  %v942 = vmul.f32 %v373, %v905
  %v943 = vmul.f32 %v378, %v905
  %v944 = vmul.f32 %v381, %v905
  %v945 = vmul.f32 %v386, %v905
  %v946 = vmul.f32 %v389, %v905
  %v947 = vmul.f32 %v394, %v905
  %v948 = vmul.f32 %v397, %v905
  %v949 = vmul.f32 %v402, %v905
  %v950 = vmul.f32 %v405, %v905
  %v951 = vmul.f32 %v410, %v905
  %v952 = vmul.f32 %v413, %v905
  %v953 = vmul.f32 %v418, %v905
  %v954 = vmul.f32 %v421, %v905
  %v955 = vmul.f32 %v426, %v905
  %v956 = vmul.f32 %v429, %v905
  %v957 = vmul.f32 %v434, %v905
  %v958 = vmul.f32 %v437, %v905
  %v959 = vmul.f32 %v442, %v905
  %v960 = vmul.f32 %v445, %v905
  %v961 = vmul.f32 %v450, %v905
  %v962 = vmul.f32 %v453, %v905
  %v963 = vmul.f32 %v458, %v905
  %v964 = vmul.f32 %v461, %v905
  %v965 = vmul.f32 %v466, %v905
  %v966 = vmul.f32 %v469, %v905
  %v967 = vmul.f32 %v474, %v905
  %v968 = vmul.f32 %v477, %v905
  %v969 = vmul.f32 %v482, %v905
  %v970 = vmul.f32 %v485, %v905
  %v972 = vlaneseq
  %v973 = vshrl.u32 %v972, 7
  %v974 = vsub.s32 0, %v973
  %v975 = vrot.slane %v900, %v974
  %v977 = vadd.f32 %v907, %v975
  %v978 = vadd.f32 %v908, %v975
  %v979 = vadd.f32 %v909, %v975
  %v980 = vadd.f32 %v910, %v975
  %v981 = vadd.f32 %v911, %v975
  %v982 = vadd.f32 %v912, %v975
  %v983 = vadd.f32 %v913, %v975
  %v984 = vadd.f32 %v914, %v975
  %v985 = vadd.f32 %v915, %v975
  %v986 = vadd.f32 %v916, %v975
  %v987 = vadd.f32 %v917, %v975
  %v988 = vadd.f32 %v918, %v975
  %v989 = vadd.f32 %v919, %v975
  %v990 = vadd.f32 %v920, %v975
  %v991 = vadd.f32 %v921, %v975
  %v992 = vadd.f32 %v922, %v975
  %v993 = vadd.f32 %v923, %v975
  %v994 = vadd.f32 %v924, %v975
  %v995 = vadd.f32 %v925, %v975
  %v996 = vadd.f32 %v926, %v975
  %v997 = vadd.f32 %v927, %v975
  %v998 = vadd.f32 %v928, %v975
  %v999 = vadd.f32 %v929, %v975
  %v1000 = vadd.f32 %v930, %v975
  %v1001 = vadd.f32 %v931, %v975
  %v1002 = vadd.f32 %v932, %v975
  %v1003 = vadd.f32 %v933, %v975
  %v1004 = vadd.f32 %v934, %v975
  %v1005 = vadd.f32 %v935, %v975
  %v1006 = vadd.f32 %v936, %v975
  %v1007 = vadd.f32 %v937, %v975
  %v1008 = vadd.f32 %v938, %v975
  %v1009 = vadd.f32 %v939, %v975
  %v1010 = vadd.f32 %v940, %v975
  %v1011 = vadd.f32 %v941, %v975
  %v1012 = vadd.f32 %v942, %v975
  %v1013 = vadd.f32 %v943, %v975
  %v1014 = vadd.f32 %v944, %v975
  %v1015 = vadd.f32 %v945, %v975
  %v1016 = vadd.f32 %v946, %v975
  %v1017 = vadd.f32 %v947, %v975
  %v1018 = vadd.f32 %v948, %v975
  %v1019 = vadd.f32 %v949, %v975
  %v1020 = vadd.f32 %v950, %v975
  %v1021 = vadd.f32 %v951, %v975
  %v1022 = vadd.f32 %v952, %v975
  %v1023 = vadd.f32 %v953, %v975
  %v1024 = vadd.f32 %v954, %v975
  %v1025 = vadd.f32 %v955, %v975
  %v1026 = vadd.f32 %v956, %v975
  %v1027 = vadd.f32 %v957, %v975
  %v1028 = vadd.f32 %v958, %v975
  %v1029 = vadd.f32 %v959, %v975
  %v1030 = vadd.f32 %v960, %v975
  %v1031 = vadd.f32 %v961, %v975
  %v1032 = vadd.f32 %v962, %v975
  %v1033 = vadd.f32 %v963, %v975
  %v1034 = vadd.f32 %v964, %v975
  %v1035 = vadd.f32 %v965, %v975
  %v1036 = vadd.f32 %v966, %v975
  %v1037 = vadd.f32 %v967, %v975
  %v1038 = vadd.f32 %v968, %v975
  %v1039 = vadd.f32 %v969, %v975
  %v1040 = vadd.f32 %v970, %v975
  %v1041 = vmax.f32 %v977, 0.0
  %v1042 = vmax.f32 %v978, 0.0
  %v1043 = vmax.f32 %v979, 0.0
  %v1044 = vmax.f32 %v980, 0.0
  %v1045 = vmax.f32 %v981, 0.0
  %v1046 = vmax.f32 %v982, 0.0
  %v1047 = vmax.f32 %v983, 0.0
  %v1048 = vmax.f32 %v984, 0.0
  %v1049 = vmax.f32 %v985, 0.0
  %v1050 = vmax.f32 %v986, 0.0
  %v1051 = vmax.f32 %v987, 0.0
  %v1052 = vmax.f32 %v988, 0.0
  %v1053 = vmax.f32 %v989, 0.0
  %v1054 = vmax.f32 %v990, 0.0
  %v1055 = vmax.f32 %v991, 0.0
  %v1056 = vmax.f32 %v992, 0.0
  %v1057 = vmax.f32 %v993, 0.0
  %v1058 = vmax.f32 %v994, 0.0
  %v1059 = vmax.f32 %v995, 0.0
  %v1060 = vmax.f32 %v996, 0.0
  %v1061 = vmax.f32 %v997, 0.0
  %v1062 = vmax.f32 %v998, 0.0
  %v1063 = vmax.f32 %v999, 0.0
  %v1064 = vmax.f32 %v1000, 0.0
  %v1065 = vmax.f32 %v1001, 0.0
  %v1066 = vmax.f32 %v1002, 0.0
  %v1067 = vmax.f32 %v1003, 0.0
  %v1068 = vmax.f32 %v1004, 0.0
  %v1069 = vmax.f32 %v1005, 0.0
  %v1070 = vmax.f32 %v1006, 0.0
  %v1071 = vmax.f32 %v1007, 0.0
  %v1072 = vmax.f32 %v1008, 0.0
  %v1073 = vmax.f32 %v1009, 0.0
  %v1074 = vmax.f32 %v1010, 0.0
  %v1075 = vmax.f32 %v1011, 0.0
  %v1076 = vmax.f32 %v1012, 0.0
  %v1077 = vmax.f32 %v1013, 0.0
  %v1078 = vmax.f32 %v1014, 0.0
  %v1079 = vmax.f32 %v1015, 0.0
  %v1080 = vmax.f32 %v1016, 0.0
  %v1081 = vmax.f32 %v1017, 0.0
  %v1082 = vmax.f32 %v1018, 0.0
  %v1083 = vmax.f32 %v1019, 0.0
  %v1084 = vmax.f32 %v1020, 0.0
  %v1085 = vmax.f32 %v1021, 0.0
  %v1086 = vmax.f32 %v1022, 0.0
  %v1087 = vmax.f32 %v1023, 0.0
  %v1088 = vmax.f32 %v1024, 0.0
  %v1089 = vmax.f32 %v1025, 0.0
  %v1090 = vmax.f32 %v1026, 0.0
  %v1091 = vmax.f32 %v1027, 0.0
  %v1092 = vmax.f32 %v1028, 0.0
  %v1093 = vmax.f32 %v1029, 0.0
  %v1094 = vmax.f32 %v1030, 0.0
  %v1095 = vmax.f32 %v1031, 0.0
  %v1096 = vmax.f32 %v1032, 0.0
  %v1097 = vmax.f32 %v1033, 0.0
  %v1098 = vmax.f32 %v1034, 0.0
  %v1099 = vmax.f32 %v1035, 0.0
  %v1100 = vmax.f32 %v1036, 0.0
  %v1101 = vmax.f32 %v1037, 0.0
  %v1102 = vmax.f32 %v1038, 0.0
  %v1103 = vmax.f32 %v1039, 0.0
  %v1104 = vmax.f32 %v1040, 0.0
  %1105 = vst [vmem:[#allocation2] sm:$0xff] 0.0
  %1106 = vst [vmem:[#allocation2 + $0x8] sm:$0xff] 0.0
  %1107 = vst [vmem:[#allocation2 + $0x10] sm:$0xff] 0.0
  %1108 = vst [vmem:[#allocation2 + $0x1b0] sm:$0xff] 0.0
  %1109 = vst [vmem:[#allocation2 + $0x1b8] sm:$0xff] 0.0
  %1110 = vst [vmem:[#allocation2 + $0x1c0] sm:$0xff] 0.0
  %s1111 = scalar_lea.vmem [#allocation2], 408
  %1112 = vst [vmem:[%s1111] sm:$0xff] 0.0
  %1113 = vst [vmem:[%s1111 + $0x8] sm:$0xff] 0.0
  %1114 = vst [vmem:[%s1111 + $0x10] sm:$0xff] 0.0
  %1115 = vst [vmem:[%s1111 + $0x1b0] sm:$0xff] 0.0
  %1116 = vst [vmem:[%s1111 + $0x1b8] sm:$0xff] 0.0
  %1117 = vst [vmem:[%s1111 + $0x1c0] sm:$0xff] 0.0
  %s1118 = scalar_lea.vmem [#allocation2], 24
  %1119 = vst [vmem:[%s1118] sm:$0x1] 0.0
  %1120 = vst [vmem:[%s1118 + $0x18] sm:$0x1] 0.0
  %1121 = vst [vmem:[%s1118 + $0x30] sm:$0x1] 0.0
  %1122 = vst [vmem:[%s1118 + $0x48] sm:$0x1] 0.0
  %1123 = vst [vmem:[%s1118 + $0x60] sm:$0x1] 0.0
  %1124 = vst [vmem:[%s1118 + $0x78] sm:$0x1] 0.0
  %1125 = vst [vmem:[%s1118 + $0x90] sm:$0x1] 0.0
  %1126 = vst [vmem:[%s1118 + $0xa8] sm:$0x1] 0.0
  %1127 = vst [vmem:[%s1118 + $0xc0] sm:$0x1] 0.0
  %1128 = vst [vmem:[%s1118 + $0xd8] sm:$0x1] 0.0
  %1129 = vst [vmem:[%s1118 + $0xf0] sm:$0x1] 0.0
  %1130 = vst [vmem:[%s1118 + $0x108] sm:$0x1] 0.0
  %1131 = vst [vmem:[%s1118 + $0x120] sm:$0x1] 0.0
  %1132 = vst [vmem:[%s1118 + $0x138] sm:$0x1] 0.0
  %1133 = vst [vmem:[%s1118 + $0x150] sm:$0x1] 0.0
  %1134 = vst [vmem:[%s1118 + $0x168] sm:$0x1] 0.0
  %1135 = vst [vmem:[%s1118 + $0x1b0] sm:$0x1] 0.0
  %1136 = vst [vmem:[%s1118 + $0x1c8] sm:$0x1] 0.0
  %1137 = vst [vmem:[%s1118 + $0x1e0] sm:$0x1] 0.0
  %1138 = vst [vmem:[%s1118 + $0x1f8] sm:$0x1] 0.0
  %1139 = vst [vmem:[%s1118 + $0x210] sm:$0x1] 0.0
  %1140 = vst [vmem:[%s1118 + $0x228] sm:$0x1] 0.0
  %1141 = vst [vmem:[%s1118 + $0x240] sm:$0x1] 0.0
  %1142 = vst [vmem:[%s1118 + $0x258] sm:$0x1] 0.0
  %1143 = vst [vmem:[%s1118 + $0x270] sm:$0x1] 0.0
  %1144 = vst [vmem:[%s1118 + $0x288] sm:$0x1] 0.0
  %1145 = vst [vmem:[%s1118 + $0x2a0] sm:$0x1] 0.0
  %1146 = vst [vmem:[%s1118 + $0x2b8] sm:$0x1] 0.0
  %1147 = vst [vmem:[%s1118 + $0x2d0] sm:$0x1] 0.0
  %1148 = vst [vmem:[%s1118 + $0x2e8] sm:$0x1] 0.0
  %1149 = vst [vmem:[%s1118 + $0x300] sm:$0x1] 0.0
  %1150 = vst [vmem:[%s1118 + $0x318] sm:$0x1] 0.0
  %1151 = vst [vmem:[%s1118 + $0x11] sm:$0x7f] 0.0
  %1152 = vst [vmem:[%s1118 + $0x29] sm:$0x7f] 0.0
  %1153 = vst [vmem:[%s1118 + $0x41] sm:$0x7f] 0.0
  %1154 = vst [vmem:[%s1118 + $0x59] sm:$0x7f] 0.0
  %1155 = vst [vmem:[%s1118 + $0x71] sm:$0x7f] 0.0
  %1156 = vst [vmem:[%s1118 + $0x89] sm:$0x7f] 0.0
  %1157 = vst [vmem:[%s1118 + $0xa1] sm:$0x7f] 0.0
  %1158 = vst [vmem:[%s1118 + $0xb9] sm:$0x7f] 0.0
  %1159 = vst [vmem:[%s1118 + $0xd1] sm:$0x7f] 0.0
  %1160 = vst [vmem:[%s1118 + $0xe9] sm:$0x7f] 0.0
  %1161 = vst [vmem:[%s1118 + $0x101] sm:$0x7f] 0.0
  %1162 = vst [vmem:[%s1118 + $0x119] sm:$0x7f] 0.0
  %1163 = vst [vmem:[%s1118 + $0x131] sm:$0x7f] 0.0
  %1164 = vst [vmem:[%s1118 + $0x149] sm:$0x7f] 0.0
  %1165 = vst [vmem:[%s1118 + $0x161] sm:$0x7f] 0.0
  %1166 = vst [vmem:[%s1118 + $0x179] sm:$0x7f] 0.0
  %1167 = vst [vmem:[%s1118 + $0x1c1] sm:$0x7f] 0.0
  %1168 = vst [vmem:[%s1118 + $0x1d9] sm:$0x7f] 0.0
  %1169 = vst [vmem:[%s1118 + $0x1f1] sm:$0x7f] 0.0
  %1170 = vst [vmem:[%s1118 + $0x209] sm:$0x7f] 0.0
  %1171 = vst [vmem:[%s1118 + $0x221] sm:$0x7f] 0.0
  %1172 = vst [vmem:[%s1118 + $0x239] sm:$0x7f] 0.0
  %1173 = vst [vmem:[%s1118 + $0x251] sm:$0x7f] 0.0
  %1174 = vst [vmem:[%s1118 + $0x269] sm:$0x7f] 0.0
  %1175 = vst [vmem:[%s1118 + $0x281] sm:$0x7f] 0.0
  %1176 = vst [vmem:[%s1118 + $0x299] sm:$0x7f] 0.0
  %1177 = vst [vmem:[%s1118 + $0x2b1] sm:$0x7f] 0.0
  %1178 = vst [vmem:[%s1118 + $0x2c9] sm:$0x7f] 0.0
  %1179 = vst [vmem:[%s1118 + $0x2e1] sm:$0x7f] 0.0
  %1180 = vst [vmem:[%s1118 + $0x2f9] sm:$0x7f] 0.0
  %1181 = vst [vmem:[%s1118 + $0x311] sm:$0x7f] 0.0
  %1182 = vst [vmem:[%s1118 + $0x329] sm:$0x7f] 0.0
  %1183 = vst [vmem:[%s1118 + $0x1] sm:$0xff] %v1041
  %1184 = vst [vmem:[%s1118 + $0x9] sm:$0xff] %v1042
  %1185 = vst [vmem:[%s1118 + $0x19] sm:$0xff] %v1043
  %1186 = vst [vmem:[%s1118 + $0x21] sm:$0xff] %v1044
  %1187 = vst [vmem:[%s1118 + $0x31] sm:$0xff] %v1045
  %1188 = vst [vmem:[%s1118 + $0x39] sm:$0xff] %v1046
  %1189 = vst [vmem:[%s1118 + $0x49] sm:$0xff] %v1047
  %1190 = vst [vmem:[%s1118 + $0x51] sm:$0xff] %v1048
  %1191 = vst [vmem:[%s1118 + $0x61] sm:$0xff] %v1049
  %1192 = vst [vmem:[%s1118 + $0x69] sm:$0xff] %v1050
  %1193 = vst [vmem:[%s1118 + $0x79] sm:$0xff] %v1051
  %1194 = vst [vmem:[%s1118 + $0x81] sm:$0xff] %v1052
  %1195 = vst [vmem:[%s1118 + $0x91] sm:$0xff] %v1053
  %1196 = vst [vmem:[%s1118 + $0x99] sm:$0xff] %v1054
  %1197 = vst [vmem:[%s1118 + $0xa9] sm:$0xff] %v1055
  %1198 = vst [vmem:[%s1118 + $0xb1] sm:$0xff] %v1056
  %1199 = vst [vmem:[%s1118 + $0xc1] sm:$0xff] %v1057
  %1200 = vst [vmem:[%s1118 + $0xc9] sm:$0xff] %v1058
  %1201 = vst [vmem:[%s1118 + $0xd9] sm:$0xff] %v1059
  %1202 = vst [vmem:[%s1118 + $0xe1] sm:$0xff] %v1060
  %1203 = vst [vmem:[%s1118 + $0xf1] sm:$0xff] %v1061
  %1204 = vst [vmem:[%s1118 + $0xf9] sm:$0xff] %v1062
  %1205 = vst [vmem:[%s1118 + $0x109] sm:$0xff] %v1063
  %1206 = vst [vmem:[%s1118 + $0x111] sm:$0xff] %v1064
  %1207 = vst [vmem:[%s1118 + $0x121] sm:$0xff] %v1065
  %1208 = vst [vmem:[%s1118 + $0x129] sm:$0xff] %v1066
  %1209 = vst [vmem:[%s1118 + $0x139] sm:$0xff] %v1067
  %1210 = vst [vmem:[%s1118 + $0x141] sm:$0xff] %v1068
  %1211 = vst [vmem:[%s1118 + $0x151] sm:$0xff] %v1069
  %1212 = vst [vmem:[%s1118 + $0x159] sm:$0xff] %v1070
  %1213 = vst [vmem:[%s1118 + $0x169] sm:$0xff] %v1071
  %1214 = vst [vmem:[%s1118 + $0x171] sm:$0xff] %v1072
  %1215 = vst [vmem:[%s1118 + $0x1b1] sm:$0xff] %v1073
  %1216 = vst [vmem:[%s1118 + $0x1b9] sm:$0xff] %v1074
  %1217 = vst [vmem:[%s1118 + $0x1c9] sm:$0xff] %v1075
  %1218 = vst [vmem:[%s1118 + $0x1d1] sm:$0xff] %v1076
  %1219 = vst [vmem:[%s1118 + $0x1e1] sm:$0xff] %v1077
  %1220 = vst [vmem:[%s1118 + $0x1e9] sm:$0xff] %v1078
  %1221 = vst [vmem:[%s1118 + $0x1f9] sm:$0xff] %v1079
  %1222 = vst [vmem:[%s1118 + $0x201] sm:$0xff] %v1080
  %1223 = vst [vmem:[%s1118 + $0x211] sm:$0xff] %v1081
  %1224 = vst [vmem:[%s1118 + $0x219] sm:$0xff] %v1082
  %1225 = vst [vmem:[%s1118 + $0x229] sm:$0xff] %v1083
  %1226 = vst [vmem:[%s1118 + $0x231] sm:$0xff] %v1084
  %1227 = vst [vmem:[%s1118 + $0x241] sm:$0xff] %v1085
  %1228 = vst [vmem:[%s1118 + $0x249] sm:$0xff] %v1086
  %1229 = vst [vmem:[%s1118 + $0x259] sm:$0xff] %v1087
  %1230 = vst [vmem:[%s1118 + $0x261] sm:$0xff] %v1088
  %1231 = vst [vmem:[%s1118 + $0x271] sm:$0xff] %v1089
  %1232 = vst [vmem:[%s1118 + $0x279] sm:$0xff] %v1090
  %1233 = vst [vmem:[%s1118 + $0x289] sm:$0xff] %v1091
  %1234 = vst [vmem:[%s1118 + $0x291] sm:$0xff] %v1092
  %1235 = vst [vmem:[%s1118 + $0x2a1] sm:$0xff] %v1093
  %1236 = vst [vmem:[%s1118 + $0x2a9] sm:$0xff] %v1094
  %1237 = vst [vmem:[%s1118 + $0x2b9] sm:$0xff] %v1095
  %1238 = vst [vmem:[%s1118 + $0x2c1] sm:$0xff] %v1096
  %1239 = vst [vmem:[%s1118 + $0x2d1] sm:$0xff] %v1097
  %1240 = vst [vmem:[%s1118 + $0x2d9] sm:$0xff] %v1098
  %1241 = vst [vmem:[%s1118 + $0x2e9] sm:$0xff] %v1099
  %1242 = vst [vmem:[%s1118 + $0x2f1] sm:$0xff] %v1100
  %1243 = vst [vmem:[%s1118 + $0x301] sm:$0xff] %v1101
  %1244 = vst [vmem:[%s1118 + $0x309] sm:$0xff] %v1102
  %1245 = vst [vmem:[%s1118 + $0x319] sm:$0xff] %v1103
  %1246 = vst [vmem:[%s1118 + $0x321] sm:$0xff] %v1104
  %v1247 = vld [vmem:[#allocation2] ss:$2 sm:$0xff]
  %s1248 = scalar_lea.vmem [#allocation2], 48
  %v1249 = vld [vmem:[%s1248] ss:$2 sm:$0xff]
  %s1250 = scalar_lea.vmem [#allocation2], 96
  %v1251 = vld [vmem:[%s1250] ss:$2 sm:$0xff]
  %s1252 = scalar_lea.vmem [#allocation2], 144
  %v1253 = vld [vmem:[%s1252] ss:$2 sm:$0xff]
  %s1254 = scalar_lea.vmem [#allocation2], 192
  %v1255 = vld [vmem:[%s1254] ss:$2 sm:$0xff]
  %s1256 = scalar_lea.vmem [#allocation2], 240
  %v1257 = vld [vmem:[%s1256] ss:$2 sm:$0xff]
  %s1258 = scalar_lea.vmem [#allocation2], 288
  %v1259 = vld [vmem:[%s1258] ss:$2 sm:$0xff]
  %s1260 = scalar_lea.vmem [#allocation2], 336
  %v1261 = vld [vmem:[%s1260] ss:$2 sm:$0xff]
  %s1262 = scalar_lea.vmem [#allocation2], 432
  %v1263 = vld [vmem:[%s1262] ss:$2 sm:$0xff]
  %s1264 = scalar_lea.vmem [#allocation2], 480
  %v1265 = vld [vmem:[%s1264] ss:$2 sm:$0xff]
  %s1266 = scalar_lea.vmem [#allocation2], 528
  %v1267 = vld [vmem:[%s1266] ss:$2 sm:$0xff]
  %s1268 = scalar_lea.vmem [#allocation2], 576
  %v1269 = vld [vmem:[%s1268] ss:$2 sm:$0xff]
  %s1270 = scalar_lea.vmem [#allocation2], 624
  %v1271 = vld [vmem:[%s1270] ss:$2 sm:$0xff]
  %s1272 = scalar_lea.vmem [#allocation2], 672
  %v1273 = vld [vmem:[%s1272] ss:$2 sm:$0xff]
  %s1274 = scalar_lea.vmem [#allocation2], 720
  %v1275 = vld [vmem:[%s1274] ss:$2 sm:$0xff]
  %s1276 = scalar_lea.vmem [#allocation2], 768
  %v1277 = vld [vmem:[%s1276] ss:$2 sm:$0xff]
  %v1278 = vpack.c.bf16 %v1249, %v1247
  %v1279 = vpack.c.bf16 %v1253, %v1251
  %v1280 = vpack.c.bf16 %v1257, %v1255
  %v1281 = vpack.c.bf16 %v1261, %v1259
  %v1282 = vpack.c.bf16 %v1265, %v1263
  %v1283 = vpack.c.bf16 %v1269, %v1267
  %v1284 = vpack.c.bf16 %v1273, %v1271
  %v1285 = vpack.c.bf16 %v1277, %v1275
  %v1286 = vld [vmem:[%s4] sm:$0xf]
  %v1287 = vld [vmem:[%s4 + $0x4] sm:$0xf]
  %v1288 = vld [vmem:[%s4 + $0x8] sm:$0xf]
  %v1289 = vld [vmem:[%s4 + $0xc] sm:$0xf]
  %v1290 = vld [vmem:[%s4 + $0x10] sm:$0xf]
  %v1291 = vld [vmem:[%s4 + $0x14] sm:$0xf]
  %v1292 = vld [vmem:[%s4 + $0x18] sm:$0xf]
  %v1293 = vld [vmem:[%s4 + $0x1c] sm:$0xf]
  %v1294 = vld [vmem:[%s4 + $0x20] sm:$0xf]
  %v1295 = vld [vmem:[%s4 + $0x24] sm:$0xf]
  %v1296 = vld [vmem:[%s4 + $0x28] sm:$0xf]
  %v1297 = vld [vmem:[%s4 + $0x2c] sm:$0xf]
  %v1298 = vld [vmem:[%s4 + $0x30] sm:$0xf]
  %v1299 = vld [vmem:[%s4 + $0x34] sm:$0xf]
  %v1300 = vld [vmem:[%s4 + $0x38] sm:$0xf]
  %v1301 = vld [vmem:[%s4 + $0x3c] sm:$0xf]
  %v1318 = vunpack.c.l.b16 %v1286
  %v1319 = vunpack.c.l.b16 %v1287
  %v1320 = vunpack.c.l.b16 %v1288
  %v1321 = vunpack.c.l.b16 %v1289
  %v1322 = vunpack.c.l.b16 %v1290
  %v1323 = vunpack.c.l.b16 %v1291
  %v1324 = vunpack.c.l.b16 %v1292
  %v1325 = vunpack.c.l.b16 %v1293
  %v1326 = vunpack.c.l.b16 %v1294
  %v1327 = vunpack.c.l.b16 %v1295
  %v1328 = vunpack.c.l.b16 %v1296
  %v1329 = vunpack.c.l.b16 %v1297
  %v1330 = vunpack.c.l.b16 %v1298
  %v1331 = vunpack.c.l.b16 %v1299
  %v1332 = vunpack.c.l.b16 %v1300
  %v1333 = vunpack.c.l.b16 %v1301
  %v1334 = vpack.c.b16 %v1319, %v1318
  %v1335 = vpack.c.b16 %v1321, %v1320
  %v1336 = vpack.c.b16 %v1323, %v1322
  %v1337 = vpack.c.b16 %v1325, %v1324
  %v1338 = vpack.c.b16 %v1327, %v1326
  %v1339 = vpack.c.b16 %v1329, %v1328
  %v1340 = vpack.c.b16 %v1331, %v1330
  %v1341 = vpack.c.b16 %v1333, %v1332
  %1350 = vmatprep.subr.bf16.mxu0 0
  %1351 = vmatpush1.bf16.msra.mxu0 %v1334
  %1352 = vmatprep.subr.bf16.mxu0 0
  %1353 = vmatpush1.bf16.msra.mxu0 %v1335
  %1354 = vmatprep.subr.bf16.mxu0 0
  %1355 = vmatpush1.bf16.msra.mxu0 %v1336
  %1356 = vmatprep.subr.bf16.mxu0 0
  %1357 = vmatpush1.bf16.msra.mxu0 %v1337
  %1358 = vmatprep.subr.bf16.mxu0 0
  %1359 = vmatpush1.bf16.msra.mxu0 %v1338
  %1360 = vmatprep.subr.bf16.mxu0 0
  %1361 = vmatpush1.bf16.msra.mxu0 %v1339
  %1362 = vmatprep.subr.bf16.mxu0 0
  %1363 = vmatpush1.bf16.msra.mxu0 %v1340
  %1364 = vmatprep.subr.bf16.mxu0 0
  %1365 = vmatpush1.bf16.msra.mxu0 %v1341
  %1366 = vmatprep.subr.bf16.mxu0 0
  %1367 = vmatpush1.bf16.msra.mxu0 0
  %1368 = vmatprep.subr.bf16.mxu0 0
  %1369 = vmatpush1.bf16.msra.mxu0 0
  %1370 = vmatprep.subr.bf16.mxu0 0
  %1371 = vmatpush1.bf16.msra.mxu0 0
  %1372 = vmatprep.subr.bf16.mxu0 0
  %1373 = vmatpush1.bf16.msra.mxu0 0
  %1374 = vmatprep.subr.bf16.mxu0 0
  %1375 = vmatpush1.bf16.msra.mxu0 0
  %1376 = vmatprep.subr.bf16.mxu0 0
  %1377 = vmatpush1.bf16.msra.mxu0 0
  %1378 = vmatprep.subr.bf16.mxu0 0
  %1379 = vmatpush1.bf16.msra.mxu0 0
  %1380 = vmatprep.subr.bf16.mxu0 0
  %1381 = vmatpush1.bf16.msra.mxu0 0
  %1382 = vmatprep.mubr.bf16.mxu0 0
  %1383 = vmatmul.mubr.bf16.gmra.mrb[0].mxu0 %v1278
  %v1384 = vpop.f32.mrb[0].mxu0
  %v1385 = vadd.f32 0.0, %v1384
  %v1386 = vpop.f32.mrb[0].mxu0
  %v1387 = vpop.f32.mrb[0].mxu0
  %v1388 = vadd.f32 0.0, %v1387
  %v1389 = vpop.f32.mrb[0].mxu0
  %1390 = vmatprep.mubr.bf16.mxu0 0
  %1391 = vmatmul.mubr.bf16.gmra.mrb[0].mxu0 %v1279
  %v1392 = vpop.f32.mrb[0].mxu0
  %v1393 = vadd.f32 0.0, %v1392
  %v1394 = vpop.f32.mrb[0].mxu0
  %v1395 = vpop.f32.mrb[0].mxu0
  %v1396 = vadd.f32 0.0, %v1395
  %v1397 = vpop.f32.mrb[0].mxu0
  %1398 = vmatprep.mubr.bf16.mxu0 0
  %1399 = vmatmul.mubr.bf16.gmra.mrb[0].mxu0 %v1280
  %v1400 = vpop.f32.mrb[0].mxu0
  %v1401 = vadd.f32 0.0, %v1400
  %v1402 = vpop.f32.mrb[0].mxu0
  %v1403 = vpop.f32.mrb[0].mxu0
  %v1404 = vadd.f32 0.0, %v1403
  %v1405 = vpop.f32.mrb[0].mxu0
  %1406 = vmatprep.mubr.bf16.mxu0 0
  %1407 = vmatmul.mubr.bf16.gmra.mrb[0].mxu0 %v1281
  %v1408 = vpop.f32.mrb[0].mxu0
  %v1409 = vadd.f32 0.0, %v1408
  %v1410 = vpop.f32.mrb[0].mxu0
  %v1411 = vpop.f32.mrb[0].mxu0
  %v1412 = vadd.f32 0.0, %v1411
  %v1413 = vpop.f32.mrb[0].mxu0
  %1414 = vmatprep.mubr.bf16.mxu0 0
  %1415 = vmatmul.mubr.bf16.gmra.mrb[0].mxu0 %v1282
  %v1416 = vpop.f32.mrb[0].mxu0
  %v1417 = vadd.f32 0.0, %v1416
  %v1418 = vpop.f32.mrb[0].mxu0
  %v1419 = vpop.f32.mrb[0].mxu0
  %v1420 = vadd.f32 0.0, %v1419
  %v1421 = vpop.f32.mrb[0].mxu0
  %1422 = vmatprep.mubr.bf16.mxu0 0
  %1423 = vmatmul.mubr.bf16.gmra.mrb[0].mxu0 %v1283
  %v1424 = vpop.f32.mrb[0].mxu0
  %v1425 = vadd.f32 0.0, %v1424
  %v1426 = vpop.f32.mrb[0].mxu0
  %v1427 = vpop.f32.mrb[0].mxu0
  %v1428 = vadd.f32 0.0, %v1427
  %v1429 = vpop.f32.mrb[0].mxu0
  %1430 = vmatprep.mubr.bf16.mxu0 0
  %1431 = vmatmul.mubr.bf16.gmra.mrb[0].mxu0 %v1284
  %v1432 = vpop.f32.mrb[0].mxu0
  %v1433 = vadd.f32 0.0, %v1432
  %v1434 = vpop.f32.mrb[0].mxu0
  %v1435 = vpop.f32.mrb[0].mxu0
  %v1436 = vadd.f32 0.0, %v1435
  %v1437 = vpop.f32.mrb[0].mxu0
  %1438 = vmatprep.mubr.bf16.mxu0 0
  %1439 = vmatmul.mubr.bf16.gmra.mrb[0].mxu0 %v1285
  %v1440 = vpop.f32.mrb[0].mxu0
  %v1441 = vadd.f32 0.0, %v1440
  %v1442 = vpop.f32.mrb[0].mxu0
  %v1443 = vpop.f32.mrb[0].mxu0
  %v1444 = vadd.f32 0.0, %v1443
  %v1445 = vpop.f32.mrb[0].mxu0
  %1446 = vdwg.mxu0
  %1447 = vst [vmem:[#allocation3] sm:$0xff] %v1385
  %1448 = vst [vmem:[#allocation3 + $0x8] sm:$0xff] %v1388
  %1449 = vst [vmem:[#allocation3 + $0x10] sm:$0xff] %v1393
  %1450 = vst [vmem:[#allocation3 + $0x18] sm:$0xff] %v1396
  %1451 = vst [vmem:[#allocation3 + $0x20] sm:$0xff] %v1401
  %1452 = vst [vmem:[#allocation3 + $0x28] sm:$0xff] %v1404
  %1453 = vst [vmem:[#allocation3 + $0x30] sm:$0xff] %v1409
  %1454 = vst [vmem:[#allocation3 + $0x38] sm:$0xff] %v1412
  %1455 = vst [vmem:[#allocation3 + $0x40] sm:$0xff] %v1417
  %1456 = vst [vmem:[#allocation3 + $0x48] sm:$0xff] %v1420
  %1457 = vst [vmem:[#allocation3 + $0x50] sm:$0xff] %v1425
  %1458 = vst [vmem:[#allocation3 + $0x58] sm:$0xff] %v1428
  %1459 = vst [vmem:[#allocation3 + $0x60] sm:$0xff] %v1433
  %1460 = vst [vmem:[#allocation3 + $0x68] sm:$0xff] %v1436
  %1461 = vst [vmem:[#allocation3 + $0x70] sm:$0xff] %v1441
  %1462 = vst [vmem:[#allocation3 + $0x78] sm:$0xff] %v1444
  %s1463 = scalar_lea.vmem [#allocation2], 1
  %v1464 = vld [vmem:[%s1463] ss:$2 sm:$0xff]
  %s1465 = scalar_lea.vmem [#allocation2], 49
  %v1466 = vld [vmem:[%s1465] ss:$2 sm:$0xff]
  %s1467 = scalar_lea.vmem [#allocation2], 97
  %v1468 = vld [vmem:[%s1467] ss:$2 sm:$0xff]
  %s1469 = scalar_lea.vmem [#allocation2], 145
  %v1470 = vld [vmem:[%s1469] ss:$2 sm:$0xff]
  %s1471 = scalar_lea.vmem [#allocation2], 193
  %v1472 = vld [vmem:[%s1471] ss:$2 sm:$0xff]
  %s1473 = scalar_lea.vmem [#allocation2], 241
  %v1474 = vld [vmem:[%s1473] ss:$2 sm:$0xff]
  %s1475 = scalar_lea.vmem [#allocation2], 289
  %v1476 = vld [vmem:[%s1475] ss:$2 sm:$0xff]
  %s1477 = scalar_lea.vmem [#allocation2], 337
  %v1478 = vld [vmem:[%s1477] ss:$2 sm:$0xff]
  %s1479 = scalar_lea.vmem [#allocation2], 433
  %v1480 = vld [vmem:[%s1479] ss:$2 sm:$0xff]
  %s1481 = scalar_lea.vmem [#allocation2], 481
  %v1482 = vld [vmem:[%s1481] ss:$2 sm:$0xff]
  %s1483 = scalar_lea.vmem [#allocation2], 529
  %v1484 = vld [vmem:[%s1483] ss:$2 sm:$0xff]
  %s1485 = scalar_lea.vmem [#allocation2], 577
  %v1486 = vld [vmem:[%s1485] ss:$2 sm:$0xff]
  %s1487 = scalar_lea.vmem [#allocation2], 625
  %v1488 = vld [vmem:[%s1487] ss:$2 sm:$0xff]
  %s1489 = scalar_lea.vmem [#allocation2], 673
  %v1490 = vld [vmem:[%s1489] ss:$2 sm:$0xff]
  %s1491 = scalar_lea.vmem [#allocation2], 721
  %v1492 = vld [vmem:[%s1491] ss:$2 sm:$0xff]
  %s1493 = scalar_lea.vmem [#allocation2], 769
  %v1494 = vld [vmem:[%s1493] ss:$2 sm:$0xff]
  %v1495 = vpack.c.bf16 %v1466, %v1464
  %v1496 = vpack.c.bf16 %v1470, %v1468
  %v1497 = vpack.c.bf16 %v1474, %v1472
  %v1498 = vpack.c.bf16 %v1478, %v1476
  %v1499 = vpack.c.bf16 %v1482, %v1480
  %v1500 = vpack.c.bf16 %v1486, %v1484
  %v1501 = vpack.c.bf16 %v1490, %v1488
  %v1502 = vpack.c.bf16 %v1494, %v1492
  %s1503 = scalar_lea.vmem %s4, 64
  %v1504 = vld [vmem:[%s1503] sm:$0xf]
  %v1505 = vld [vmem:[%s1503 + $0x4] sm:$0xf]
  %v1506 = vld [vmem:[%s1503 + $0x8] sm:$0xf]
  %v1507 = vld [vmem:[%s1503 + $0xc] sm:$0xf]
  %v1508 = vld [vmem:[%s1503 + $0x10] sm:$0xf]
  %v1509 = vld [vmem:[%s1503 + $0x14] sm:$0xf]
  %v1510 = vld [vmem:[%s1503 + $0x18] sm:$0xf]
  %v1511 = vld [vmem:[%s1503 + $0x1c] sm:$0xf]
  %v1512 = vld [vmem:[%s1503 + $0x20] sm:$0xf]
  %v1513 = vld [vmem:[%s1503 + $0x24] sm:$0xf]
  %v1514 = vld [vmem:[%s1503 + $0x28] sm:$0xf]
  %v1515 = vld [vmem:[%s1503 + $0x2c] sm:$0xf]
  %v1516 = vld [vmem:[%s1503 + $0x30] sm:$0xf]
  %v1517 = vld [vmem:[%s1503 + $0x34] sm:$0xf]
  %v1518 = vld [vmem:[%s1503 + $0x38] sm:$0xf]
  %v1519 = vld [vmem:[%s1503 + $0x3c] sm:$0xf]
  %v1536 = vunpack.c.l.b16 %v1504
  %v1537 = vunpack.c.l.b16 %v1505
  %v1538 = vunpack.c.l.b16 %v1506
  %v1539 = vunpack.c.l.b16 %v1507
  %v1540 = vunpack.c.l.b16 %v1508
  %v1541 = vunpack.c.l.b16 %v1509
  %v1542 = vunpack.c.l.b16 %v1510
  %v1543 = vunpack.c.l.b16 %v1511
  %v1544 = vunpack.c.l.b16 %v1512
  %v1545 = vunpack.c.l.b16 %v1513
  %v1546 = vunpack.c.l.b16 %v1514
  %v1547 = vunpack.c.l.b16 %v1515
  %v1548 = vunpack.c.l.b16 %v1516
  %v1549 = vunpack.c.l.b16 %v1517
  %v1550 = vunpack.c.l.b16 %v1518
  %v1551 = vunpack.c.l.b16 %v1519
  %v1552 = vpack.c.b16 %v1537, %v1536
  %v1553 = vpack.c.b16 %v1539, %v1538
  %v1554 = vpack.c.b16 %v1541, %v1540
  %v1555 = vpack.c.b16 %v1543, %v1542
  %v1556 = vpack.c.b16 %v1545, %v1544
  %v1557 = vpack.c.b16 %v1547, %v1546
  %v1558 = vpack.c.b16 %v1549, %v1548
  %v1559 = vpack.c.b16 %v1551, %v1550
  %1568 = vmatprep.subr.bf16.mxu0 0
  %1569 = vmatpush1.bf16.msra.mxu0 %v1552
  %1570 = vmatprep.subr.bf16.mxu0 0
  %1571 = vmatpush1.bf16.msra.mxu0 %v1553
  %1572 = vmatprep.subr.bf16.mxu0 0
  %1573 = vmatpush1.bf16.msra.mxu0 %v1554
  %1574 = vmatprep.subr.bf16.mxu0 0
  %1575 = vmatpush1.bf16.msra.mxu0 %v1555
  %1576 = vmatprep.subr.bf16.mxu0 0
  %1577 = vmatpush1.bf16.msra.mxu0 %v1556
  %1578 = vmatprep.subr.bf16.mxu0 0
  %1579 = vmatpush1.bf16.msra.mxu0 %v1557
  %1580 = vmatprep.subr.bf16.mxu0 0
  %1581 = vmatpush1.bf16.msra.mxu0 %v1558
  %1582 = vmatprep.subr.bf16.mxu0 0
  %1583 = vmatpush1.bf16.msra.mxu0 %v1559
  %1584 = vmatprep.subr.bf16.mxu0 0
  %1585 = vmatpush1.bf16.msra.mxu0 0
  %1586 = vmatprep.subr.bf16.mxu0 0
  %1587 = vmatpush1.bf16.msra.mxu0 0
  %1588 = vmatprep.subr.bf16.mxu0 0
  %1589 = vmatpush1.bf16.msra.mxu0 0
  %1590 = vmatprep.subr.bf16.mxu0 0
  %1591 = vmatpush1.bf16.msra.mxu0 0
  %1592 = vmatprep.subr.bf16.mxu0 0
  %1593 = vmatpush1.bf16.msra.mxu0 0
  %1594 = vmatprep.subr.bf16.mxu0 0
  %1595 = vmatpush1.bf16.msra.mxu0 0
  %1596 = vmatprep.subr.bf16.mxu0 0
  %1597 = vmatpush1.bf16.msra.mxu0 0
  %1598 = vmatprep.subr.bf16.mxu0 0
  %1599 = vmatpush1.bf16.msra.mxu0 0
  %1600 = vmatprep.mubr.bf16.mxu0 0
  %1601 = vmatmul.mubr.bf16.gmra.mrb[0].mxu0 %v1495
  %v1602 = vpop.f32.mrb[0].mxu0
  %v1603 = vadd.f32 0.0, %v1602
  %v1604 = vpop.f32.mrb[0].mxu0
  %v1605 = vpop.f32.mrb[0].mxu0
  %v1606 = vadd.f32 0.0, %v1605
  %v1607 = vpop.f32.mrb[0].mxu0
  %1608 = vmatprep.mubr.bf16.mxu0 0
  %1609 = vmatmul.mubr.bf16.gmra.mrb[0].mxu0 %v1496
  %v1610 = vpop.f32.mrb[0].mxu0
  %v1611 = vadd.f32 0.0, %v1610
  %v1612 = vpop.f32.mrb[0].mxu0
  %v1613 = vpop.f32.mrb[0].mxu0
  %v1614 = vadd.f32 0.0, %v1613
  %v1615 = vpop.f32.mrb[0].mxu0
  %1616 = vmatprep.mubr.bf16.mxu0 0
  %1617 = vmatmul.mubr.bf16.gmra.mrb[0].mxu0 %v1497
  %v1618 = vpop.f32.mrb[0].mxu0
  %v1619 = vadd.f32 0.0, %v1618
  %v1620 = vpop.f32.mrb[0].mxu0
  %v1621 = vpop.f32.mrb[0].mxu0
  %v1622 = vadd.f32 0.0, %v1621
  %v1623 = vpop.f32.mrb[0].mxu0
  %1624 = vmatprep.mubr.bf16.mxu0 0
  %1625 = vmatmul.mubr.bf16.gmra.mrb[0].mxu0 %v1498
  %v1626 = vpop.f32.mrb[0].mxu0
  %v1627 = vadd.f32 0.0, %v1626
  %v1628 = vpop.f32.mrb[0].mxu0
  %v1629 = vpop.f32.mrb[0].mxu0
  %v1630 = vadd.f32 0.0, %v1629
  %v1631 = vpop.f32.mrb[0].mxu0
  %1632 = vmatprep.mubr.bf16.mxu0 0
  %1633 = vmatmul.mubr.bf16.gmra.mrb[0].mxu0 %v1499
  %v1634 = vpop.f32.mrb[0].mxu0
  %v1635 = vadd.f32 0.0, %v1634
  %v1636 = vpop.f32.mrb[0].mxu0
  %v1637 = vpop.f32.mrb[0].mxu0
  %v1638 = vadd.f32 0.0, %v1637
  %v1639 = vpop.f32.mrb[0].mxu0
  %1640 = vmatprep.mubr.bf16.mxu0 0
  %1641 = vmatmul.mubr.bf16.gmra.mrb[0].mxu0 %v1500
  %v1642 = vpop.f32.mrb[0].mxu0
  %v1643 = vadd.f32 0.0, %v1642
  %v1644 = vpop.f32.mrb[0].mxu0
  %v1645 = vpop.f32.mrb[0].mxu0
  %v1646 = vadd.f32 0.0, %v1645
  %v1647 = vpop.f32.mrb[0].mxu0
  %1648 = vmatprep.mubr.bf16.mxu0 0
  %1649 = vmatmul.mubr.bf16.gmra.mrb[0].mxu0 %v1501
  %v1650 = vpop.f32.mrb[0].mxu0
  %v1651 = vadd.f32 0.0, %v1650
  %v1652 = vpop.f32.mrb[0].mxu0
  %v1653 = vpop.f32.mrb[0].mxu0
  %v1654 = vadd.f32 0.0, %v1653
  %v1655 = vpop.f32.mrb[0].mxu0
  %1656 = vmatprep.mubr.bf16.mxu0 0
  %1657 = vmatmul.mubr.bf16.gmra.mrb[0].mxu0 %v1502
  %v1658 = vpop.f32.mrb[0].mxu0
  %v1659 = vadd.f32 0.0, %v1658
  %v1660 = vpop.f32.mrb[0].mxu0
  %v1661 = vpop.f32.mrb[0].mxu0
  %v1662 = vadd.f32 0.0, %v1661
  %v1663 = vpop.f32.mrb[0].mxu0
  %1664 = vdwg.mxu0
  %v1665 = vld [vmem:[#allocation3] sm:$0xff]
  %v1666 = vld [vmem:[#allocation3 + $0x8] sm:$0xff]
  %v1667 = vld [vmem:[#allocation3 + $0x10] sm:$0xff]
  %v1668 = vld [vmem:[#allocation3 + $0x18] sm:$0xff]
  %v1669 = vld [vmem:[#allocation3 + $0x20] sm:$0xff]
  %v1670 = vld [vmem:[#allocation3 + $0x28] sm:$0xff]
  %v1671 = vld [vmem:[#allocation3 + $0x30] sm:$0xff]
  %v1672 = vld [vmem:[#allocation3 + $0x38] sm:$0xff]
  %v1673 = vld [vmem:[#allocation3 + $0x40] sm:$0xff]
  %v1674 = vld [vmem:[#allocation3 + $0x48] sm:$0xff]
  %v1675 = vld [vmem:[#allocation3 + $0x50] sm:$0xff]
  %v1676 = vld [vmem:[#allocation3 + $0x58] sm:$0xff]
  %v1677 = vld [vmem:[#allocation3 + $0x60] sm:$0xff]
  %v1678 = vld [vmem:[#allocation3 + $0x68] sm:$0xff]
  %v1679 = vld [vmem:[#allocation3 + $0x70] sm:$0xff]
  %v1680 = vld [vmem:[#allocation3 + $0x78] sm:$0xff]
  %v1681 = vadd.f32 %v1665, %v1603
  %v1682 = vadd.f32 %v1666, %v1606
  %v1683 = vadd.f32 %v1667, %v1611
  %v1684 = vadd.f32 %v1668, %v1614
  %v1685 = vadd.f32 %v1669, %v1619
  %v1686 = vadd.f32 %v1670, %v1622
  %v1687 = vadd.f32 %v1671, %v1627
  %v1688 = vadd.f32 %v1672, %v1630
  %v1689 = vadd.f32 %v1673, %v1635
  %v1690 = vadd.f32 %v1674, %v1638
  %v1691 = vadd.f32 %v1675, %v1643
  %v1692 = vadd.f32 %v1676, %v1646
  %v1693 = vadd.f32 %v1677, %v1651
  %v1694 = vadd.f32 %v1678, %v1654
  %v1695 = vadd.f32 %v1679, %v1659
  %v1696 = vadd.f32 %v1680, %v1662
  %1697 = vst [vmem:[#allocation3] sm:$0xff] %v1681
  %1698 = vst [vmem:[#allocation3 + $0x8] sm:$0xff] %v1682
  %1699 = vst [vmem:[#allocation3 + $0x10] sm:$0xff] %v1683
  %1700 = vst [vmem:[#allocation3 + $0x18] sm:$0xff] %v1684
  %1701 = vst [vmem:[#allocation3 + $0x20] sm:$0xff] %v1685
  %1702 = vst [vmem:[#allocation3 + $0x28] sm:$0xff] %v1686
  %1703 = vst [vmem:[#allocation3 + $0x30] sm:$0xff] %v1687
  %1704 = vst [vmem:[#allocation3 + $0x38] sm:$0xff] %v1688
  %1705 = vst [vmem:[#allocation3 + $0x40] sm:$0xff] %v1689
  %1706 = vst [vmem:[#allocation3 + $0x48] sm:$0xff] %v1690
  %1707 = vst [vmem:[#allocation3 + $0x50] sm:$0xff] %v1691
  %1708 = vst [vmem:[#allocation3 + $0x58] sm:$0xff] %v1692
  %1709 = vst [vmem:[#allocation3 + $0x60] sm:$0xff] %v1693
  %1710 = vst [vmem:[#allocation3 + $0x68] sm:$0xff] %v1694
  %1711 = vst [vmem:[#allocation3 + $0x70] sm:$0xff] %v1695
  %1712 = vst [vmem:[#allocation3 + $0x78] sm:$0xff] %v1696
  %s1713 = scalar_lea.vmem [#allocation2], 2
  %v1714 = vld [vmem:[%s1713] ss:$2 sm:$0xff]
  %s1715 = scalar_lea.vmem [#allocation2], 50
  %v1716 = vld [vmem:[%s1715] ss:$2 sm:$0xff]
  %s1717 = scalar_lea.vmem [#allocation2], 98
  %v1718 = vld [vmem:[%s1717] ss:$2 sm:$0xff]
  %s1719 = scalar_lea.vmem [#allocation2], 146
  %v1720 = vld [vmem:[%s1719] ss:$2 sm:$0xff]
  %s1721 = scalar_lea.vmem [#allocation2], 194
  %v1722 = vld [vmem:[%s1721] ss:$2 sm:$0xff]
  %s1723 = scalar_lea.vmem [#allocation2], 242
  %v1724 = vld [vmem:[%s1723] ss:$2 sm:$0xff]
  %s1725 = scalar_lea.vmem [#allocation2], 290
  %v1726 = vld [vmem:[%s1725] ss:$2 sm:$0xff]
  %s1727 = scalar_lea.vmem [#allocation2], 338
  %v1728 = vld [vmem:[%s1727] ss:$2 sm:$0xff]
  %s1729 = scalar_lea.vmem [#allocation2], 434
  %v1730 = vld [vmem:[%s1729] ss:$2 sm:$0xff]
  %s1731 = scalar_lea.vmem [#allocation2], 482
  %v1732 = vld [vmem:[%s1731] ss:$2 sm:$0xff]
  %s1733 = scalar_lea.vmem [#allocation2], 530
  %v1734 = vld [vmem:[%s1733] ss:$2 sm:$0xff]
  %s1735 = scalar_lea.vmem [#allocation2], 578
  %v1736 = vld [vmem:[%s1735] ss:$2 sm:$0xff]
  %s1737 = scalar_lea.vmem [#allocation2], 626
  %v1738 = vld [vmem:[%s1737] ss:$2 sm:$0xff]
  %s1739 = scalar_lea.vmem [#allocation2], 674
  %v1740 = vld [vmem:[%s1739] ss:$2 sm:$0xff]
  %s1741 = scalar_lea.vmem [#allocation2], 722
  %v1742 = vld [vmem:[%s1741] ss:$2 sm:$0xff]
  %s1743 = scalar_lea.vmem [#allocation2], 770
  %v1744 = vld [vmem:[%s1743] ss:$2 sm:$0xff]
  %v1745 = vpack.c.bf16 %v1716, %v1714
  %v1746 = vpack.c.bf16 %v1720, %v1718
  %v1747 = vpack.c.bf16 %v1724, %v1722
  %v1748 = vpack.c.bf16 %v1728, %v1726
  %v1749 = vpack.c.bf16 %v1732, %v1730
  %v1750 = vpack.c.bf16 %v1736, %v1734
  %v1751 = vpack.c.bf16 %v1740, %v1738
  %v1752 = vpack.c.bf16 %v1744, %v1742
  %s1753 = scalar_lea.vmem %s4, 128
  %v1754 = vld [vmem:[%s1753] sm:$0xf]
  %v1755 = vld [vmem:[%s1753 + $0x4] sm:$0xf]
  %v1756 = vld [vmem:[%s1753 + $0x8] sm:$0xf]
  %v1757 = vld [vmem:[%s1753 + $0xc] sm:$0xf]
  %v1758 = vld [vmem:[%s1753 + $0x10] sm:$0xf]
  %v1759 = vld [vmem:[%s1753 + $0x14] sm:$0xf]
  %v1760 = vld [vmem:[%s1753 + $0x18] sm:$0xf]
  %v1761 = vld [vmem:[%s1753 + $0x1c] sm:$0xf]
  %v1762 = vld [vmem:[%s1753 + $0x20] sm:$0xf]
  %v1763 = vld [vmem:[%s1753 + $0x24] sm:$0xf]
  %v1764 = vld [vmem:[%s1753 + $0x28] sm:$0xf]
  %v1765 = vld [vmem:[%s1753 + $0x2c] sm:$0xf]
  %v1766 = vld [vmem:[%s1753 + $0x30] sm:$0xf]
  %v1767 = vld [vmem:[%s1753 + $0x34] sm:$0xf]
  %v1768 = vld [vmem:[%s1753 + $0x38] sm:$0xf]
  %v1769 = vld [vmem:[%s1753 + $0x3c] sm:$0xf]
  %v1786 = vunpack.c.l.b16 %v1754
  %v1787 = vunpack.c.l.b16 %v1755
  %v1788 = vunpack.c.l.b16 %v1756
  %v1789 = vunpack.c.l.b16 %v1757
  %v1790 = vunpack.c.l.b16 %v1758
  %v1791 = vunpack.c.l.b16 %v1759
  %v1792 = vunpack.c.l.b16 %v1760
  %v1793 = vunpack.c.l.b16 %v1761
  %v1794 = vunpack.c.l.b16 %v1762
  %v1795 = vunpack.c.l.b16 %v1763
  %v1796 = vunpack.c.l.b16 %v1764
  %v1797 = vunpack.c.l.b16 %v1765
  %v1798 = vunpack.c.l.b16 %v1766
  %v1799 = vunpack.c.l.b16 %v1767
  %v1800 = vunpack.c.l.b16 %v1768
  %v1801 = vunpack.c.l.b16 %v1769
  %v1802 = vpack.c.b16 %v1787, %v1786
  %v1803 = vpack.c.b16 %v1789, %v1788
  %v1804 = vpack.c.b16 %v1791, %v1790
  %v1805 = vpack.c.b16 %v1793, %v1792
  %v1806 = vpack.c.b16 %v1795, %v1794
  %v1807 = vpack.c.b16 %v1797, %v1796
  %v1808 = vpack.c.b16 %v1799, %v1798
  %v1809 = vpack.c.b16 %v1801, %v1800
  %1818 = vmatprep.subr.bf16.mxu0 0
  %1819 = vmatpush1.bf16.msra.mxu0 %v1802
  %1820 = vmatprep.subr.bf16.mxu0 0
  %1821 = vmatpush1.bf16.msra.mxu0 %v1803
  %1822 = vmatprep.subr.bf16.mxu0 0
  %1823 = vmatpush1.bf16.msra.mxu0 %v1804
  %1824 = vmatprep.subr.bf16.mxu0 0
  %1825 = vmatpush1.bf16.msra.mxu0 %v1805
  %1826 = vmatprep.subr.bf16.mxu0 0
  %1827 = vmatpush1.bf16.msra.mxu0 %v1806
  %1828 = vmatprep.subr.bf16.mxu0 0
  %1829 = vmatpush1.bf16.msra.mxu0 %v1807
  %1830 = vmatprep.subr.bf16.mxu0 0
  %1831 = vmatpush1.bf16.msra.mxu0 %v1808
  %1832 = vmatprep.subr.bf16.mxu0 0
  %1833 = vmatpush1.bf16.msra.mxu0 %v1809
  %1834 = vmatprep.subr.bf16.mxu0 0
  %1835 = vmatpush1.bf16.msra.mxu0 0
  %1836 = vmatprep.subr.bf16.mxu0 0
  %1837 = vmatpush1.bf16.msra.mxu0 0
  %1838 = vmatprep.subr.bf16.mxu0 0
  %1839 = vmatpush1.bf16.msra.mxu0 0
  %1840 = vmatprep.subr.bf16.mxu0 0
  %1841 = vmatpush1.bf16.msra.mxu0 0
  %1842 = vmatprep.subr.bf16.mxu0 0
  %1843 = vmatpush1.bf16.msra.mxu0 0
  %1844 = vmatprep.subr.bf16.mxu0 0
  %1845 = vmatpush1.bf16.msra.mxu0 0
  %1846 = vmatprep.subr.bf16.mxu0 0
  %1847 = vmatpush1.bf16.msra.mxu0 0
  %1848 = vmatprep.subr.bf16.mxu0 0
  %1849 = vmatpush1.bf16.msra.mxu0 0
  %1850 = vmatprep.mubr.bf16.mxu0 0
  %1851 = vmatmul.mubr.bf16.gmra.mrb[0].mxu0 %v1745
  %v1852 = vpop.f32.mrb[0].mxu0
  %v1853 = vadd.f32 0.0, %v1852
  %v1854 = vpop.f32.mrb[0].mxu0
  %v1855 = vpop.f32.mrb[0].mxu0
  %v1856 = vadd.f32 0.0, %v1855
  %v1857 = vpop.f32.mrb[0].mxu0
  %1858 = vmatprep.mubr.bf16.mxu0 0
  %1859 = vmatmul.mubr.bf16.gmra.mrb[0].mxu0 %v1746
  %v1860 = vpop.f32.mrb[0].mxu0
  %v1861 = vadd.f32 0.0, %v1860
  %v1862 = vpop.f32.mrb[0].mxu0
  %v1863 = vpop.f32.mrb[0].mxu0
  %v1864 = vadd.f32 0.0, %v1863
  %v1865 = vpop.f32.mrb[0].mxu0
  %1866 = vmatprep.mubr.bf16.mxu0 0
  %1867 = vmatmul.mubr.bf16.gmra.mrb[0].mxu0 %v1747
  %v1868 = vpop.f32.mrb[0].mxu0
  %v1869 = vadd.f32 0.0, %v1868
  %v1870 = vpop.f32.mrb[0].mxu0
  %v1871 = vpop.f32.mrb[0].mxu0
  %v1872 = vadd.f32 0.0, %v1871
  %v1873 = vpop.f32.mrb[0].mxu0
  %1874 = vmatprep.mubr.bf16.mxu0 0
  %1875 = vmatmul.mubr.bf16.gmra.mrb[0].mxu0 %v1748
  %v1876 = vpop.f32.mrb[0].mxu0
  %v1877 = vadd.f32 0.0, %v1876
  %v1878 = vpop.f32.mrb[0].mxu0
  %v1879 = vpop.f32.mrb[0].mxu0
  %v1880 = vadd.f32 0.0, %v1879
  %v1881 = vpop.f32.mrb[0].mxu0
  %1882 = vmatprep.mubr.bf16.mxu0 0
  %1883 = vmatmul.mubr.bf16.gmra.mrb[0].mxu0 %v1749
  %v1884 = vpop.f32.mrb[0].mxu0
  %v1885 = vadd.f32 0.0, %v1884
  %v1886 = vpop.f32.mrb[0].mxu0
  %v1887 = vpop.f32.mrb[0].mxu0
  %v1888 = vadd.f32 0.0, %v1887
  %v1889 = vpop.f32.mrb[0].mxu0
  %1890 = vmatprep.mubr.bf16.mxu0 0
  %1891 = vmatmul.mubr.bf16.gmra.mrb[0].mxu0 %v1750
  %v1892 = vpop.f32.mrb[0].mxu0
  %v1893 = vadd.f32 0.0, %v1892
  %v1894 = vpop.f32.mrb[0].mxu0
  %v1895 = vpop.f32.mrb[0].mxu0
  %v1896 = vadd.f32 0.0, %v1895
  %v1897 = vpop.f32.mrb[0].mxu0
  %1898 = vmatprep.mubr.bf16.mxu0 0
  %1899 = vmatmul.mubr.bf16.gmra.mrb[0].mxu0 %v1751
  %v1900 = vpop.f32.mrb[0].mxu0
  %v1901 = vadd.f32 0.0, %v1900
  %v1902 = vpop.f32.mrb[0].mxu0
  %v1903 = vpop.f32.mrb[0].mxu0
  %v1904 = vadd.f32 0.0, %v1903
  %v1905 = vpop.f32.mrb[0].mxu0
  %1906 = vmatprep.mubr.bf16.mxu0 0
  %1907 = vmatmul.mubr.bf16.gmra.mrb[0].mxu0 %v1752
  %v1908 = vpop.f32.mrb[0].mxu0
  %v1909 = vadd.f32 0.0, %v1908
  %v1910 = vpop.f32.mrb[0].mxu0
  %v1911 = vpop.f32.mrb[0].mxu0
  %v1912 = vadd.f32 0.0, %v1911
  %v1913 = vpop.f32.mrb[0].mxu0
  %1914 = vdwg.mxu0
  %v1915 = vld [vmem:[#allocation3] sm:$0xff]
  %v1916 = vld [vmem:[#allocation3 + $0x8] sm:$0xff]
  %v1917 = vld [vmem:[#allocation3 + $0x10] sm:$0xff]
  %v1918 = vld [vmem:[#allocation3 + $0x18] sm:$0xff]
  %v1919 = vld [vmem:[#allocation3 + $0x20] sm:$0xff]
  %v1920 = vld [vmem:[#allocation3 + $0x28] sm:$0xff]
  %v1921 = vld [vmem:[#allocation3 + $0x30] sm:$0xff]
  %v1922 = vld [vmem:[#allocation3 + $0x38] sm:$0xff]
  %v1923 = vld [vmem:[#allocation3 + $0x40] sm:$0xff]
  %v1924 = vld [vmem:[#allocation3 + $0x48] sm:$0xff]
  %v1925 = vld [vmem:[#allocation3 + $0x50] sm:$0xff]
  %v1926 = vld [vmem:[#allocation3 + $0x58] sm:$0xff]
  %v1927 = vld [vmem:[#allocation3 + $0x60] sm:$0xff]
  %v1928 = vld [vmem:[#allocation3 + $0x68] sm:$0xff]
  %v1929 = vld [vmem:[#allocation3 + $0x70] sm:$0xff]
  %v1930 = vld [vmem:[#allocation3 + $0x78] sm:$0xff]
  %v1931 = vadd.f32 %v1915, %v1853
  %v1932 = vadd.f32 %v1916, %v1856
  %v1933 = vadd.f32 %v1917, %v1861
  %v1934 = vadd.f32 %v1918, %v1864
  %v1935 = vadd.f32 %v1919, %v1869
  %v1936 = vadd.f32 %v1920, %v1872
  %v1937 = vadd.f32 %v1921, %v1877
  %v1938 = vadd.f32 %v1922, %v1880
  %v1939 = vadd.f32 %v1923, %v1885
  %v1940 = vadd.f32 %v1924, %v1888
  %v1941 = vadd.f32 %v1925, %v1893
  %v1942 = vadd.f32 %v1926, %v1896
  %v1943 = vadd.f32 %v1927, %v1901
  %v1944 = vadd.f32 %v1928, %v1904
  %v1945 = vadd.f32 %v1929, %v1909
  %v1946 = vadd.f32 %v1930, %v1912
  %1947 = vst [vmem:[#allocation3] sm:$0xff] %v1931
  %1948 = vst [vmem:[#allocation3 + $0x8] sm:$0xff] %v1932
  %1949 = vst [vmem:[#allocation3 + $0x10] sm:$0xff] %v1933
  %1950 = vst [vmem:[#allocation3 + $0x18] sm:$0xff] %v1934
  %1951 = vst [vmem:[#allocation3 + $0x20] sm:$0xff] %v1935
  %1952 = vst [vmem:[#allocation3 + $0x28] sm:$0xff] %v1936
  %1953 = vst [vmem:[#allocation3 + $0x30] sm:$0xff] %v1937
  %1954 = vst [vmem:[#allocation3 + $0x38] sm:$0xff] %v1938
  %1955 = vst [vmem:[#allocation3 + $0x40] sm:$0xff] %v1939
  %1956 = vst [vmem:[#allocation3 + $0x48] sm:$0xff] %v1940
  %1957 = vst [vmem:[#allocation3 + $0x50] sm:$0xff] %v1941
  %1958 = vst [vmem:[#allocation3 + $0x58] sm:$0xff] %v1942
  %1959 = vst [vmem:[#allocation3 + $0x60] sm:$0xff] %v1943
  %1960 = vst [vmem:[#allocation3 + $0x68] sm:$0xff] %v1944
  %1961 = vst [vmem:[#allocation3 + $0x70] sm:$0xff] %v1945
  %1962 = vst [vmem:[#allocation3 + $0x78] sm:$0xff] %v1946
  %v1963 = vld [vmem:[%s1118] ss:$2 sm:$0xff]
  %s1964 = scalar_lea.vmem %s1118, 48 [#allocation2]
  %v1965 = vld [vmem:[%s1964] ss:$2 sm:$0xff]
  %s1966 = scalar_lea.vmem %s1118, 96 [#allocation2]
  %v1967 = vld [vmem:[%s1966] ss:$2 sm:$0xff]
  %s1968 = scalar_lea.vmem %s1118, 144 [#allocation2]
  %v1969 = vld [vmem:[%s1968] ss:$2 sm:$0xff]
  %s1970 = scalar_lea.vmem %s1118, 192 [#allocation2]
  %v1971 = vld [vmem:[%s1970] ss:$2 sm:$0xff]
  %s1972 = scalar_lea.vmem %s1118, 240 [#allocation2]
  %v1973 = vld [vmem:[%s1972] ss:$2 sm:$0xff]
  %s1974 = scalar_lea.vmem %s1118, 288 [#allocation2]
  %v1975 = vld [vmem:[%s1974] ss:$2 sm:$0xff]
  %s1976 = scalar_lea.vmem %s1118, 336 [#allocation2]
  %v1977 = vld [vmem:[%s1976] ss:$2 sm:$0xff]
  %s1978 = scalar_lea.vmem %s1118, 432 [#allocation2]
  %v1979 = vld [vmem:[%s1978] ss:$2 sm:$0xff]
  %s1980 = scalar_lea.vmem %s1118, 480 [#allocation2]
  %v1981 = vld [vmem:[%s1980] ss:$2 sm:$0xff]
  %s1982 = scalar_lea.vmem %s1118, 528 [#allocation2]
  %v1983 = vld [vmem:[%s1982] ss:$2 sm:$0xff]
  %s1984 = scalar_lea.vmem %s1118, 576 [#allocation2]
  %v1985 = vld [vmem:[%s1984] ss:$2 sm:$0xff]
  %s1986 = scalar_lea.vmem %s1118, 624 [#allocation2]
  %v1987 = vld [vmem:[%s1986] ss:$2 sm:$0xff]
  %s1988 = scalar_lea.vmem %s1118, 672 [#allocation2]
  %v1989 = vld [vmem:[%s1988] ss:$2 sm:$0xff]
  %s1990 = scalar_lea.vmem %s1118, 720 [#allocation2]
  %v1991 = vld [vmem:[%s1990] ss:$2 sm:$0xff]
  %s1992 = scalar_lea.vmem %s1118, 768 [#allocation2]
  %v1993 = vld [vmem:[%s1992] ss:$2 sm:$0xff]
  %v1994 = vpack.c.bf16 %v1965, %v1963
  %v1995 = vpack.c.bf16 %v1969, %v1967
  %v1996 = vpack.c.bf16 %v1973, %v1971
  %v1997 = vpack.c.bf16 %v1977, %v1975
  %v1998 = vpack.c.bf16 %v1981, %v1979
  %v1999 = vpack.c.bf16 %v1985, %v1983
  %v2000 = vpack.c.bf16 %v1989, %v1987
  %v2001 = vpack.c.bf16 %v1993, %v1991
  %s2002 = scalar_lea.vmem %s4, 192
  %v2003 = vld [vmem:[%s2002] sm:$0xf]
  %v2004 = vld [vmem:[%s2002 + $0x4] sm:$0xf]
  %v2005 = vld [vmem:[%s2002 + $0x8] sm:$0xf]
  %v2006 = vld [vmem:[%s2002 + $0xc] sm:$0xf]
  %v2007 = vld [vmem:[%s2002 + $0x10] sm:$0xf]
  %v2008 = vld [vmem:[%s2002 + $0x14] sm:$0xf]
  %v2009 = vld [vmem:[%s2002 + $0x18] sm:$0xf]
  %v2010 = vld [vmem:[%s2002 + $0x1c] sm:$0xf]
  %v2011 = vld [vmem:[%s2002 + $0x20] sm:$0xf]
  %v2012 = vld [vmem:[%s2002 + $0x24] sm:$0xf]
  %v2013 = vld [vmem:[%s2002 + $0x28] sm:$0xf]
  %v2014 = vld [vmem:[%s2002 + $0x2c] sm:$0xf]
  %v2015 = vld [vmem:[%s2002 + $0x30] sm:$0xf]
  %v2016 = vld [vmem:[%s2002 + $0x34] sm:$0xf]
  %v2017 = vld [vmem:[%s2002 + $0x38] sm:$0xf]
  %v2018 = vld [vmem:[%s2002 + $0x3c] sm:$0xf]
  %v2035 = vunpack.c.l.b16 %v2003
  %v2036 = vunpack.c.l.b16 %v2004
  %v2037 = vunpack.c.l.b16 %v2005
  %v2038 = vunpack.c.l.b16 %v2006
  %v2039 = vunpack.c.l.b16 %v2007
  %v2040 = vunpack.c.l.b16 %v2008
  %v2041 = vunpack.c.l.b16 %v2009
  %v2042 = vunpack.c.l.b16 %v2010
  %v2043 = vunpack.c.l.b16 %v2011
  %v2044 = vunpack.c.l.b16 %v2012
  %v2045 = vunpack.c.l.b16 %v2013
  %v2046 = vunpack.c.l.b16 %v2014
  %v2047 = vunpack.c.l.b16 %v2015
  %v2048 = vunpack.c.l.b16 %v2016
  %v2049 = vunpack.c.l.b16 %v2017
  %v2050 = vunpack.c.l.b16 %v2018
  %v2051 = vpack.c.b16 %v2036, %v2035
  %v2052 = vpack.c.b16 %v2038, %v2037
  %v2053 = vpack.c.b16 %v2040, %v2039
  %v2054 = vpack.c.b16 %v2042, %v2041
  %v2055 = vpack.c.b16 %v2044, %v2043
  %v2056 = vpack.c.b16 %v2046, %v2045
  %v2057 = vpack.c.b16 %v2048, %v2047
  %v2058 = vpack.c.b16 %v2050, %v2049
  %2067 = vmatprep.subr.bf16.mxu0 0
  %2068 = vmatpush1.bf16.msra.mxu0 %v2051
  %2069 = vmatprep.subr.bf16.mxu0 0
  %2070 = vmatpush1.bf16.msra.mxu0 %v2052
  %2071 = vmatprep.subr.bf16.mxu0 0
  %2072 = vmatpush1.bf16.msra.mxu0 %v2053
  %2073 = vmatprep.subr.bf16.mxu0 0
  %2074 = vmatpush1.bf16.msra.mxu0 %v2054
  %2075 = vmatprep.subr.bf16.mxu0 0
  %2076 = vmatpush1.bf16.msra.mxu0 %v2055
  %2077 = vmatprep.subr.bf16.mxu0 0
  %2078 = vmatpush1.bf16.msra.mxu0 %v2056
  %2079 = vmatprep.subr.bf16.mxu0 0
  %2080 = vmatpush1.bf16.msra.mxu0 %v2057
  %2081 = vmatprep.subr.bf16.mxu0 0
  %2082 = vmatpush1.bf16.msra.mxu0 %v2058
  %2083 = vmatprep.subr.bf16.mxu0 0
  %2084 = vmatpush1.bf16.msra.mxu0 0
  %2085 = vmatprep.subr.bf16.mxu0 0
  %2086 = vmatpush1.bf16.msra.mxu0 0
  %2087 = vmatprep.subr.bf16.mxu0 0
  %2088 = vmatpush1.bf16.msra.mxu0 0
  %2089 = vmatprep.subr.bf16.mxu0 0
  %2090 = vmatpush1.bf16.msra.mxu0 0
  %2091 = vmatprep.subr.bf16.mxu0 0
  %2092 = vmatpush1.bf16.msra.mxu0 0
  %2093 = vmatprep.subr.bf16.mxu0 0
  %2094 = vmatpush1.bf16.msra.mxu0 0
  %2095 = vmatprep.subr.bf16.mxu0 0
  %2096 = vmatpush1.bf16.msra.mxu0 0
  %2097 = vmatprep.subr.bf16.mxu0 0
  %2098 = vmatpush1.bf16.msra.mxu0 0
  %2099 = vmatprep.mubr.bf16.mxu0 0
  %2100 = vmatmul.mubr.bf16.gmra.mrb[0].mxu0 %v1994
  %v2101 = vpop.f32.mrb[0].mxu0
  %v2102 = vadd.f32 0.0, %v2101
  %v2103 = vpop.f32.mrb[0].mxu0
  %v2104 = vpop.f32.mrb[0].mxu0
  %v2105 = vadd.f32 0.0, %v2104
  %v2106 = vpop.f32.mrb[0].mxu0
  %2107 = vmatprep.mubr.bf16.mxu0 0
  %2108 = vmatmul.mubr.bf16.gmra.mrb[0].mxu0 %v1995
  %v2109 = vpop.f32.mrb[0].mxu0
  %v2110 = vadd.f32 0.0, %v2109
  %v2111 = vpop.f32.mrb[0].mxu0
  %v2112 = vpop.f32.mrb[0].mxu0
  %v2113 = vadd.f32 0.0, %v2112
  %v2114 = vpop.f32.mrb[0].mxu0
  %2115 = vmatprep.mubr.bf16.mxu0 0
  %2116 = vmatmul.mubr.bf16.gmra.mrb[0].mxu0 %v1996
  %v2117 = vpop.f32.mrb[0].mxu0
  %v2118 = vadd.f32 0.0, %v2117
  %v2119 = vpop.f32.mrb[0].mxu0
  %v2120 = vpop.f32.mrb[0].mxu0
  %v2121 = vadd.f32 0.0, %v2120
  %v2122 = vpop.f32.mrb[0].mxu0
  %2123 = vmatprep.mubr.bf16.mxu0 0
  %2124 = vmatmul.mubr.bf16.gmra.mrb[0].mxu0 %v1997
  %v2125 = vpop.f32.mrb[0].mxu0
  %v2126 = vadd.f32 0.0, %v2125
  %v2127 = vpop.f32.mrb[0].mxu0
  %v2128 = vpop.f32.mrb[0].mxu0
  %v2129 = vadd.f32 0.0, %v2128
  %v2130 = vpop.f32.mrb[0].mxu0
  %2131 = vmatprep.mubr.bf16.mxu0 0
  %2132 = vmatmul.mubr.bf16.gmra.mrb[0].mxu0 %v1998
  %v2133 = vpop.f32.mrb[0].mxu0
  %v2134 = vadd.f32 0.0, %v2133
  %v2135 = vpop.f32.mrb[0].mxu0
  %v2136 = vpop.f32.mrb[0].mxu0
  %v2137 = vadd.f32 0.0, %v2136
  %v2138 = vpop.f32.mrb[0].mxu0
  %2139 = vmatprep.mubr.bf16.mxu0 0
  %2140 = vmatmul.mubr.bf16.gmra.mrb[0].mxu0 %v1999
  %v2141 = vpop.f32.mrb[0].mxu0
  %v2142 = vadd.f32 0.0, %v2141
  %v2143 = vpop.f32.mrb[0].mxu0
  %v2144 = vpop.f32.mrb[0].mxu0
  %v2145 = vadd.f32 0.0, %v2144
  %v2146 = vpop.f32.mrb[0].mxu0
  %2147 = vmatprep.mubr.bf16.mxu0 0
  %2148 = vmatmul.mubr.bf16.gmra.mrb[0].mxu0 %v2000
  %v2149 = vpop.f32.mrb[0].mxu0
  %v2150 = vadd.f32 0.0, %v2149
  %v2151 = vpop.f32.mrb[0].mxu0
  %v2152 = vpop.f32.mrb[0].mxu0
  %v2153 = vadd.f32 0.0, %v2152
  %v2154 = vpop.f32.mrb[0].mxu0
  %2155 = vmatprep.mubr.bf16.mxu0 0
  %2156 = vmatmul.mubr.bf16.gmra.mrb[0].mxu0 %v2001
  %v2157 = vpop.f32.mrb[0].mxu0
  %v2158 = vadd.f32 0.0, %v2157
  %v2159 = vpop.f32.mrb[0].mxu0
  %v2160 = vpop.f32.mrb[0].mxu0
  %v2161 = vadd.f32 0.0, %v2160
  %v2162 = vpop.f32.mrb[0].mxu0
  %2163 = vdwg.mxu0
  %v2164 = vld [vmem:[#allocation3] sm:$0xff]
  %v2165 = vld [vmem:[#allocation3 + $0x8] sm:$0xff]
  %v2166 = vld [vmem:[#allocation3 + $0x10] sm:$0xff]
  %v2167 = vld [vmem:[#allocation3 + $0x18] sm:$0xff]
  %v2168 = vld [vmem:[#allocation3 + $0x20] sm:$0xff]
  %v2169 = vld [vmem:[#allocation3 + $0x28] sm:$0xff]
  %v2170 = vld [vmem:[#allocation3 + $0x30] sm:$0xff]
  %v2171 = vld [vmem:[#allocation3 + $0x38] sm:$0xff]
  %v2172 = vld [vmem:[#allocation3 + $0x40] sm:$0xff]
  %v2173 = vld [vmem:[#allocation3 + $0x48] sm:$0xff]
  %v2174 = vld [vmem:[#allocation3 + $0x50] sm:$0xff]
  %v2175 = vld [vmem:[#allocation3 + $0x58] sm:$0xff]
  %v2176 = vld [vmem:[#allocation3 + $0x60] sm:$0xff]
  %v2177 = vld [vmem:[#allocation3 + $0x68] sm:$0xff]
  %v2178 = vld [vmem:[#allocation3 + $0x70] sm:$0xff]
  %v2179 = vld [vmem:[#allocation3 + $0x78] sm:$0xff]
  %v2180 = vadd.f32 %v2164, %v2102
  %v2181 = vadd.f32 %v2165, %v2105
  %v2182 = vadd.f32 %v2166, %v2110
  %v2183 = vadd.f32 %v2167, %v2113
  %v2184 = vadd.f32 %v2168, %v2118
  %v2185 = vadd.f32 %v2169, %v2121
  %v2186 = vadd.f32 %v2170, %v2126
  %v2187 = vadd.f32 %v2171, %v2129
  %v2188 = vadd.f32 %v2172, %v2134
  %v2189 = vadd.f32 %v2173, %v2137
  %v2190 = vadd.f32 %v2174, %v2142
  %v2191 = vadd.f32 %v2175, %v2145
  %v2192 = vadd.f32 %v2176, %v2150
  %v2193 = vadd.f32 %v2177, %v2153
  %v2194 = vadd.f32 %v2178, %v2158
  %v2195 = vadd.f32 %v2179, %v2161
  %2196 = vst [vmem:[#allocation3] sm:$0xff] %v2180
  %2197 = vst [vmem:[#allocation3 + $0x8] sm:$0xff] %v2181
  %2198 = vst [vmem:[#allocation3 + $0x10] sm:$0xff] %v2182
  %2199 = vst [vmem:[#allocation3 + $0x18] sm:$0xff] %v2183
  %2200 = vst [vmem:[#allocation3 + $0x20] sm:$0xff] %v2184
  %2201 = vst [vmem:[#allocation3 + $0x28] sm:$0xff] %v2185
  %2202 = vst [vmem:[#allocation3 + $0x30] sm:$0xff] %v2186
  %2203 = vst [vmem:[#allocation3 + $0x38] sm:$0xff] %v2187
  %2204 = vst [vmem:[#allocation3 + $0x40] sm:$0xff] %v2188
  %2205 = vst [vmem:[#allocation3 + $0x48] sm:$0xff] %v2189
  %2206 = vst [vmem:[#allocation3 + $0x50] sm:$0xff] %v2190
  %2207 = vst [vmem:[#allocation3 + $0x58] sm:$0xff] %v2191
  %2208 = vst [vmem:[#allocation3 + $0x60] sm:$0xff] %v2192
  %2209 = vst [vmem:[#allocation3 + $0x68] sm:$0xff] %v2193
  %2210 = vst [vmem:[#allocation3 + $0x70] sm:$0xff] %v2194
  %2211 = vst [vmem:[#allocation3 + $0x78] sm:$0xff] %v2195
  %s2212 = scalar_lea.vmem %s1118, 1 [#allocation2]
  %v2213 = vld [vmem:[%s2212] ss:$2 sm:$0xff]
  %s2214 = scalar_lea.vmem %s1118, 49 [#allocation2]
  %v2215 = vld [vmem:[%s2214] ss:$2 sm:$0xff]
  %s2216 = scalar_lea.vmem %s1118, 97 [#allocation2]
  %v2217 = vld [vmem:[%s2216] ss:$2 sm:$0xff]
  %s2218 = scalar_lea.vmem %s1118, 145 [#allocation2]
  %v2219 = vld [vmem:[%s2218] ss:$2 sm:$0xff]
  %s2220 = scalar_lea.vmem %s1118, 193 [#allocation2]
  %v2221 = vld [vmem:[%s2220] ss:$2 sm:$0xff]
  %s2222 = scalar_lea.vmem %s1118, 241 [#allocation2]
  %v2223 = vld [vmem:[%s2222] ss:$2 sm:$0xff]
  %s2224 = scalar_lea.vmem %s1118, 289 [#allocation2]
  %v2225 = vld [vmem:[%s2224] ss:$2 sm:$0xff]
  %s2226 = scalar_lea.vmem %s1118, 337 [#allocation2]
  %v2227 = vld [vmem:[%s2226] ss:$2 sm:$0xff]
  %s2228 = scalar_lea.vmem %s1118, 433 [#allocation2]
  %v2229 = vld [vmem:[%s2228] ss:$2 sm:$0xff]
  %s2230 = scalar_lea.vmem %s1118, 481 [#allocation2]
  %v2231 = vld [vmem:[%s2230] ss:$2 sm:$0xff]
  %s2232 = scalar_lea.vmem %s1118, 529 [#allocation2]
  %v2233 = vld [vmem:[%s2232] ss:$2 sm:$0xff]
  %s2234 = scalar_lea.vmem %s1118, 577 [#allocation2]
  %v2235 = vld [vmem:[%s2234] ss:$2 sm:$0xff]
  %s2236 = scalar_lea.vmem %s1118, 625 [#allocation2]
  %v2237 = vld [vmem:[%s2236] ss:$2 sm:$0xff]
  %s2238 = scalar_lea.vmem %s1118, 673 [#allocation2]
  %v2239 = vld [vmem:[%s2238] ss:$2 sm:$0xff]
  %s2240 = scalar_lea.vmem %s1118, 721 [#allocation2]
  %v2241 = vld [vmem:[%s2240] ss:$2 sm:$0xff]
  %s2242 = scalar_lea.vmem %s1118, 769 [#allocation2]
  %v2243 = vld [vmem:[%s2242] ss:$2 sm:$0xff]
  %v2244 = vpack.c.bf16 %v2215, %v2213
  %v2245 = vpack.c.bf16 %v2219, %v2217
  %v2246 = vpack.c.bf16 %v2223, %v2221
  %v2247 = vpack.c.bf16 %v2227, %v2225
  %v2248 = vpack.c.bf16 %v2231, %v2229
  %v2249 = vpack.c.bf16 %v2235, %v2233
  %v2250 = vpack.c.bf16 %v2239, %v2237
  %v2251 = vpack.c.bf16 %v2243, %v2241
  %s2252 = scalar_lea.vmem %s4, 256
  %v2253 = vld [vmem:[%s2252] sm:$0xf]
  %v2254 = vld [vmem:[%s2252 + $0x4] sm:$0xf]
  %v2255 = vld [vmem:[%s2252 + $0x8] sm:$0xf]
  %v2256 = vld [vmem:[%s2252 + $0xc] sm:$0xf]
  %v2257 = vld [vmem:[%s2252 + $0x10] sm:$0xf]
  %v2258 = vld [vmem:[%s2252 + $0x14] sm:$0xf]
  %v2259 = vld [vmem:[%s2252 + $0x18] sm:$0xf]
  %v2260 = vld [vmem:[%s2252 + $0x1c] sm:$0xf]
  %v2261 = vld [vmem:[%s2252 + $0x20] sm:$0xf]
  %v2262 = vld [vmem:[%s2252 + $0x24] sm:$0xf]
  %v2263 = vld [vmem:[%s2252 + $0x28] sm:$0xf]
  %v2264 = vld [vmem:[%s2252 + $0x2c] sm:$0xf]
  %v2265 = vld [vmem:[%s2252 + $0x30] sm:$0xf]
  %v2266 = vld [vmem:[%s2252 + $0x34] sm:$0xf]
  %v2267 = vld [vmem:[%s2252 + $0x38] sm:$0xf]
  %v2268 = vld [vmem:[%s2252 + $0x3c] sm:$0xf]
  %v2285 = vunpack.c.l.b16 %v2253
  %v2286 = vunpack.c.l.b16 %v2254
  %v2287 = vunpack.c.l.b16 %v2255
  %v2288 = vunpack.c.l.b16 %v2256
  %v2289 = vunpack.c.l.b16 %v2257
  %v2290 = vunpack.c.l.b16 %v2258
  %v2291 = vunpack.c.l.b16 %v2259
  %v2292 = vunpack.c.l.b16 %v2260
  %v2293 = vunpack.c.l.b16 %v2261
  %v2294 = vunpack.c.l.b16 %v2262
  %v2295 = vunpack.c.l.b16 %v2263
  %v2296 = vunpack.c.l.b16 %v2264
  %v2297 = vunpack.c.l.b16 %v2265
  %v2298 = vunpack.c.l.b16 %v2266
  %v2299 = vunpack.c.l.b16 %v2267
  %v2300 = vunpack.c.l.b16 %v2268
  %v2301 = vpack.c.b16 %v2286, %v2285
  %v2302 = vpack.c.b16 %v2288, %v2287
  %v2303 = vpack.c.b16 %v2290, %v2289
  %v2304 = vpack.c.b16 %v2292, %v2291
  %v2305 = vpack.c.b16 %v2294, %v2293
  %v2306 = vpack.c.b16 %v2296, %v2295
  %v2307 = vpack.c.b16 %v2298, %v2297
  %v2308 = vpack.c.b16 %v2300, %v2299
  %2317 = vmatprep.subr.bf16.mxu0 0
  %2318 = vmatpush1.bf16.msra.mxu0 %v2301
  %2319 = vmatprep.subr.bf16.mxu0 0
  %2320 = vmatpush1.bf16.msra.mxu0 %v2302
  %2321 = vmatprep.subr.bf16.mxu0 0
  %2322 = vmatpush1.bf16.msra.mxu0 %v2303
  %2323 = vmatprep.subr.bf16.mxu0 0
  %2324 = vmatpush1.bf16.msra.mxu0 %v2304
  %2325 = vmatprep.subr.bf16.mxu0 0
  %2326 = vmatpush1.bf16.msra.mxu0 %v2305
  %2327 = vmatprep.subr.bf16.mxu0 0
  %2328 = vmatpush1.bf16.msra.mxu0 %v2306
  %2329 = vmatprep.subr.bf16.mxu0 0
  %2330 = vmatpush1.bf16.msra.mxu0 %v2307
  %2331 = vmatprep.subr.bf16.mxu0 0
  %2332 = vmatpush1.bf16.msra.mxu0 %v2308
  %2333 = vmatprep.subr.bf16.mxu0 0
  %2334 = vmatpush1.bf16.msra.mxu0 0
  %2335 = vmatprep.subr.bf16.mxu0 0
  %2336 = vmatpush1.bf16.msra.mxu0 0
  %2337 = vmatprep.subr.bf16.mxu0 0
  %2338 = vmatpush1.bf16.msra.mxu0 0
  %2339 = vmatprep.subr.bf16.mxu0 0
  %2340 = vmatpush1.bf16.msra.mxu0 0
  %2341 = vmatprep.subr.bf16.mxu0 0
  %2342 = vmatpush1.bf16.msra.mxu0 0
  %2343 = vmatprep.subr.bf16.mxu0 0
  %2344 = vmatpush1.bf16.msra.mxu0 0
  %2345 = vmatprep.subr.bf16.mxu0 0
  %2346 = vmatpush1.bf16.msra.mxu0 0
  %2347 = vmatprep.subr.bf16.mxu0 0
  %2348 = vmatpush1.bf16.msra.mxu0 0
  %2349 = vmatprep.mubr.bf16.mxu0 0
  %2350 = vmatmul.mubr.bf16.gmra.mrb[0].mxu0 %v2244
  %v2351 = vpop.f32.mrb[0].mxu0
  %v2352 = vadd.f32 0.0, %v2351
  %v2353 = vpop.f32.mrb[0].mxu0
  %v2354 = vpop.f32.mrb[0].mxu0
  %v2355 = vadd.f32 0.0, %v2354
  %v2356 = vpop.f32.mrb[0].mxu0
  %2357 = vmatprep.mubr.bf16.mxu0 0
  %2358 = vmatmul.mubr.bf16.gmra.mrb[0].mxu0 %v2245
  %v2359 = vpop.f32.mrb[0].mxu0
  %v2360 = vadd.f32 0.0, %v2359
  %v2361 = vpop.f32.mrb[0].mxu0
  %v2362 = vpop.f32.mrb[0].mxu0
  %v2363 = vadd.f32 0.0, %v2362
  %v2364 = vpop.f32.mrb[0].mxu0
  %2365 = vmatprep.mubr.bf16.mxu0 0
  %2366 = vmatmul.mubr.bf16.gmra.mrb[0].mxu0 %v2246
  %v2367 = vpop.f32.mrb[0].mxu0
  %v2368 = vadd.f32 0.0, %v2367
  %v2369 = vpop.f32.mrb[0].mxu0
  %v2370 = vpop.f32.mrb[0].mxu0
  %v2371 = vadd.f32 0.0, %v2370
  %v2372 = vpop.f32.mrb[0].mxu0
  %2373 = vmatprep.mubr.bf16.mxu0 0
  %2374 = vmatmul.mubr.bf16.gmra.mrb[0].mxu0 %v2247
  %v2375 = vpop.f32.mrb[0].mxu0
  %v2376 = vadd.f32 0.0, %v2375
  %v2377 = vpop.f32.mrb[0].mxu0
  %v2378 = vpop.f32.mrb[0].mxu0
  %v2379 = vadd.f32 0.0, %v2378
  %v2380 = vpop.f32.mrb[0].mxu0
  %2381 = vmatprep.mubr.bf16.mxu0 0
  %2382 = vmatmul.mubr.bf16.gmra.mrb[0].mxu0 %v2248
  %v2383 = vpop.f32.mrb[0].mxu0
  %v2384 = vadd.f32 0.0, %v2383
  %v2385 = vpop.f32.mrb[0].mxu0
  %v2386 = vpop.f32.mrb[0].mxu0
  %v2387 = vadd.f32 0.0, %v2386
  %v2388 = vpop.f32.mrb[0].mxu0
  %2389 = vmatprep.mubr.bf16.mxu0 0
  %2390 = vmatmul.mubr.bf16.gmra.mrb[0].mxu0 %v2249
  %v2391 = vpop.f32.mrb[0].mxu0
  %v2392 = vadd.f32 0.0, %v2391
  %v2393 = vpop.f32.mrb[0].mxu0
  %v2394 = vpop.f32.mrb[0].mxu0
  %v2395 = vadd.f32 0.0, %v2394
  %v2396 = vpop.f32.mrb[0].mxu0
  %2397 = vmatprep.mubr.bf16.mxu0 0
  %2398 = vmatmul.mubr.bf16.gmra.mrb[0].mxu0 %v2250
  %v2399 = vpop.f32.mrb[0].mxu0
  %v2400 = vadd.f32 0.0, %v2399
  %v2401 = vpop.f32.mrb[0].mxu0
  %v2402 = vpop.f32.mrb[0].mxu0
  %v2403 = vadd.f32 0.0, %v2402
  %v2404 = vpop.f32.mrb[0].mxu0
  %2405 = vmatprep.mubr.bf16.mxu0 0
  %2406 = vmatmul.mubr.bf16.gmra.mrb[0].mxu0 %v2251
  %v2407 = vpop.f32.mrb[0].mxu0
  %v2408 = vadd.f32 0.0, %v2407
  %v2409 = vpop.f32.mrb[0].mxu0
  %v2410 = vpop.f32.mrb[0].mxu0
  %v2411 = vadd.f32 0.0, %v2410
  %v2412 = vpop.f32.mrb[0].mxu0
  %2413 = vdwg.mxu0
  %v2414 = vld [vmem:[#allocation3] sm:$0xff]
  %v2415 = vld [vmem:[#allocation3 + $0x8] sm:$0xff]
  %v2416 = vld [vmem:[#allocation3 + $0x10] sm:$0xff]
  %v2417 = vld [vmem:[#allocation3 + $0x18] sm:$0xff]
  %v2418 = vld [vmem:[#allocation3 + $0x20] sm:$0xff]
  %v2419 = vld [vmem:[#allocation3 + $0x28] sm:$0xff]
  %v2420 = vld [vmem:[#allocation3 + $0x30] sm:$0xff]
  %v2421 = vld [vmem:[#allocation3 + $0x38] sm:$0xff]
  %v2422 = vld [vmem:[#allocation3 + $0x40] sm:$0xff]
  %v2423 = vld [vmem:[#allocation3 + $0x48] sm:$0xff]
  %v2424 = vld [vmem:[#allocation3 + $0x50] sm:$0xff]
  %v2425 = vld [vmem:[#allocation3 + $0x58] sm:$0xff]
  %v2426 = vld [vmem:[#allocation3 + $0x60] sm:$0xff]
  %v2427 = vld [vmem:[#allocation3 + $0x68] sm:$0xff]
  %v2428 = vld [vmem:[#allocation3 + $0x70] sm:$0xff]
  %v2429 = vld [vmem:[#allocation3 + $0x78] sm:$0xff]
  %v2430 = vadd.f32 %v2414, %v2352
  %v2431 = vadd.f32 %v2415, %v2355
  %v2432 = vadd.f32 %v2416, %v2360
  %v2433 = vadd.f32 %v2417, %v2363
  %v2434 = vadd.f32 %v2418, %v2368
  %v2435 = vadd.f32 %v2419, %v2371
  %v2436 = vadd.f32 %v2420, %v2376
  %v2437 = vadd.f32 %v2421, %v2379
  %v2438 = vadd.f32 %v2422, %v2384
  %v2439 = vadd.f32 %v2423, %v2387
  %v2440 = vadd.f32 %v2424, %v2392
  %v2441 = vadd.f32 %v2425, %v2395
  %v2442 = vadd.f32 %v2426, %v2400
  %v2443 = vadd.f32 %v2427, %v2403
  %v2444 = vadd.f32 %v2428, %v2408
  %v2445 = vadd.f32 %v2429, %v2411
  %2446 = vst [vmem:[#allocation3] sm:$0xff] %v2430
  %2447 = vst [vmem:[#allocation3 + $0x8] sm:$0xff] %v2431
  %2448 = vst [vmem:[#allocation3 + $0x10] sm:$0xff] %v2432
  %2449 = vst [vmem:[#allocation3 + $0x18] sm:$0xff] %v2433
  %2450 = vst [vmem:[#allocation3 + $0x20] sm:$0xff] %v2434
  %2451 = vst [vmem:[#allocation3 + $0x28] sm:$0xff] %v2435
  %2452 = vst [vmem:[#allocation3 + $0x30] sm:$0xff] %v2436
  %2453 = vst [vmem:[#allocation3 + $0x38] sm:$0xff] %v2437
  %2454 = vst [vmem:[#allocation3 + $0x40] sm:$0xff] %v2438
  %2455 = vst [vmem:[#allocation3 + $0x48] sm:$0xff] %v2439
  %2456 = vst [vmem:[#allocation3 + $0x50] sm:$0xff] %v2440
  %2457 = vst [vmem:[#allocation3 + $0x58] sm:$0xff] %v2441
  %2458 = vst [vmem:[#allocation3 + $0x60] sm:$0xff] %v2442
  %2459 = vst [vmem:[#allocation3 + $0x68] sm:$0xff] %v2443
  %2460 = vst [vmem:[#allocation3 + $0x70] sm:$0xff] %v2444
  %2461 = vst [vmem:[#allocation3 + $0x78] sm:$0xff] %v2445
  %s2462 = scalar_lea.vmem %s1118, 2 [#allocation2]
  %v2463 = vld [vmem:[%s2462] ss:$2 sm:$0xff]
  %s2464 = scalar_lea.vmem %s1118, 50 [#allocation2]
  %v2465 = vld [vmem:[%s2464] ss:$2 sm:$0xff]
  %s2466 = scalar_lea.vmem %s1118, 98 [#allocation2]
  %v2467 = vld [vmem:[%s2466] ss:$2 sm:$0xff]
  %s2468 = scalar_lea.vmem %s1118, 146 [#allocation2]
  %v2469 = vld [vmem:[%s2468] ss:$2 sm:$0xff]
  %s2470 = scalar_lea.vmem %s1118, 194 [#allocation2]
  %v2471 = vld [vmem:[%s2470] ss:$2 sm:$0xff]
  %s2472 = scalar_lea.vmem %s1118, 242 [#allocation2]
  %v2473 = vld [vmem:[%s2472] ss:$2 sm:$0xff]
  %s2474 = scalar_lea.vmem %s1118, 290 [#allocation2]
  %v2475 = vld [vmem:[%s2474] ss:$2 sm:$0xff]
  %s2476 = scalar_lea.vmem %s1118, 338 [#allocation2]
  %v2477 = vld [vmem:[%s2476] ss:$2 sm:$0xff]
  %s2478 = scalar_lea.vmem %s1118, 434 [#allocation2]
  %v2479 = vld [vmem:[%s2478] ss:$2 sm:$0xff]
  %s2480 = scalar_lea.vmem %s1118, 482 [#allocation2]
  %v2481 = vld [vmem:[%s2480] ss:$2 sm:$0xff]
  %s2482 = scalar_lea.vmem %s1118, 530 [#allocation2]
  %v2483 = vld [vmem:[%s2482] ss:$2 sm:$0xff]
  %s2484 = scalar_lea.vmem %s1118, 578 [#allocation2]
  %v2485 = vld [vmem:[%s2484] ss:$2 sm:$0xff]
  %s2486 = scalar_lea.vmem %s1118, 626 [#allocation2]
  %v2487 = vld [vmem:[%s2486] ss:$2 sm:$0xff]
  %s2488 = scalar_lea.vmem %s1118, 674 [#allocation2]
  %v2489 = vld [vmem:[%s2488] ss:$2 sm:$0xff]
  %s2490 = scalar_lea.vmem %s1118, 722 [#allocation2]
  %v2491 = vld [vmem:[%s2490] ss:$2 sm:$0xff]
  %s2492 = scalar_lea.vmem %s1118, 770 [#allocation2]
  %v2493 = vld [vmem:[%s2492] ss:$2 sm:$0xff]
  %v2494 = vpack.c.bf16 %v2465, %v2463
  %v2495 = vpack.c.bf16 %v2469, %v2467
  %v2496 = vpack.c.bf16 %v2473, %v2471
  %v2497 = vpack.c.bf16 %v2477, %v2475
  %v2498 = vpack.c.bf16 %v2481, %v2479
  %v2499 = vpack.c.bf16 %v2485, %v2483
  %v2500 = vpack.c.bf16 %v2489, %v2487
  %v2501 = vpack.c.bf16 %v2493, %v2491
  %s2502 = scalar_lea.vmem %s4, 320
  %v2503 = vld [vmem:[%s2502] sm:$0xf]
  %v2504 = vld [vmem:[%s2502 + $0x4] sm:$0xf]
  %v2505 = vld [vmem:[%s2502 + $0x8] sm:$0xf]
  %v2506 = vld [vmem:[%s2502 + $0xc] sm:$0xf]
  %v2507 = vld [vmem:[%s2502 + $0x10] sm:$0xf]
  %v2508 = vld [vmem:[%s2502 + $0x14] sm:$0xf]
  %v2509 = vld [vmem:[%s2502 + $0x18] sm:$0xf]
  %v2510 = vld [vmem:[%s2502 + $0x1c] sm:$0xf]
  %v2511 = vld [vmem:[%s2502 + $0x20] sm:$0xf]
  %v2512 = vld [vmem:[%s2502 + $0x24] sm:$0xf]
  %v2513 = vld [vmem:[%s2502 + $0x28] sm:$0xf]
  %v2514 = vld [vmem:[%s2502 + $0x2c] sm:$0xf]
  %v2515 = vld [vmem:[%s2502 + $0x30] sm:$0xf]
  %v2516 = vld [vmem:[%s2502 + $0x34] sm:$0xf]
  %v2517 = vld [vmem:[%s2502 + $0x38] sm:$0xf]
  %v2518 = vld [vmem:[%s2502 + $0x3c] sm:$0xf]
  %v2535 = vunpack.c.l.b16 %v2503
  %v2536 = vunpack.c.l.b16 %v2504
  %v2537 = vunpack.c.l.b16 %v2505
  %v2538 = vunpack.c.l.b16 %v2506
  %v2539 = vunpack.c.l.b16 %v2507
  %v2540 = vunpack.c.l.b16 %v2508
  %v2541 = vunpack.c.l.b16 %v2509
  %v2542 = vunpack.c.l.b16 %v2510
  %v2543 = vunpack.c.l.b16 %v2511
  %v2544 = vunpack.c.l.b16 %v2512
  %v2545 = vunpack.c.l.b16 %v2513
  %v2546 = vunpack.c.l.b16 %v2514
  %v2547 = vunpack.c.l.b16 %v2515
  %v2548 = vunpack.c.l.b16 %v2516
  %v2549 = vunpack.c.l.b16 %v2517
  %v2550 = vunpack.c.l.b16 %v2518
  %v2551 = vpack.c.b16 %v2536, %v2535
  %v2552 = vpack.c.b16 %v2538, %v2537
  %v2553 = vpack.c.b16 %v2540, %v2539
  %v2554 = vpack.c.b16 %v2542, %v2541
  %v2555 = vpack.c.b16 %v2544, %v2543
  %v2556 = vpack.c.b16 %v2546, %v2545
  %v2557 = vpack.c.b16 %v2548, %v2547
  %v2558 = vpack.c.b16 %v2550, %v2549
  %2567 = vmatprep.subr.bf16.mxu0 0
  %2568 = vmatpush1.bf16.msra.mxu0 %v2551
  %2569 = vmatprep.subr.bf16.mxu0 0
  %2570 = vmatpush1.bf16.msra.mxu0 %v2552
  %2571 = vmatprep.subr.bf16.mxu0 0
  %2572 = vmatpush1.bf16.msra.mxu0 %v2553
  %2573 = vmatprep.subr.bf16.mxu0 0
  %2574 = vmatpush1.bf16.msra.mxu0 %v2554
  %2575 = vmatprep.subr.bf16.mxu0 0
  %2576 = vmatpush1.bf16.msra.mxu0 %v2555
  %2577 = vmatprep.subr.bf16.mxu0 0
  %2578 = vmatpush1.bf16.msra.mxu0 %v2556
  %2579 = vmatprep.subr.bf16.mxu0 0
  %2580 = vmatpush1.bf16.msra.mxu0 %v2557
  %2581 = vmatprep.subr.bf16.mxu0 0
  %2582 = vmatpush1.bf16.msra.mxu0 %v2558
  %2583 = vmatprep.subr.bf16.mxu0 0
  %2584 = vmatpush1.bf16.msra.mxu0 0
  %2585 = vmatprep.subr.bf16.mxu0 0
  %2586 = vmatpush1.bf16.msra.mxu0 0
  %2587 = vmatprep.subr.bf16.mxu0 0
  %2588 = vmatpush1.bf16.msra.mxu0 0
  %2589 = vmatprep.subr.bf16.mxu0 0
  %2590 = vmatpush1.bf16.msra.mxu0 0
  %2591 = vmatprep.subr.bf16.mxu0 0
  %2592 = vmatpush1.bf16.msra.mxu0 0
  %2593 = vmatprep.subr.bf16.mxu0 0
  %2594 = vmatpush1.bf16.msra.mxu0 0
  %2595 = vmatprep.subr.bf16.mxu0 0
  %2596 = vmatpush1.bf16.msra.mxu0 0
  %2597 = vmatprep.subr.bf16.mxu0 0
  %2598 = vmatpush1.bf16.msra.mxu0 0
  %2599 = vmatprep.mubr.bf16.mxu0 0
  %2600 = vmatmul.mubr.bf16.gmra.mrb[0].mxu0 %v2494
  %v2601 = vpop.f32.mrb[0].mxu0
  %v2602 = vadd.f32 0.0, %v2601
  %v2603 = vpop.f32.mrb[0].mxu0
  %v2604 = vpop.f32.mrb[0].mxu0
  %v2605 = vadd.f32 0.0, %v2604
  %v2606 = vpop.f32.mrb[0].mxu0
  %2607 = vmatprep.mubr.bf16.mxu0 0
  %2608 = vmatmul.mubr.bf16.gmra.mrb[0].mxu0 %v2495
  %v2609 = vpop.f32.mrb[0].mxu0
  %v2610 = vadd.f32 0.0, %v2609
  %v2611 = vpop.f32.mrb[0].mxu0
  %v2612 = vpop.f32.mrb[0].mxu0
  %v2613 = vadd.f32 0.0, %v2612
  %v2614 = vpop.f32.mrb[0].mxu0
  %2615 = vmatprep.mubr.bf16.mxu0 0
  %2616 = vmatmul.mubr.bf16.gmra.mrb[0].mxu0 %v2496
  %v2617 = vpop.f32.mrb[0].mxu0
  %v2618 = vadd.f32 0.0, %v2617
  %v2619 = vpop.f32.mrb[0].mxu0
  %v2620 = vpop.f32.mrb[0].mxu0
  %v2621 = vadd.f32 0.0, %v2620
  %v2622 = vpop.f32.mrb[0].mxu0
  %2623 = vmatprep.mubr.bf16.mxu0 0
  %2624 = vmatmul.mubr.bf16.gmra.mrb[0].mxu0 %v2497
  %v2625 = vpop.f32.mrb[0].mxu0
  %v2626 = vadd.f32 0.0, %v2625
  %v2627 = vpop.f32.mrb[0].mxu0
  %v2628 = vpop.f32.mrb[0].mxu0
  %v2629 = vadd.f32 0.0, %v2628
  %v2630 = vpop.f32.mrb[0].mxu0
  %2631 = vmatprep.mubr.bf16.mxu0 0
  %2632 = vmatmul.mubr.bf16.gmra.mrb[0].mxu0 %v2498
  %v2633 = vpop.f32.mrb[0].mxu0
  %v2634 = vadd.f32 0.0, %v2633
  %v2635 = vpop.f32.mrb[0].mxu0
  %v2636 = vpop.f32.mrb[0].mxu0
  %v2637 = vadd.f32 0.0, %v2636
  %v2638 = vpop.f32.mrb[0].mxu0
  %2639 = vmatprep.mubr.bf16.mxu0 0
  %2640 = vmatmul.mubr.bf16.gmra.mrb[0].mxu0 %v2499
  %v2641 = vpop.f32.mrb[0].mxu0
  %v2642 = vadd.f32 0.0, %v2641
  %v2643 = vpop.f32.mrb[0].mxu0
  %v2644 = vpop.f32.mrb[0].mxu0
  %v2645 = vadd.f32 0.0, %v2644
  %v2646 = vpop.f32.mrb[0].mxu0
  %2647 = vmatprep.mubr.bf16.mxu0 0
  %2648 = vmatmul.mubr.bf16.gmra.mrb[0].mxu0 %v2500
  %v2649 = vpop.f32.mrb[0].mxu0
  %v2650 = vadd.f32 0.0, %v2649
  %v2651 = vpop.f32.mrb[0].mxu0
  %v2652 = vpop.f32.mrb[0].mxu0
  %v2653 = vadd.f32 0.0, %v2652
  %v2654 = vpop.f32.mrb[0].mxu0
  %2655 = vmatprep.mubr.bf16.mxu0 0
  %2656 = vmatmul.mubr.bf16.gmra.mrb[0].mxu0 %v2501
  %v2657 = vpop.f32.mrb[0].mxu0
  %v2658 = vadd.f32 0.0, %v2657
  %v2659 = vpop.f32.mrb[0].mxu0
  %v2660 = vpop.f32.mrb[0].mxu0
  %v2661 = vadd.f32 0.0, %v2660
  %v2662 = vpop.f32.mrb[0].mxu0
  %2663 = vdwg.mxu0
  %v2664 = vld [vmem:[#allocation3] sm:$0xff]
  %v2665 = vld [vmem:[#allocation3 + $0x8] sm:$0xff]
  %v2666 = vld [vmem:[#allocation3 + $0x10] sm:$0xff]
  %v2667 = vld [vmem:[#allocation3 + $0x18] sm:$0xff]
  %v2668 = vld [vmem:[#allocation3 + $0x20] sm:$0xff]
  %v2669 = vld [vmem:[#allocation3 + $0x28] sm:$0xff]
  %v2670 = vld [vmem:[#allocation3 + $0x30] sm:$0xff]
  %v2671 = vld [vmem:[#allocation3 + $0x38] sm:$0xff]
  %v2672 = vld [vmem:[#allocation3 + $0x40] sm:$0xff]
  %v2673 = vld [vmem:[#allocation3 + $0x48] sm:$0xff]
  %v2674 = vld [vmem:[#allocation3 + $0x50] sm:$0xff]
  %v2675 = vld [vmem:[#allocation3 + $0x58] sm:$0xff]
  %v2676 = vld [vmem:[#allocation3 + $0x60] sm:$0xff]
  %v2677 = vld [vmem:[#allocation3 + $0x68] sm:$0xff]
  %v2678 = vld [vmem:[#allocation3 + $0x70] sm:$0xff]
  %v2679 = vld [vmem:[#allocation3 + $0x78] sm:$0xff]
  %v2680 = vadd.f32 %v2664, %v2602
  %v2681 = vadd.f32 %v2665, %v2605
  %v2682 = vadd.f32 %v2666, %v2610
  %v2683 = vadd.f32 %v2667, %v2613
  %v2684 = vadd.f32 %v2668, %v2618
  %v2685 = vadd.f32 %v2669, %v2621
  %v2686 = vadd.f32 %v2670, %v2626
  %v2687 = vadd.f32 %v2671, %v2629
  %v2688 = vadd.f32 %v2672, %v2634
  %v2689 = vadd.f32 %v2673, %v2637
  %v2690 = vadd.f32 %v2674, %v2642
  %v2691 = vadd.f32 %v2675, %v2645
  %v2692 = vadd.f32 %v2676, %v2650
  %v2693 = vadd.f32 %v2677, %v2653
  %v2694 = vadd.f32 %v2678, %v2658
  %v2695 = vadd.f32 %v2679, %v2661
  %2696 = vst [vmem:[#allocation3] sm:$0xff] %v2680
  %2697 = vst [vmem:[#allocation3 + $0x8] sm:$0xff] %v2681
  %2698 = vst [vmem:[#allocation3 + $0x10] sm:$0xff] %v2682
  %2699 = vst [vmem:[#allocation3 + $0x18] sm:$0xff] %v2683
  %2700 = vst [vmem:[#allocation3 + $0x20] sm:$0xff] %v2684
  %2701 = vst [vmem:[#allocation3 + $0x28] sm:$0xff] %v2685
  %2702 = vst [vmem:[#allocation3 + $0x30] sm:$0xff] %v2686
  %2703 = vst [vmem:[#allocation3 + $0x38] sm:$0xff] %v2687
  %2704 = vst [vmem:[#allocation3 + $0x40] sm:$0xff] %v2688
  %2705 = vst [vmem:[#allocation3 + $0x48] sm:$0xff] %v2689
  %2706 = vst [vmem:[#allocation3 + $0x50] sm:$0xff] %v2690
  %2707 = vst [vmem:[#allocation3 + $0x58] sm:$0xff] %v2691
  %2708 = vst [vmem:[#allocation3 + $0x60] sm:$0xff] %v2692
  %2709 = vst [vmem:[#allocation3 + $0x68] sm:$0xff] %v2693
  %2710 = vst [vmem:[#allocation3 + $0x70] sm:$0xff] %v2694
  %2711 = vst [vmem:[#allocation3 + $0x78] sm:$0xff] %v2695
  %s2712 = scalar_lea.vmem [#allocation2], 48
  %v2713 = vld [vmem:[%s2712] ss:$2 sm:$0xff]
  %s2714 = scalar_lea.vmem %s2712, 48 [#allocation2]
  %v2715 = vld [vmem:[%s2714] ss:$2 sm:$0xff]
  %s2716 = scalar_lea.vmem %s2712, 96 [#allocation2]
  %v2717 = vld [vmem:[%s2716] ss:$2 sm:$0xff]
  %s2718 = scalar_lea.vmem %s2712, 144 [#allocation2]
  %v2719 = vld [vmem:[%s2718] ss:$2 sm:$0xff]
  %s2720 = scalar_lea.vmem %s2712, 192 [#allocation2]
  %v2721 = vld [vmem:[%s2720] ss:$2 sm:$0xff]
  %s2722 = scalar_lea.vmem %s2712, 240 [#allocation2]
  %v2723 = vld [vmem:[%s2722] ss:$2 sm:$0xff]
  %s2724 = scalar_lea.vmem %s2712, 288 [#allocation2]
  %v2725 = vld [vmem:[%s2724] ss:$2 sm:$0xff]
  %s2726 = scalar_lea.vmem %s2712, 336 [#allocation2]
  %v2727 = vld [vmem:[%s2726] ss:$2 sm:$0xff]
  %s2728 = scalar_lea.vmem %s2712, 432 [#allocation2]
  %v2729 = vld [vmem:[%s2728] ss:$2 sm:$0xff]
  %s2730 = scalar_lea.vmem %s2712, 480 [#allocation2]
  %v2731 = vld [vmem:[%s2730] ss:$2 sm:$0xff]
  %s2732 = scalar_lea.vmem %s2712, 528 [#allocation2]
  %v2733 = vld [vmem:[%s2732] ss:$2 sm:$0xff]
  %s2734 = scalar_lea.vmem %s2712, 576 [#allocation2]
  %v2735 = vld [vmem:[%s2734] ss:$2 sm:$0xff]
  %s2736 = scalar_lea.vmem %s2712, 624 [#allocation2]
  %v2737 = vld [vmem:[%s2736] ss:$2 sm:$0xff]
  %s2738 = scalar_lea.vmem %s2712, 672 [#allocation2]
  %v2739 = vld [vmem:[%s2738] ss:$2 sm:$0xff]
  %s2740 = scalar_lea.vmem %s2712, 720 [#allocation2]
  %v2741 = vld [vmem:[%s2740] ss:$2 sm:$0xff]
  %s2742 = scalar_lea.vmem %s2712, 768 [#allocation2]
  %v2743 = vld [vmem:[%s2742] ss:$2 sm:$0xff]
  %v2744 = vpack.c.bf16 %v2715, %v2713
  %v2745 = vpack.c.bf16 %v2719, %v2717
  %v2746 = vpack.c.bf16 %v2723, %v2721
  %v2747 = vpack.c.bf16 %v2727, %v2725
  %v2748 = vpack.c.bf16 %v2731, %v2729
  %v2749 = vpack.c.bf16 %v2735, %v2733
  %v2750 = vpack.c.bf16 %v2739, %v2737
  %v2751 = vpack.c.bf16 %v2743, %v2741
  %s2752 = scalar_lea.vmem %s4, 384
  %v2753 = vld [vmem:[%s2752] sm:$0xf]
  %v2754 = vld [vmem:[%s2752 + $0x4] sm:$0xf]
  %v2755 = vld [vmem:[%s2752 + $0x8] sm:$0xf]
  %v2756 = vld [vmem:[%s2752 + $0xc] sm:$0xf]
  %v2757 = vld [vmem:[%s2752 + $0x10] sm:$0xf]
  %v2758 = vld [vmem:[%s2752 + $0x14] sm:$0xf]
  %v2759 = vld [vmem:[%s2752 + $0x18] sm:$0xf]
  %v2760 = vld [vmem:[%s2752 + $0x1c] sm:$0xf]
  %v2761 = vld [vmem:[%s2752 + $0x20] sm:$0xf]
  %v2762 = vld [vmem:[%s2752 + $0x24] sm:$0xf]
  %v2763 = vld [vmem:[%s2752 + $0x28] sm:$0xf]
  %v2764 = vld [vmem:[%s2752 + $0x2c] sm:$0xf]
  %v2765 = vld [vmem:[%s2752 + $0x30] sm:$0xf]
  %v2766 = vld [vmem:[%s2752 + $0x34] sm:$0xf]
  %v2767 = vld [vmem:[%s2752 + $0x38] sm:$0xf]
  %v2768 = vld [vmem:[%s2752 + $0x3c] sm:$0xf]
  %v2785 = vunpack.c.l.b16 %v2753
  %v2786 = vunpack.c.l.b16 %v2754
  %v2787 = vunpack.c.l.b16 %v2755
  %v2788 = vunpack.c.l.b16 %v2756
  %v2789 = vunpack.c.l.b16 %v2757
  %v2790 = vunpack.c.l.b16 %v2758
  %v2791 = vunpack.c.l.b16 %v2759
  %v2792 = vunpack.c.l.b16 %v2760
  %v2793 = vunpack.c.l.b16 %v2761
  %v2794 = vunpack.c.l.b16 %v2762
  %v2795 = vunpack.c.l.b16 %v2763
  %v2796 = vunpack.c.l.b16 %v2764
  %v2797 = vunpack.c.l.b16 %v2765
  %v2798 = vunpack.c.l.b16 %v2766
  %v2799 = vunpack.c.l.b16 %v2767
  %v2800 = vunpack.c.l.b16 %v2768
  %v2801 = vpack.c.b16 %v2786, %v2785
  %v2802 = vpack.c.b16 %v2788, %v2787
  %v2803 = vpack.c.b16 %v2790, %v2789
  %v2804 = vpack.c.b16 %v2792, %v2791
  %v2805 = vpack.c.b16 %v2794, %v2793
  %v2806 = vpack.c.b16 %v2796, %v2795
  %v2807 = vpack.c.b16 %v2798, %v2797
  %v2808 = vpack.c.b16 %v2800, %v2799
  %2817 = vmatprep.subr.bf16.mxu0 0
  %2818 = vmatpush1.bf16.msra.mxu0 %v2801
  %2819 = vmatprep.subr.bf16.mxu0 0
  %2820 = vmatpush1.bf16.msra.mxu0 %v2802
  %2821 = vmatprep.subr.bf16.mxu0 0
  %2822 = vmatpush1.bf16.msra.mxu0 %v2803
  %2823 = vmatprep.subr.bf16.mxu0 0
  %2824 = vmatpush1.bf16.msra.mxu0 %v2804
  %2825 = vmatprep.subr.bf16.mxu0 0
  %2826 = vmatpush1.bf16.msra.mxu0 %v2805
  %2827 = vmatprep.subr.bf16.mxu0 0
  %2828 = vmatpush1.bf16.msra.mxu0 %v2806
  %2829 = vmatprep.subr.bf16.mxu0 0
  %2830 = vmatpush1.bf16.msra.mxu0 %v2807
  %2831 = vmatprep.subr.bf16.mxu0 0
  %2832 = vmatpush1.bf16.msra.mxu0 %v2808
  %2833 = vmatprep.subr.bf16.mxu0 0
  %2834 = vmatpush1.bf16.msra.mxu0 0
  %2835 = vmatprep.subr.bf16.mxu0 0
  %2836 = vmatpush1.bf16.msra.mxu0 0
  %2837 = vmatprep.subr.bf16.mxu0 0
  %2838 = vmatpush1.bf16.msra.mxu0 0
  %2839 = vmatprep.subr.bf16.mxu0 0
  %2840 = vmatpush1.bf16.msra.mxu0 0
  %2841 = vmatprep.subr.bf16.mxu0 0
  %2842 = vmatpush1.bf16.msra.mxu0 0
  %2843 = vmatprep.subr.bf16.mxu0 0
  %2844 = vmatpush1.bf16.msra.mxu0 0
  %2845 = vmatprep.subr.bf16.mxu0 0
  %2846 = vmatpush1.bf16.msra.mxu0 0
  %2847 = vmatprep.subr.bf16.mxu0 0
  %2848 = vmatpush1.bf16.msra.mxu0 0
  %2849 = vmatprep.mubr.bf16.mxu0 0
  %2850 = vmatmul.mubr.bf16.gmra.mrb[0].mxu0 %v2744
  %v2851 = vpop.f32.mrb[0].mxu0
  %v2852 = vadd.f32 0.0, %v2851
  %v2853 = vpop.f32.mrb[0].mxu0
  %v2854 = vpop.f32.mrb[0].mxu0
  %v2855 = vadd.f32 0.0, %v2854
  %v2856 = vpop.f32.mrb[0].mxu0
  %2857 = vmatprep.mubr.bf16.mxu0 0
  %2858 = vmatmul.mubr.bf16.gmra.mrb[0].mxu0 %v2745
  %v2859 = vpop.f32.mrb[0].mxu0
  %v2860 = vadd.f32 0.0, %v2859
  %v2861 = vpop.f32.mrb[0].mxu0
  %v2862 = vpop.f32.mrb[0].mxu0
  %v2863 = vadd.f32 0.0, %v2862
  %v2864 = vpop.f32.mrb[0].mxu0
  %2865 = vmatprep.mubr.bf16.mxu0 0
  %2866 = vmatmul.mubr.bf16.gmra.mrb[0].mxu0 %v2746
  %v2867 = vpop.f32.mrb[0].mxu0
  %v2868 = vadd.f32 0.0, %v2867
  %v2869 = vpop.f32.mrb[0].mxu0
  %v2870 = vpop.f32.mrb[0].mxu0
  %v2871 = vadd.f32 0.0, %v2870
  %v2872 = vpop.f32.mrb[0].mxu0
  %2873 = vmatprep.mubr.bf16.mxu0 0
  %2874 = vmatmul.mubr.bf16.gmra.mrb[0].mxu0 %v2747
  %v2875 = vpop.f32.mrb[0].mxu0
  %v2876 = vadd.f32 0.0, %v2875
  %v2877 = vpop.f32.mrb[0].mxu0
  %v2878 = vpop.f32.mrb[0].mxu0
  %v2879 = vadd.f32 0.0, %v2878
  %v2880 = vpop.f32.mrb[0].mxu0
  %2881 = vmatprep.mubr.bf16.mxu0 0
  %2882 = vmatmul.mubr.bf16.gmra.mrb[0].mxu0 %v2748
  %v2883 = vpop.f32.mrb[0].mxu0
  %v2884 = vadd.f32 0.0, %v2883
  %v2885 = vpop.f32.mrb[0].mxu0
  %v2886 = vpop.f32.mrb[0].mxu0
  %v2887 = vadd.f32 0.0, %v2886
  %v2888 = vpop.f32.mrb[0].mxu0
  %2889 = vmatprep.mubr.bf16.mxu0 0
  %2890 = vmatmul.mubr.bf16.gmra.mrb[0].mxu0 %v2749
  %v2891 = vpop.f32.mrb[0].mxu0
  %v2892 = vadd.f32 0.0, %v2891
  %v2893 = vpop.f32.mrb[0].mxu0
  %v2894 = vpop.f32.mrb[0].mxu0
  %v2895 = vadd.f32 0.0, %v2894
  %v2896 = vpop.f32.mrb[0].mxu0
  %2897 = vmatprep.mubr.bf16.mxu0 0
  %2898 = vmatmul.mubr.bf16.gmra.mrb[0].mxu0 %v2750
  %v2899 = vpop.f32.mrb[0].mxu0
  %v2900 = vadd.f32 0.0, %v2899
  %v2901 = vpop.f32.mrb[0].mxu0
  %v2902 = vpop.f32.mrb[0].mxu0
  %v2903 = vadd.f32 0.0, %v2902
  %v2904 = vpop.f32.mrb[0].mxu0
  %2905 = vmatprep.mubr.bf16.mxu0 0
  %2906 = vmatmul.mubr.bf16.gmra.mrb[0].mxu0 %v2751
  %v2907 = vpop.f32.mrb[0].mxu0
  %v2908 = vadd.f32 0.0, %v2907
  %v2909 = vpop.f32.mrb[0].mxu0
  %v2910 = vpop.f32.mrb[0].mxu0
  %v2911 = vadd.f32 0.0, %v2910
  %v2912 = vpop.f32.mrb[0].mxu0
  %2913 = vdwg.mxu0
  %v2914 = vld [vmem:[#allocation3] sm:$0xff]
  %v2915 = vld [vmem:[#allocation3 + $0x8] sm:$0xff]
  %v2916 = vld [vmem:[#allocation3 + $0x10] sm:$0xff]
  %v2917 = vld [vmem:[#allocation3 + $0x18] sm:$0xff]
  %v2918 = vld [vmem:[#allocation3 + $0x20] sm:$0xff]
  %v2919 = vld [vmem:[#allocation3 + $0x28] sm:$0xff]
  %v2920 = vld [vmem:[#allocation3 + $0x30] sm:$0xff]
  %v2921 = vld [vmem:[#allocation3 + $0x38] sm:$0xff]
  %v2922 = vld [vmem:[#allocation3 + $0x40] sm:$0xff]
  %v2923 = vld [vmem:[#allocation3 + $0x48] sm:$0xff]
  %v2924 = vld [vmem:[#allocation3 + $0x50] sm:$0xff]
  %v2925 = vld [vmem:[#allocation3 + $0x58] sm:$0xff]
  %v2926 = vld [vmem:[#allocation3 + $0x60] sm:$0xff]
  %v2927 = vld [vmem:[#allocation3 + $0x68] sm:$0xff]
  %v2928 = vld [vmem:[#allocation3 + $0x70] sm:$0xff]
  %v2929 = vld [vmem:[#allocation3 + $0x78] sm:$0xff]
  %v2930 = vadd.f32 %v2914, %v2852
  %v2931 = vadd.f32 %v2915, %v2855
  %v2932 = vadd.f32 %v2916, %v2860
  %v2933 = vadd.f32 %v2917, %v2863
  %v2934 = vadd.f32 %v2918, %v2868
  %v2935 = vadd.f32 %v2919, %v2871
  %v2936 = vadd.f32 %v2920, %v2876
  %v2937 = vadd.f32 %v2921, %v2879
  %v2938 = vadd.f32 %v2922, %v2884
  %v2939 = vadd.f32 %v2923, %v2887
  %v2940 = vadd.f32 %v2924, %v2892
  %v2941 = vadd.f32 %v2925, %v2895
  %v2942 = vadd.f32 %v2926, %v2900
  %v2943 = vadd.f32 %v2927, %v2903
  %v2944 = vadd.f32 %v2928, %v2908
  %v2945 = vadd.f32 %v2929, %v2911
  %2946 = vst [vmem:[#allocation3] sm:$0xff] %v2930
  %2947 = vst [vmem:[#allocation3 + $0x8] sm:$0xff] %v2931
  %2948 = vst [vmem:[#allocation3 + $0x10] sm:$0xff] %v2932
  %2949 = vst [vmem:[#allocation3 + $0x18] sm:$0xff] %v2933
  %2950 = vst [vmem:[#allocation3 + $0x20] sm:$0xff] %v2934
  %2951 = vst [vmem:[#allocation3 + $0x28] sm:$0xff] %v2935
  %2952 = vst [vmem:[#allocation3 + $0x30] sm:$0xff] %v2936
  %2953 = vst [vmem:[#allocation3 + $0x38] sm:$0xff] %v2937
  %2954 = vst [vmem:[#allocation3 + $0x40] sm:$0xff] %v2938
  %2955 = vst [vmem:[#allocation3 + $0x48] sm:$0xff] %v2939
  %2956 = vst [vmem:[#allocation3 + $0x50] sm:$0xff] %v2940
  %2957 = vst [vmem:[#allocation3 + $0x58] sm:$0xff] %v2941
  %2958 = vst [vmem:[#allocation3 + $0x60] sm:$0xff] %v2942
  %2959 = vst [vmem:[#allocation3 + $0x68] sm:$0xff] %v2943
  %2960 = vst [vmem:[#allocation3 + $0x70] sm:$0xff] %v2944
  %2961 = vst [vmem:[#allocation3 + $0x78] sm:$0xff] %v2945
  %s2962 = scalar_lea.vmem %s2712, 1 [#allocation2]
  %v2963 = vld [vmem:[%s2962] ss:$2 sm:$0xff]
  %s2964 = scalar_lea.vmem %s2712, 49 [#allocation2]
  %v2965 = vld [vmem:[%s2964] ss:$2 sm:$0xff]
  %s2966 = scalar_lea.vmem %s2712, 97 [#allocation2]
  %v2967 = vld [vmem:[%s2966] ss:$2 sm:$0xff]
  %s2968 = scalar_lea.vmem %s2712, 145 [#allocation2]
  %v2969 = vld [vmem:[%s2968] ss:$2 sm:$0xff]
  %s2970 = scalar_lea.vmem %s2712, 193 [#allocation2]
  %v2971 = vld [vmem:[%s2970] ss:$2 sm:$0xff]
  %s2972 = scalar_lea.vmem %s2712, 241 [#allocation2]
  %v2973 = vld [vmem:[%s2972] ss:$2 sm:$0xff]
  %s2974 = scalar_lea.vmem %s2712, 289 [#allocation2]
  %v2975 = vld [vmem:[%s2974] ss:$2 sm:$0xff]
  %s2976 = scalar_lea.vmem %s2712, 337 [#allocation2]
  %v2977 = vld [vmem:[%s2976] ss:$2 sm:$0xff]
  %s2978 = scalar_lea.vmem %s2712, 433 [#allocation2]
  %v2979 = vld [vmem:[%s2978] ss:$2 sm:$0xff]
  %s2980 = scalar_lea.vmem %s2712, 481 [#allocation2]
  %v2981 = vld [vmem:[%s2980] ss:$2 sm:$0xff]
  %s2982 = scalar_lea.vmem %s2712, 529 [#allocation2]
  %v2983 = vld [vmem:[%s2982] ss:$2 sm:$0xff]
  %s2984 = scalar_lea.vmem %s2712, 577 [#allocation2]
  %v2985 = vld [vmem:[%s2984] ss:$2 sm:$0xff]
  %s2986 = scalar_lea.vmem %s2712, 625 [#allocation2]
  %v2987 = vld [vmem:[%s2986] ss:$2 sm:$0xff]
  %s2988 = scalar_lea.vmem %s2712, 673 [#allocation2]
  %v2989 = vld [vmem:[%s2988] ss:$2 sm:$0xff]
  %s2990 = scalar_lea.vmem %s2712, 721 [#allocation2]
  %v2991 = vld [vmem:[%s2990] ss:$2 sm:$0xff]
  %s2992 = scalar_lea.vmem %s2712, 769 [#allocation2]
  %v2993 = vld [vmem:[%s2992] ss:$2 sm:$0xff]
  %v2994 = vpack.c.bf16 %v2965, %v2963
  %v2995 = vpack.c.bf16 %v2969, %v2967
  %v2996 = vpack.c.bf16 %v2973, %v2971
  %v2997 = vpack.c.bf16 %v2977, %v2975
  %v2998 = vpack.c.bf16 %v2981, %v2979
  %v2999 = vpack.c.bf16 %v2985, %v2983
  %v3000 = vpack.c.bf16 %v2989, %v2987
  %v3001 = vpack.c.bf16 %v2993, %v2991
  %s3002 = scalar_lea.vmem %s4, 448
  %v3003 = vld [vmem:[%s3002] sm:$0xf]
  %v3004 = vld [vmem:[%s3002 + $0x4] sm:$0xf]
  %v3005 = vld [vmem:[%s3002 + $0x8] sm:$0xf]
  %v3006 = vld [vmem:[%s3002 + $0xc] sm:$0xf]
  %v3007 = vld [vmem:[%s3002 + $0x10] sm:$0xf]
  %v3008 = vld [vmem:[%s3002 + $0x14] sm:$0xf]
  %v3009 = vld [vmem:[%s3002 + $0x18] sm:$0xf]
  %v3010 = vld [vmem:[%s3002 + $0x1c] sm:$0xf]
  %v3011 = vld [vmem:[%s3002 + $0x20] sm:$0xf]
  %v3012 = vld [vmem:[%s3002 + $0x24] sm:$0xf]
  %v3013 = vld [vmem:[%s3002 + $0x28] sm:$0xf]
  %v3014 = vld [vmem:[%s3002 + $0x2c] sm:$0xf]
  %v3015 = vld [vmem:[%s3002 + $0x30] sm:$0xf]
  %v3016 = vld [vmem:[%s3002 + $0x34] sm:$0xf]
  %v3017 = vld [vmem:[%s3002 + $0x38] sm:$0xf]
  %v3018 = vld [vmem:[%s3002 + $0x3c] sm:$0xf]
  %v3035 = vunpack.c.l.b16 %v3003
  %v3036 = vunpack.c.l.b16 %v3004
  %v3037 = vunpack.c.l.b16 %v3005
  %v3038 = vunpack.c.l.b16 %v3006
  %v3039 = vunpack.c.l.b16 %v3007
  %v3040 = vunpack.c.l.b16 %v3008
  %v3041 = vunpack.c.l.b16 %v3009
  %v3042 = vunpack.c.l.b16 %v3010
  %v3043 = vunpack.c.l.b16 %v3011
  %v3044 = vunpack.c.l.b16 %v3012
  %v3045 = vunpack.c.l.b16 %v3013
  %v3046 = vunpack.c.l.b16 %v3014
  %v3047 = vunpack.c.l.b16 %v3015
  %v3048 = vunpack.c.l.b16 %v3016
  %v3049 = vunpack.c.l.b16 %v3017
  %v3050 = vunpack.c.l.b16 %v3018
  %v3051 = vpack.c.b16 %v3036, %v3035
  %v3052 = vpack.c.b16 %v3038, %v3037
  %v3053 = vpack.c.b16 %v3040, %v3039
  %v3054 = vpack.c.b16 %v3042, %v3041
  %v3055 = vpack.c.b16 %v3044, %v3043
  %v3056 = vpack.c.b16 %v3046, %v3045
  %v3057 = vpack.c.b16 %v3048, %v3047
  %v3058 = vpack.c.b16 %v3050, %v3049
  %3067 = vmatprep.subr.bf16.mxu0 0
  %3068 = vmatpush1.bf16.msra.mxu0 %v3051
  %3069 = vmatprep.subr.bf16.mxu0 0
  %3070 = vmatpush1.bf16.msra.mxu0 %v3052
  %3071 = vmatprep.subr.bf16.mxu0 0
  %3072 = vmatpush1.bf16.msra.mxu0 %v3053
  %3073 = vmatprep.subr.bf16.mxu0 0
  %3074 = vmatpush1.bf16.msra.mxu0 %v3054
  %3075 = vmatprep.subr.bf16.mxu0 0
  %3076 = vmatpush1.bf16.msra.mxu0 %v3055
  %3077 = vmatprep.subr.bf16.mxu0 0
  %3078 = vmatpush1.bf16.msra.mxu0 %v3056
  %3079 = vmatprep.subr.bf16.mxu0 0
  %3080 = vmatpush1.bf16.msra.mxu0 %v3057
  %3081 = vmatprep.subr.bf16.mxu0 0
  %3082 = vmatpush1.bf16.msra.mxu0 %v3058
  %3083 = vmatprep.subr.bf16.mxu0 0
  %3084 = vmatpush1.bf16.msra.mxu0 0
  %3085 = vmatprep.subr.bf16.mxu0 0
  %3086 = vmatpush1.bf16.msra.mxu0 0
  %3087 = vmatprep.subr.bf16.mxu0 0
  %3088 = vmatpush1.bf16.msra.mxu0 0
  %3089 = vmatprep.subr.bf16.mxu0 0
  %3090 = vmatpush1.bf16.msra.mxu0 0
  %3091 = vmatprep.subr.bf16.mxu0 0
  %3092 = vmatpush1.bf16.msra.mxu0 0
  %3093 = vmatprep.subr.bf16.mxu0 0
  %3094 = vmatpush1.bf16.msra.mxu0 0
  %3095 = vmatprep.subr.bf16.mxu0 0
  %3096 = vmatpush1.bf16.msra.mxu0 0
  %3097 = vmatprep.subr.bf16.mxu0 0
  %3098 = vmatpush1.bf16.msra.mxu0 0
  %3099 = vmatprep.mubr.bf16.mxu0 0
  %3100 = vmatmul.mubr.bf16.gmra.mrb[0].mxu0 %v2994
  %v3101 = vpop.f32.mrb[0].mxu0
  %v3102 = vadd.f32 0.0, %v3101
  %v3103 = vpop.f32.mrb[0].mxu0
  %v3104 = vpop.f32.mrb[0].mxu0
  %v3105 = vadd.f32 0.0, %v3104
  %v3106 = vpop.f32.mrb[0].mxu0
  %3107 = vmatprep.mubr.bf16.mxu0 0
  %3108 = vmatmul.mubr.bf16.gmra.mrb[0].mxu0 %v2995
  %v3109 = vpop.f32.mrb[0].mxu0
  %v3110 = vadd.f32 0.0, %v3109
  %v3111 = vpop.f32.mrb[0].mxu0
  %v3112 = vpop.f32.mrb[0].mxu0
  %v3113 = vadd.f32 0.0, %v3112
  %v3114 = vpop.f32.mrb[0].mxu0
  %3115 = vmatprep.mubr.bf16.mxu0 0
  %3116 = vmatmul.mubr.bf16.gmra.mrb[0].mxu0 %v2996
  %v3117 = vpop.f32.mrb[0].mxu0
  %v3118 = vadd.f32 0.0, %v3117
  %v3119 = vpop.f32.mrb[0].mxu0
  %v3120 = vpop.f32.mrb[0].mxu0
  %v3121 = vadd.f32 0.0, %v3120
  %v3122 = vpop.f32.mrb[0].mxu0
  %3123 = vmatprep.mubr.bf16.mxu0 0
  %3124 = vmatmul.mubr.bf16.gmra.mrb[0].mxu0 %v2997
  %v3125 = vpop.f32.mrb[0].mxu0
  %v3126 = vadd.f32 0.0, %v3125
  %v3127 = vpop.f32.mrb[0].mxu0
  %v3128 = vpop.f32.mrb[0].mxu0
  %v3129 = vadd.f32 0.0, %v3128
  %v3130 = vpop.f32.mrb[0].mxu0
  %3131 = vmatprep.mubr.bf16.mxu0 0
  %3132 = vmatmul.mubr.bf16.gmra.mrb[0].mxu0 %v2998
  %v3133 = vpop.f32.mrb[0].mxu0
  %v3134 = vadd.f32 0.0, %v3133
  %v3135 = vpop.f32.mrb[0].mxu0
  %v3136 = vpop.f32.mrb[0].mxu0
  %v3137 = vadd.f32 0.0, %v3136
  %v3138 = vpop.f32.mrb[0].mxu0
  %3139 = vmatprep.mubr.bf16.mxu0 0
  %3140 = vmatmul.mubr.bf16.gmra.mrb[0].mxu0 %v2999
  %v3141 = vpop.f32.mrb[0].mxu0
  %v3142 = vadd.f32 0.0, %v3141
  %v3143 = vpop.f32.mrb[0].mxu0
  %v3144 = vpop.f32.mrb[0].mxu0
  %v3145 = vadd.f32 0.0, %v3144
  %v3146 = vpop.f32.mrb[0].mxu0
  %3147 = vmatprep.mubr.bf16.mxu0 0
  %3148 = vmatmul.mubr.bf16.gmra.mrb[0].mxu0 %v3000
  %v3149 = vpop.f32.mrb[0].mxu0
  %v3150 = vadd.f32 0.0, %v3149
  %v3151 = vpop.f32.mrb[0].mxu0
  %v3152 = vpop.f32.mrb[0].mxu0
  %v3153 = vadd.f32 0.0, %v3152
  %v3154 = vpop.f32.mrb[0].mxu0
  %3155 = vmatprep.mubr.bf16.mxu0 0
  %3156 = vmatmul.mubr.bf16.gmra.mrb[0].mxu0 %v3001
  %v3157 = vpop.f32.mrb[0].mxu0
  %v3158 = vadd.f32 0.0, %v3157
  %v3159 = vpop.f32.mrb[0].mxu0
  %v3160 = vpop.f32.mrb[0].mxu0
  %v3161 = vadd.f32 0.0, %v3160
  %v3162 = vpop.f32.mrb[0].mxu0
  %3163 = vdwg.mxu0
  %v3164 = vld [vmem:[#allocation3] sm:$0xff]
  %v3165 = vld [vmem:[#allocation3 + $0x8] sm:$0xff]
  %v3166 = vld [vmem:[#allocation3 + $0x10] sm:$0xff]
  %v3167 = vld [vmem:[#allocation3 + $0x18] sm:$0xff]
  %v3168 = vld [vmem:[#allocation3 + $0x20] sm:$0xff]
  %v3169 = vld [vmem:[#allocation3 + $0x28] sm:$0xff]
  %v3170 = vld [vmem:[#allocation3 + $0x30] sm:$0xff]
  %v3171 = vld [vmem:[#allocation3 + $0x38] sm:$0xff]
  %v3172 = vld [vmem:[#allocation3 + $0x40] sm:$0xff]
  %v3173 = vld [vmem:[#allocation3 + $0x48] sm:$0xff]
  %v3174 = vld [vmem:[#allocation3 + $0x50] sm:$0xff]
  %v3175 = vld [vmem:[#allocation3 + $0x58] sm:$0xff]
  %v3176 = vld [vmem:[#allocation3 + $0x60] sm:$0xff]
  %v3177 = vld [vmem:[#allocation3 + $0x68] sm:$0xff]
  %v3178 = vld [vmem:[#allocation3 + $0x70] sm:$0xff]
  %v3179 = vld [vmem:[#allocation3 + $0x78] sm:$0xff]
  %v3180 = vadd.f32 %v3164, %v3102
  %v3181 = vadd.f32 %v3165, %v3105
  %v3182 = vadd.f32 %v3166, %v3110
  %v3183 = vadd.f32 %v3167, %v3113
  %v3184 = vadd.f32 %v3168, %v3118
  %v3185 = vadd.f32 %v3169, %v3121
  %v3186 = vadd.f32 %v3170, %v3126
  %v3187 = vadd.f32 %v3171, %v3129
  %v3188 = vadd.f32 %v3172, %v3134
  %v3189 = vadd.f32 %v3173, %v3137
  %v3190 = vadd.f32 %v3174, %v3142
  %v3191 = vadd.f32 %v3175, %v3145
  %v3192 = vadd.f32 %v3176, %v3150
  %v3193 = vadd.f32 %v3177, %v3153
  %v3194 = vadd.f32 %v3178, %v3158
  %v3195 = vadd.f32 %v3179, %v3161
  %3196 = vst [vmem:[#allocation3] sm:$0xff] %v3180
  %3197 = vst [vmem:[#allocation3 + $0x8] sm:$0xff] %v3181
  %3198 = vst [vmem:[#allocation3 + $0x10] sm:$0xff] %v3182
  %3199 = vst [vmem:[#allocation3 + $0x18] sm:$0xff] %v3183
  %3200 = vst [vmem:[#allocation3 + $0x20] sm:$0xff] %v3184
  %3201 = vst [vmem:[#allocation3 + $0x28] sm:$0xff] %v3185
  %3202 = vst [vmem:[#allocation3 + $0x30] sm:$0xff] %v3186
  %3203 = vst [vmem:[#allocation3 + $0x38] sm:$0xff] %v3187
  %3204 = vst [vmem:[#allocation3 + $0x40] sm:$0xff] %v3188
  %3205 = vst [vmem:[#allocation3 + $0x48] sm:$0xff] %v3189
  %3206 = vst [vmem:[#allocation3 + $0x50] sm:$0xff] %v3190
  %3207 = vst [vmem:[#allocation3 + $0x58] sm:$0xff] %v3191
  %3208 = vst [vmem:[#allocation3 + $0x60] sm:$0xff] %v3192
  %3209 = vst [vmem:[#allocation3 + $0x68] sm:$0xff] %v3193
  %3210 = vst [vmem:[#allocation3 + $0x70] sm:$0xff] %v3194
  %3211 = vst [vmem:[#allocation3 + $0x78] sm:$0xff] %v3195
  %s3212 = scalar_lea.vmem %s2712, 2 [#allocation2]
  %v3213 = vld [vmem:[%s3212] ss:$2 sm:$0xff]
  %s3214 = scalar_lea.vmem %s2712, 50 [#allocation2]
  %v3215 = vld [vmem:[%s3214] ss:$2 sm:$0xff]
  %s3216 = scalar_lea.vmem %s2712, 98 [#allocation2]
  %v3217 = vld [vmem:[%s3216] ss:$2 sm:$0xff]
  %s3218 = scalar_lea.vmem %s2712, 146 [#allocation2]
  %v3219 = vld [vmem:[%s3218] ss:$2 sm:$0xff]
  %s3220 = scalar_lea.vmem %s2712, 194 [#allocation2]
  %v3221 = vld [vmem:[%s3220] ss:$2 sm:$0xff]
  %s3222 = scalar_lea.vmem %s2712, 242 [#allocation2]
  %v3223 = vld [vmem:[%s3222] ss:$2 sm:$0xff]
  %s3224 = scalar_lea.vmem %s2712, 290 [#allocation2]
  %v3225 = vld [vmem:[%s3224] ss:$2 sm:$0xff]
  %s3226 = scalar_lea.vmem %s2712, 338 [#allocation2]
  %v3227 = vld [vmem:[%s3226] ss:$2 sm:$0xff]
  %s3228 = scalar_lea.vmem %s2712, 434 [#allocation2]
  %v3229 = vld [vmem:[%s3228] ss:$2 sm:$0xff]
  %s3230 = scalar_lea.vmem %s2712, 482 [#allocation2]
  %v3231 = vld [vmem:[%s3230] ss:$2 sm:$0xff]
  %s3232 = scalar_lea.vmem %s2712, 530 [#allocation2]
  %v3233 = vld [vmem:[%s3232] ss:$2 sm:$0xff]
  %s3234 = scalar_lea.vmem %s2712, 578 [#allocation2]
  %v3235 = vld [vmem:[%s3234] ss:$2 sm:$0xff]
  %s3236 = scalar_lea.vmem %s2712, 626 [#allocation2]
  %v3237 = vld [vmem:[%s3236] ss:$2 sm:$0xff]
  %s3238 = scalar_lea.vmem %s2712, 674 [#allocation2]
  %v3239 = vld [vmem:[%s3238] ss:$2 sm:$0xff]
  %s3240 = scalar_lea.vmem %s2712, 722 [#allocation2]
  %v3241 = vld [vmem:[%s3240] ss:$2 sm:$0xff]
  %s3242 = scalar_lea.vmem %s2712, 770 [#allocation2]
  %v3243 = vld [vmem:[%s3242] ss:$2 sm:$0xff]
  %v3244 = vpack.c.bf16 %v3215, %v3213
  %v3245 = vpack.c.bf16 %v3219, %v3217
  %v3246 = vpack.c.bf16 %v3223, %v3221
  %v3247 = vpack.c.bf16 %v3227, %v3225
  %v3248 = vpack.c.bf16 %v3231, %v3229
  %v3249 = vpack.c.bf16 %v3235, %v3233
  %v3250 = vpack.c.bf16 %v3239, %v3237
  %v3251 = vpack.c.bf16 %v3243, %v3241
  %s3252 = scalar_lea.vmem %s4, 512
  %v3253 = vld [vmem:[%s3252] sm:$0xf]
  %v3254 = vld [vmem:[%s3252 + $0x4] sm:$0xf]
  %v3255 = vld [vmem:[%s3252 + $0x8] sm:$0xf]
  %v3256 = vld [vmem:[%s3252 + $0xc] sm:$0xf]
  %v3257 = vld [vmem:[%s3252 + $0x10] sm:$0xf]
  %v3258 = vld [vmem:[%s3252 + $0x14] sm:$0xf]
  %v3259 = vld [vmem:[%s3252 + $0x18] sm:$0xf]
  %v3260 = vld [vmem:[%s3252 + $0x1c] sm:$0xf]
  %v3261 = vld [vmem:[%s3252 + $0x20] sm:$0xf]
  %v3262 = vld [vmem:[%s3252 + $0x24] sm:$0xf]
  %v3263 = vld [vmem:[%s3252 + $0x28] sm:$0xf]
  %v3264 = vld [vmem:[%s3252 + $0x2c] sm:$0xf]
  %v3265 = vld [vmem:[%s3252 + $0x30] sm:$0xf]
  %v3266 = vld [vmem:[%s3252 + $0x34] sm:$0xf]
  %v3267 = vld [vmem:[%s3252 + $0x38] sm:$0xf]
  %v3268 = vld [vmem:[%s3252 + $0x3c] sm:$0xf]
  %v3285 = vunpack.c.l.b16 %v3253
  %v3286 = vunpack.c.l.b16 %v3254
  %v3287 = vunpack.c.l.b16 %v3255
  %v3288 = vunpack.c.l.b16 %v3256
  %v3289 = vunpack.c.l.b16 %v3257
  %v3290 = vunpack.c.l.b16 %v3258
  %v3291 = vunpack.c.l.b16 %v3259
  %v3292 = vunpack.c.l.b16 %v3260
  %v3293 = vunpack.c.l.b16 %v3261
  %v3294 = vunpack.c.l.b16 %v3262
  %v3295 = vunpack.c.l.b16 %v3263
  %v3296 = vunpack.c.l.b16 %v3264
  %v3297 = vunpack.c.l.b16 %v3265
  %v3298 = vunpack.c.l.b16 %v3266
  %v3299 = vunpack.c.l.b16 %v3267
  %v3300 = vunpack.c.l.b16 %v3268
  %v3301 = vpack.c.b16 %v3286, %v3285
  %v3302 = vpack.c.b16 %v3288, %v3287
  %v3303 = vpack.c.b16 %v3290, %v3289
  %v3304 = vpack.c.b16 %v3292, %v3291
  %v3305 = vpack.c.b16 %v3294, %v3293
  %v3306 = vpack.c.b16 %v3296, %v3295
  %v3307 = vpack.c.b16 %v3298, %v3297
  %v3308 = vpack.c.b16 %v3300, %v3299
  %3317 = vmatprep.subr.bf16.mxu0 0
  %3318 = vmatpush1.bf16.msra.mxu0 %v3301
  %3319 = vmatprep.subr.bf16.mxu0 0
  %3320 = vmatpush1.bf16.msra.mxu0 %v3302
  %3321 = vmatprep.subr.bf16.mxu0 0
  %3322 = vmatpush1.bf16.msra.mxu0 %v3303
  %3323 = vmatprep.subr.bf16.mxu0 0
  %3324 = vmatpush1.bf16.msra.mxu0 %v3304
  %3325 = vmatprep.subr.bf16.mxu0 0
  %3326 = vmatpush1.bf16.msra.mxu0 %v3305
  %3327 = vmatprep.subr.bf16.mxu0 0
  %3328 = vmatpush1.bf16.msra.mxu0 %v3306
  %3329 = vmatprep.subr.bf16.mxu0 0
  %3330 = vmatpush1.bf16.msra.mxu0 %v3307
  %3331 = vmatprep.subr.bf16.mxu0 0
  %3332 = vmatpush1.bf16.msra.mxu0 %v3308
  %3333 = vmatprep.subr.bf16.mxu0 0
  %3334 = vmatpush1.bf16.msra.mxu0 0
  %3335 = vmatprep.subr.bf16.mxu0 0
  %3336 = vmatpush1.bf16.msra.mxu0 0
  %3337 = vmatprep.subr.bf16.mxu0 0
  %3338 = vmatpush1.bf16.msra.mxu0 0
  %3339 = vmatprep.subr.bf16.mxu0 0
  %3340 = vmatpush1.bf16.msra.mxu0 0
  %3341 = vmatprep.subr.bf16.mxu0 0
  %3342 = vmatpush1.bf16.msra.mxu0 0
  %3343 = vmatprep.subr.bf16.mxu0 0
  %3344 = vmatpush1.bf16.msra.mxu0 0
  %3345 = vmatprep.subr.bf16.mxu0 0
  %3346 = vmatpush1.bf16.msra.mxu0 0
  %3347 = vmatprep.subr.bf16.mxu0 0
  %3348 = vmatpush1.bf16.msra.mxu0 0
  %3349 = vmatprep.mubr.bf16.mxu0 0
  %3350 = vmatmul.mubr.bf16.gmra.mrb[0].mxu0 %v3244
  %v3351 = vpop.f32.mrb[0].mxu0
  %v3352 = vadd.f32 0.0, %v3351
  %v3353 = vpop.f32.mrb[0].mxu0
  %v3354 = vpop.f32.mrb[0].mxu0
  %v3355 = vadd.f32 0.0, %v3354
  %v3356 = vpop.f32.mrb[0].mxu0
  %3357 = vmatprep.mubr.bf16.mxu0 0
  %3358 = vmatmul.mubr.bf16.gmra.mrb[0].mxu0 %v3245
  %v3359 = vpop.f32.mrb[0].mxu0
  %v3360 = vadd.f32 0.0, %v3359
  %v3361 = vpop.f32.mrb[0].mxu0
  %v3362 = vpop.f32.mrb[0].mxu0
  %v3363 = vadd.f32 0.0, %v3362
  %v3364 = vpop.f32.mrb[0].mxu0
  %3365 = vmatprep.mubr.bf16.mxu0 0
  %3366 = vmatmul.mubr.bf16.gmra.mrb[0].mxu0 %v3246
  %v3367 = vpop.f32.mrb[0].mxu0
  %v3368 = vadd.f32 0.0, %v3367
  %v3369 = vpop.f32.mrb[0].mxu0
  %v3370 = vpop.f32.mrb[0].mxu0
  %v3371 = vadd.f32 0.0, %v3370
  %v3372 = vpop.f32.mrb[0].mxu0
  %3373 = vmatprep.mubr.bf16.mxu0 0
  %3374 = vmatmul.mubr.bf16.gmra.mrb[0].mxu0 %v3247
  %v3375 = vpop.f32.mrb[0].mxu0
  %v3376 = vadd.f32 0.0, %v3375
  %v3377 = vpop.f32.mrb[0].mxu0
  %v3378 = vpop.f32.mrb[0].mxu0
  %v3379 = vadd.f32 0.0, %v3378
  %v3380 = vpop.f32.mrb[0].mxu0
  %3381 = vmatprep.mubr.bf16.mxu0 0
  %3382 = vmatmul.mubr.bf16.gmra.mrb[0].mxu0 %v3248
  %v3383 = vpop.f32.mrb[0].mxu0
  %v3384 = vadd.f32 0.0, %v3383
  %v3385 = vpop.f32.mrb[0].mxu0
  %v3386 = vpop.f32.mrb[0].mxu0
  %v3387 = vadd.f32 0.0, %v3386
  %v3388 = vpop.f32.mrb[0].mxu0
  %3389 = vmatprep.mubr.bf16.mxu0 0
  %3390 = vmatmul.mubr.bf16.gmra.mrb[0].mxu0 %v3249
  %v3391 = vpop.f32.mrb[0].mxu0
  %v3392 = vadd.f32 0.0, %v3391
  %v3393 = vpop.f32.mrb[0].mxu0
  %v3394 = vpop.f32.mrb[0].mxu0
  %v3395 = vadd.f32 0.0, %v3394
  %v3396 = vpop.f32.mrb[0].mxu0
  %3397 = vmatprep.mubr.bf16.mxu0 0
  %3398 = vmatmul.mubr.bf16.gmra.mrb[0].mxu0 %v3250
  %v3399 = vpop.f32.mrb[0].mxu0
  %v3400 = vadd.f32 0.0, %v3399
  %v3401 = vpop.f32.mrb[0].mxu0
  %v3402 = vpop.f32.mrb[0].mxu0
  %v3403 = vadd.f32 0.0, %v3402
  %v3404 = vpop.f32.mrb[0].mxu0
  %3405 = vmatprep.mubr.bf16.mxu0 0
  %3406 = vmatmul.mubr.bf16.gmra.mrb[0].mxu0 %v3251
  %v3407 = vpop.f32.mrb[0].mxu0
  %v3408 = vadd.f32 0.0, %v3407
  %v3409 = vpop.f32.mrb[0].mxu0
  %v3410 = vpop.f32.mrb[0].mxu0
  %v3411 = vadd.f32 0.0, %v3410
  %v3412 = vpop.f32.mrb[0].mxu0
  %3413 = vdwg.mxu0
  %v3414 = vld [vmem:[#allocation3] sm:$0xff]
  %v3415 = vld [vmem:[#allocation3 + $0x8] sm:$0xff]
  %v3416 = vld [vmem:[#allocation3 + $0x10] sm:$0xff]
  %v3417 = vld [vmem:[#allocation3 + $0x18] sm:$0xff]
  %v3418 = vld [vmem:[#allocation3 + $0x20] sm:$0xff]
  %v3419 = vld [vmem:[#allocation3 + $0x28] sm:$0xff]
  %v3420 = vld [vmem:[#allocation3 + $0x30] sm:$0xff]
  %v3421 = vld [vmem:[#allocation3 + $0x38] sm:$0xff]
  %v3422 = vld [vmem:[#allocation3 + $0x40] sm:$0xff]
  %v3423 = vld [vmem:[#allocation3 + $0x48] sm:$0xff]
  %v3424 = vld [vmem:[#allocation3 + $0x50] sm:$0xff]
  %v3425 = vld [vmem:[#allocation3 + $0x58] sm:$0xff]
  %v3426 = vld [vmem:[#allocation3 + $0x60] sm:$0xff]
  %v3427 = vld [vmem:[#allocation3 + $0x68] sm:$0xff]
  %v3428 = vld [vmem:[#allocation3 + $0x70] sm:$0xff]
  %v3429 = vld [vmem:[#allocation3 + $0x78] sm:$0xff]
  %v3430 = vadd.f32 %v3414, %v3352
  %v3431 = vadd.f32 %v3415, %v3355
  %v3432 = vadd.f32 %v3416, %v3360
  %v3433 = vadd.f32 %v3417, %v3363
  %v3434 = vadd.f32 %v3418, %v3368
  %v3435 = vadd.f32 %v3419, %v3371
  %v3436 = vadd.f32 %v3420, %v3376
  %v3437 = vadd.f32 %v3421, %v3379
  %v3438 = vadd.f32 %v3422, %v3384
  %v3439 = vadd.f32 %v3423, %v3387
  %v3440 = vadd.f32 %v3424, %v3392
  %v3441 = vadd.f32 %v3425, %v3395
  %v3442 = vadd.f32 %v3426, %v3400
  %v3443 = vadd.f32 %v3427, %v3403
  %v3444 = vadd.f32 %v3428, %v3408
  %v3445 = vadd.f32 %v3429, %v3411
  %3446 = vst [vmem:[#allocation3] sm:$0xff] %v3430
  %3447 = vst [vmem:[#allocation3 + $0x8] sm:$0xff] %v3431
  %3448 = vst [vmem:[#allocation3 + $0x10] sm:$0xff] %v3432
  %3449 = vst [vmem:[#allocation3 + $0x18] sm:$0xff] %v3433
  %3450 = vst [vmem:[#allocation3 + $0x20] sm:$0xff] %v3434
  %3451 = vst [vmem:[#allocation3 + $0x28] sm:$0xff] %v3435
  %3452 = vst [vmem:[#allocation3 + $0x30] sm:$0xff] %v3436
  %3453 = vst [vmem:[#allocation3 + $0x38] sm:$0xff] %v3437
  %3454 = vst [vmem:[#allocation3 + $0x40] sm:$0xff] %v3438
  %3455 = vst [vmem:[#allocation3 + $0x48] sm:$0xff] %v3439
  %3456 = vst [vmem:[#allocation3 + $0x50] sm:$0xff] %v3440
  %3457 = vst [vmem:[#allocation3 + $0x58] sm:$0xff] %v3441
  %3458 = vst [vmem:[#allocation3 + $0x60] sm:$0xff] %v3442
  %3459 = vst [vmem:[#allocation3 + $0x68] sm:$0xff] %v3443
  %3460 = vst [vmem:[#allocation3 + $0x70] sm:$0xff] %v3444
  %3461 = vst [vmem:[#allocation3 + $0x78] sm:$0xff] %v3445
  %v3462 = vld [vmem:[#allocation3] sm:$0xff]
  %v3463 = vld [vmem:[#allocation3 + $0x8] sm:$0xff]
  %v3464 = vld [vmem:[#allocation3 + $0x10] sm:$0xff]
  %v3465 = vld [vmem:[#allocation3 + $0x18] sm:$0xff]
  %v3466 = vld [vmem:[#allocation3 + $0x20] sm:$0xff]
  %v3467 = vld [vmem:[#allocation3 + $0x28] sm:$0xff]
  %v3468 = vld [vmem:[#allocation3 + $0x30] sm:$0xff]
  %v3469 = vld [vmem:[#allocation3 + $0x38] sm:$0xff]
  %v3470 = vld [vmem:[#allocation3 + $0x40] sm:$0xff]
  %v3471 = vld [vmem:[#allocation3 + $0x48] sm:$0xff]
  %v3472 = vld [vmem:[#allocation3 + $0x50] sm:$0xff]
  %v3473 = vld [vmem:[#allocation3 + $0x58] sm:$0xff]
  %v3474 = vld [vmem:[#allocation3 + $0x60] sm:$0xff]
  %v3475 = vld [vmem:[#allocation3 + $0x68] sm:$0xff]
  %v3476 = vld [vmem:[#allocation3 + $0x70] sm:$0xff]
  %v3477 = vld [vmem:[#allocation3 + $0x78] sm:$0xff]
  %v3478 = vadd.f32 %v3462, %v3463
  %v3479 = vadd.f32 %v3478, %v3464
  %v3480 = vadd.f32 %v3479, %v3465
  %v3481 = vadd.f32 %v3480, %v3466
  %v3482 = vadd.f32 %v3481, %v3467
  %v3483 = vadd.f32 %v3482, %v3468
  %v3484 = vadd.f32 %v3483, %v3469
  %v3485 = vadd.f32 %v3484, %v3470
  %v3486 = vadd.f32 %v3485, %v3471
  %v3487 = vadd.f32 %v3486, %v3472
  %v3488 = vadd.f32 %v3487, %v3473
  %v3489 = vadd.f32 %v3488, %v3474
  %v3490 = vadd.f32 %v3489, %v3475
  %v3491 = vadd.f32 %v3490, %v3476
  %v3492 = vadd.f32 %v3491, %v3477
  %v3493 = vrot.slane %v3492, 4
  %v3494 = vadd.f32 %v3492, %v3493
  %v3495 = vrot.slane %v3494, 2
  %v3496 = vadd.f32 %v3494, %v3495
  %v3497 = vrot.slane %v3496, 1
  %v3498 = vadd.f32 %v3496, %v3497
  %v3499 = vmul.f32 %v3498, 0.0078125
  %v3500 = vmul.f32 %v3462, %v3462
  %v3501 = vmul.f32 %v3463, %v3463
  %v3502 = vmul.f32 %v3464, %v3464
  %v3503 = vmul.f32 %v3465, %v3465
  %v3504 = vmul.f32 %v3466, %v3466
  %v3505 = vmul.f32 %v3467, %v3467
  %v3506 = vmul.f32 %v3468, %v3468
  %v3507 = vmul.f32 %v3469, %v3469
  %v3508 = vmul.f32 %v3470, %v3470
  %v3509 = vmul.f32 %v3471, %v3471
  %v3510 = vmul.f32 %v3472, %v3472
  %v3511 = vmul.f32 %v3473, %v3473
  %v3512 = vmul.f32 %v3474, %v3474
  %v3513 = vmul.f32 %v3475, %v3475
  %v3514 = vmul.f32 %v3476, %v3476
  %v3515 = vmul.f32 %v3477, %v3477
  %v3516 = vadd.f32 %v3500, %v3501
  %v3517 = vadd.f32 %v3516, %v3502
  %v3518 = vadd.f32 %v3517, %v3503
  %v3519 = vadd.f32 %v3518, %v3504
  %v3520 = vadd.f32 %v3519, %v3505
  %v3521 = vadd.f32 %v3520, %v3506
  %v3522 = vadd.f32 %v3521, %v3507
  %v3523 = vadd.f32 %v3522, %v3508
  %v3524 = vadd.f32 %v3523, %v3509
  %v3525 = vadd.f32 %v3524, %v3510
  %v3526 = vadd.f32 %v3525, %v3511
  %v3527 = vadd.f32 %v3526, %v3512
  %v3528 = vadd.f32 %v3527, %v3513
  %v3529 = vadd.f32 %v3528, %v3514
  %v3530 = vadd.f32 %v3529, %v3515
  %v3531 = vrot.slane %v3530, 4
  %v3532 = vadd.f32 %v3530, %v3531
  %v3533 = vrot.slane %v3532, 2
  %v3534 = vadd.f32 %v3532, %v3533
  %v3535 = vrot.slane %v3534, 1
  %v3536 = vadd.f32 %v3534, %v3535
  %v3537 = vmul.f32 %v3536, 0.0078125
  %v3538 = vmul.f32 %v3499, %v3499
  %v3539 = vsub.f32 %v3537, %v3538
  %v3540 = vld [vmem:[%s5] sm:$0x1]
  %v3541 = vadd.f32 %v3539, 1e-05
  %v3542 = vrsqrt.pop %v3541
  %v3543 = vmul.f32 %v3540, %v3542
  %v3544 = vld [vmem:[%s6] sm:$0x1]
  %v3545 = vmul.f32 %v3499, %v3543
  %v3546 = vsub.f32 %v3544, %v3545
  %v3548 = vlaneseq
  %v3549 = vshrl.u32 %v3548, 7
  %v3550 = vsub.s32 0, %v3549
  %v3551 = vrot.slane %v3543, %v3550
  %v3553 = vmul.f32 %v3462, %v3551
  %v3554 = vmul.f32 %v3463, %v3551
  %v3555 = vmul.f32 %v3464, %v3551
  %v3556 = vmul.f32 %v3465, %v3551
  %v3557 = vmul.f32 %v3466, %v3551
  %v3558 = vmul.f32 %v3467, %v3551
  %v3559 = vmul.f32 %v3468, %v3551
  %v3560 = vmul.f32 %v3469, %v3551
  %v3561 = vmul.f32 %v3470, %v3551
  %v3562 = vmul.f32 %v3471, %v3551
  %v3563 = vmul.f32 %v3472, %v3551
  %v3564 = vmul.f32 %v3473, %v3551
  %v3565 = vmul.f32 %v3474, %v3551
  %v3566 = vmul.f32 %v3475, %v3551
  %v3567 = vmul.f32 %v3476, %v3551
  %v3568 = vmul.f32 %v3477, %v3551
  %v3570 = vlaneseq
  %v3571 = vshrl.u32 %v3570, 7
  %v3572 = vsub.s32 0, %v3571
  %v3573 = vrot.slane %v3546, %v3572
  %v3575 = vadd.f32 %v3553, %v3573
  %v3576 = vadd.f32 %v3554, %v3573
  %v3577 = vadd.f32 %v3555, %v3573
  %v3578 = vadd.f32 %v3556, %v3573
  %v3579 = vadd.f32 %v3557, %v3573
  %v3580 = vadd.f32 %v3558, %v3573
  %v3581 = vadd.f32 %v3559, %v3573
  %v3582 = vadd.f32 %v3560, %v3573
  %v3583 = vadd.f32 %v3561, %v3573
  %v3584 = vadd.f32 %v3562, %v3573
  %v3585 = vadd.f32 %v3563, %v3573
  %v3586 = vadd.f32 %v3564, %v3573
  %v3587 = vadd.f32 %v3565, %v3573
  %v3588 = vadd.f32 %v3566, %v3573
  %v3589 = vadd.f32 %v3567, %v3573
  %v3590 = vadd.f32 %v3568, %v3573
  %v3591 = vmax.f32 %v3575, 0.0
  %v3592 = vmax.f32 %v3576, 0.0
  %v3593 = vmax.f32 %v3577, 0.0
  %v3594 = vmax.f32 %v3578, 0.0
  %v3595 = vmax.f32 %v3579, 0.0
  %v3596 = vmax.f32 %v3580, 0.0
  %v3597 = vmax.f32 %v3581, 0.0
  %v3598 = vmax.f32 %v3582, 0.0
  %v3599 = vmax.f32 %v3583, 0.0
  %v3600 = vmax.f32 %v3584, 0.0
  %v3601 = vmax.f32 %v3585, 0.0
  %v3602 = vmax.f32 %v3586, 0.0
  %v3603 = vmax.f32 %v3587, 0.0
  %v3604 = vmax.f32 %v3588, 0.0
  %v3605 = vmax.f32 %v3589, 0.0
  %v3606 = vmax.f32 %v3590, 0.0
  %v3607 = vpack.c.bf16 %v3592, %v3591
  %v3608 = vpack.c.bf16 %v3594, %v3593
  %v3609 = vpack.c.bf16 %v3596, %v3595
  %v3610 = vpack.c.bf16 %v3598, %v3597
  %v3611 = vpack.c.bf16 %v3600, %v3599
  %v3612 = vpack.c.bf16 %v3602, %v3601
  %v3613 = vpack.c.bf16 %v3604, %v3603
  %v3614 = vpack.c.bf16 %v3606, %v3605
  %v3615 = vld [vmem:[%s7] sm:$0xf]
  %v3616 = vld [vmem:[%s7 + $0x4] sm:$0xf]
  %v3617 = vld [vmem:[%s7 + $0x8] sm:$0xf]
  %v3618 = vld [vmem:[%s7 + $0xc] sm:$0xf]
  %v3619 = vld [vmem:[%s7 + $0x10] sm:$0xf]
  %v3620 = vld [vmem:[%s7 + $0x14] sm:$0xf]
  %v3621 = vld [vmem:[%s7 + $0x18] sm:$0xf]
  %v3622 = vld [vmem:[%s7 + $0x1c] sm:$0xf]
  %v3623 = vld [vmem:[%s7 + $0x20] sm:$0xf]
  %v3624 = vld [vmem:[%s7 + $0x24] sm:$0xf]
  %v3625 = vld [vmem:[%s7 + $0x28] sm:$0xf]
  %v3626 = vld [vmem:[%s7 + $0x2c] sm:$0xf]
  %v3627 = vld [vmem:[%s7 + $0x30] sm:$0xf]
  %v3628 = vld [vmem:[%s7 + $0x34] sm:$0xf]
  %v3629 = vld [vmem:[%s7 + $0x38] sm:$0xf]
  %v3630 = vld [vmem:[%s7 + $0x3c] sm:$0xf]
  %v3647 = vunpack.c.l.b16 %v3615
  %v3648 = vunpack.c.l.b16 %v3616
  %v3649 = vunpack.c.l.b16 %v3617
  %v3650 = vunpack.c.l.b16 %v3618
  %v3651 = vunpack.c.l.b16 %v3619
  %v3652 = vunpack.c.l.b16 %v3620
  %v3653 = vunpack.c.l.b16 %v3621
  %v3654 = vunpack.c.l.b16 %v3622
  %v3655 = vunpack.c.l.b16 %v3623
  %v3656 = vunpack.c.l.b16 %v3624
  %v3657 = vunpack.c.l.b16 %v3625
  %v3658 = vunpack.c.l.b16 %v3626
  %v3659 = vunpack.c.l.b16 %v3627
  %v3660 = vunpack.c.l.b16 %v3628
  %v3661 = vunpack.c.l.b16 %v3629
  %v3662 = vunpack.c.l.b16 %v3630
  %v3663 = vpack.c.b16 %v3648, %v3647
  %v3664 = vpack.c.b16 %v3650, %v3649
  %v3665 = vpack.c.b16 %v3652, %v3651
  %v3666 = vpack.c.b16 %v3654, %v3653
  %v3667 = vpack.c.b16 %v3656, %v3655
  %v3668 = vpack.c.b16 %v3658, %v3657
  %v3669 = vpack.c.b16 %v3660, %v3659
  %v3670 = vpack.c.b16 %v3662, %v3661
  %3679 = vmatprep.subr.bf16.mxu0 0
  %3680 = vmatpush1.bf16.msra.mxu0 %v3663
  %3681 = vmatprep.subr.bf16.mxu0 0
  %3682 = vmatpush1.bf16.msra.mxu0 %v3664
  %3683 = vmatprep.subr.bf16.mxu0 0
  %3684 = vmatpush1.bf16.msra.mxu0 %v3665
  %3685 = vmatprep.subr.bf16.mxu0 0
  %3686 = vmatpush1.bf16.msra.mxu0 %v3666
  %3687 = vmatprep.subr.bf16.mxu0 0
  %3688 = vmatpush1.bf16.msra.mxu0 %v3667
  %3689 = vmatprep.subr.bf16.mxu0 0
  %3690 = vmatpush1.bf16.msra.mxu0 %v3668
  %3691 = vmatprep.subr.bf16.mxu0 0
  %3692 = vmatpush1.bf16.msra.mxu0 %v3669
  %3693 = vmatprep.subr.bf16.mxu0 0
  %3694 = vmatpush1.bf16.msra.mxu0 %v3670
  %3695 = vmatprep.subr.bf16.mxu0 0
  %3696 = vmatpush1.bf16.msra.mxu0 0
  %3697 = vmatprep.subr.bf16.mxu0 0
  %3698 = vmatpush1.bf16.msra.mxu0 0
  %3699 = vmatprep.subr.bf16.mxu0 0
  %3700 = vmatpush1.bf16.msra.mxu0 0
  %3701 = vmatprep.subr.bf16.mxu0 0
  %3702 = vmatpush1.bf16.msra.mxu0 0
  %3703 = vmatprep.subr.bf16.mxu0 0
  %3704 = vmatpush1.bf16.msra.mxu0 0
  %3705 = vmatprep.subr.bf16.mxu0 0
  %3706 = vmatpush1.bf16.msra.mxu0 0
  %3707 = vmatprep.subr.bf16.mxu0 0
  %3708 = vmatpush1.bf16.msra.mxu0 0
  %3709 = vmatprep.subr.bf16.mxu0 0
  %3710 = vmatpush1.bf16.msra.mxu0 0
  %3711 = vmatprep.mubr.bf16.mxu0 0
  %3712 = vmatmul.mubr.bf16.gmra.mrb[0].mxu0 %v3607
  %v3713 = vpop.f32.mrb[0].mxu0
  %v3714 = vadd.f32 0.0, %v3713
  %v3715 = vpop.f32.mrb[0].mxu0
  %v3716 = vpop.f32.mrb[0].mxu0
  %v3717 = vadd.f32 0.0, %v3716
  %v3718 = vpop.f32.mrb[0].mxu0
  %3719 = vmatprep.mubr.bf16.mxu0 0
  %3720 = vmatmul.mubr.bf16.gmra.mrb[0].mxu0 %v3608
  %v3721 = vpop.f32.mrb[0].mxu0
  %v3722 = vadd.f32 0.0, %v3721
  %v3723 = vpop.f32.mrb[0].mxu0
  %v3724 = vpop.f32.mrb[0].mxu0
  %v3725 = vadd.f32 0.0, %v3724
  %v3726 = vpop.f32.mrb[0].mxu0
  %3727 = vmatprep.mubr.bf16.mxu0 0
  %3728 = vmatmul.mubr.bf16.gmra.mrb[0].mxu0 %v3609
  %v3729 = vpop.f32.mrb[0].mxu0
  %v3730 = vadd.f32 0.0, %v3729
  %v3731 = vpop.f32.mrb[0].mxu0
  %v3732 = vpop.f32.mrb[0].mxu0
  %v3733 = vadd.f32 0.0, %v3732
  %v3734 = vpop.f32.mrb[0].mxu0
  %3735 = vmatprep.mubr.bf16.mxu0 0
  %3736 = vmatmul.mubr.bf16.gmra.mrb[0].mxu0 %v3610
  %v3737 = vpop.f32.mrb[0].mxu0
  %v3738 = vadd.f32 0.0, %v3737
  %v3739 = vpop.f32.mrb[0].mxu0
  %v3740 = vpop.f32.mrb[0].mxu0
  %v3741 = vadd.f32 0.0, %v3740
  %v3742 = vpop.f32.mrb[0].mxu0
  %3743 = vmatprep.mubr.bf16.mxu0 0
  %3744 = vmatmul.mubr.bf16.gmra.mrb[0].mxu0 %v3611
  %v3745 = vpop.f32.mrb[0].mxu0
  %v3746 = vadd.f32 0.0, %v3745
  %v3747 = vpop.f32.mrb[0].mxu0
  %v3748 = vpop.f32.mrb[0].mxu0
  %v3749 = vadd.f32 0.0, %v3748
  %v3750 = vpop.f32.mrb[0].mxu0
  %3751 = vmatprep.mubr.bf16.mxu0 0
  %3752 = vmatmul.mubr.bf16.gmra.mrb[0].mxu0 %v3612
  %v3753 = vpop.f32.mrb[0].mxu0
  %v3754 = vadd.f32 0.0, %v3753
  %v3755 = vpop.f32.mrb[0].mxu0
  %v3756 = vpop.f32.mrb[0].mxu0
  %v3757 = vadd.f32 0.0, %v3756
  %v3758 = vpop.f32.mrb[0].mxu0
  %3759 = vmatprep.mubr.bf16.mxu0 0
  %3760 = vmatmul.mubr.bf16.gmra.mrb[0].mxu0 %v3613
  %v3761 = vpop.f32.mrb[0].mxu0
  %v3762 = vadd.f32 0.0, %v3761
  %v3763 = vpop.f32.mrb[0].mxu0
  %v3764 = vpop.f32.mrb[0].mxu0
  %v3765 = vadd.f32 0.0, %v3764
  %v3766 = vpop.f32.mrb[0].mxu0
  %3767 = vmatprep.mubr.bf16.mxu0 0
  %3768 = vmatmul.mubr.bf16.gmra.mrb[0].mxu0 %v3614
  %v3769 = vpop.f32.mrb[0].mxu0
  %v3770 = vadd.f32 0.0, %v3769
  %v3771 = vpop.f32.mrb[0].mxu0
  %v3772 = vpop.f32.mrb[0].mxu0
  %v3773 = vadd.f32 0.0, %v3772
  %v3774 = vpop.f32.mrb[0].mxu0
  %3775 = vdwg.mxu0
  %v3776 = vadd.f32 %v3714, %v3717
  %v3777 = vadd.f32 %v3776, %v3722
  %v3778 = vadd.f32 %v3777, %v3725
  %v3779 = vadd.f32 %v3778, %v3730
  %v3780 = vadd.f32 %v3779, %v3733
  %v3781 = vadd.f32 %v3780, %v3738
  %v3782 = vadd.f32 %v3781, %v3741
  %v3783 = vadd.f32 %v3782, %v3746
  %v3784 = vadd.f32 %v3783, %v3749
  %v3785 = vadd.f32 %v3784, %v3754
  %v3786 = vadd.f32 %v3785, %v3757
  %v3787 = vadd.f32 %v3786, %v3762
  %v3788 = vadd.f32 %v3787, %v3765
  %v3789 = vadd.f32 %v3788, %v3770
  %v3790 = vadd.f32 %v3789, %v3773
  %v3791 = vrot.slane %v3790, 4
  %v3792 = vadd.f32 %v3790, %v3791
  %v3793 = vrot.slane %v3792, 2
  %v3794 = vadd.f32 %v3792, %v3793
  %v3795 = vrot.slane %v3794, 1
  %v3796 = vadd.f32 %v3794, %v3795
  %v3797 = vmul.f32 %v3796, 0.0078125
  %v3798 = vmul.f32 %v3714, %v3714
  %v3799 = vmul.f32 %v3717, %v3717
  %v3800 = vmul.f32 %v3722, %v3722
  %v3801 = vmul.f32 %v3725, %v3725
  %v3802 = vmul.f32 %v3730, %v3730
  %v3803 = vmul.f32 %v3733, %v3733
  %v3804 = vmul.f32 %v3738, %v3738
  %v3805 = vmul.f32 %v3741, %v3741
  %v3806 = vmul.f32 %v3746, %v3746
  %v3807 = vmul.f32 %v3749, %v3749
  %v3808 = vmul.f32 %v3754, %v3754
  %v3809 = vmul.f32 %v3757, %v3757
  %v3810 = vmul.f32 %v3762, %v3762
  %v3811 = vmul.f32 %v3765, %v3765
  %v3812 = vmul.f32 %v3770, %v3770
  %v3813 = vmul.f32 %v3773, %v3773
  %v3814 = vadd.f32 %v3798, %v3799
  %v3815 = vadd.f32 %v3814, %v3800
  %v3816 = vadd.f32 %v3815, %v3801
  %v3817 = vadd.f32 %v3816, %v3802
  %v3818 = vadd.f32 %v3817, %v3803
  %v3819 = vadd.f32 %v3818, %v3804
  %v3820 = vadd.f32 %v3819, %v3805
  %v3821 = vadd.f32 %v3820, %v3806
  %v3822 = vadd.f32 %v3821, %v3807
  %v3823 = vadd.f32 %v3822, %v3808
  %v3824 = vadd.f32 %v3823, %v3809
  %v3825 = vadd.f32 %v3824, %v3810
  %v3826 = vadd.f32 %v3825, %v3811
  %v3827 = vadd.f32 %v3826, %v3812
  %v3828 = vadd.f32 %v3827, %v3813
  %v3829 = vrot.slane %v3828, 4
  %v3830 = vadd.f32 %v3828, %v3829
  %v3831 = vrot.slane %v3830, 2
  %v3832 = vadd.f32 %v3830, %v3831
  %v3833 = vrot.slane %v3832, 1
  %v3834 = vadd.f32 %v3832, %v3833
  %v3835 = vmul.f32 %v3834, 0.0078125
  %v3836 = vmul.f32 %v3797, %v3797
  %v3837 = vsub.f32 %v3835, %v3836
  %v3838 = vld [vmem:[%s8] sm:$0x1]
  %v3839 = vadd.f32 %v3837, 1e-05
  %v3840 = vrsqrt.pop %v3839
  %v3841 = vmul.f32 %v3838, %v3840
  %v3842 = vld [vmem:[%s9] sm:$0x1]
  %v3843 = vmul.f32 %v3797, %v3841
  %v3844 = vsub.f32 %v3842, %v3843
  %v3846 = vlaneseq
  %v3847 = vshrl.u32 %v3846, 7
  %v3848 = vsub.s32 0, %v3847
  %v3849 = vrot.slane %v3841, %v3848
  %v3851 = vmul.f32 %v3714, %v3849
  %v3852 = vmul.f32 %v3717, %v3849
  %v3853 = vmul.f32 %v3722, %v3849
  %v3854 = vmul.f32 %v3725, %v3849
  %v3855 = vmul.f32 %v3730, %v3849
  %v3856 = vmul.f32 %v3733, %v3849
  %v3857 = vmul.f32 %v3738, %v3849
  %v3858 = vmul.f32 %v3741, %v3849
  %v3859 = vmul.f32 %v3746, %v3849
  %v3860 = vmul.f32 %v3749, %v3849
  %v3861 = vmul.f32 %v3754, %v3849
  %v3862 = vmul.f32 %v3757, %v3849
  %v3863 = vmul.f32 %v3762, %v3849
  %v3864 = vmul.f32 %v3765, %v3849
  %v3865 = vmul.f32 %v3770, %v3849
  %v3866 = vmul.f32 %v3773, %v3849
  %v3868 = vlaneseq
  %v3869 = vshrl.u32 %v3868, 7
  %v3870 = vsub.s32 0, %v3869
  %v3871 = vrot.slane %v3844, %v3870
  %v3873 = vadd.f32 %v3851, %v3871
  %v3874 = vadd.f32 %v3852, %v3871
  %v3875 = vadd.f32 %v3853, %v3871
  %v3876 = vadd.f32 %v3854, %v3871
  %v3877 = vadd.f32 %v3855, %v3871
  %v3878 = vadd.f32 %v3856, %v3871
  %v3879 = vadd.f32 %v3857, %v3871
  %v3880 = vadd.f32 %v3858, %v3871
  %v3881 = vadd.f32 %v3859, %v3871
  %v3882 = vadd.f32 %v3860, %v3871
  %v3883 = vadd.f32 %v3861, %v3871
  %v3884 = vadd.f32 %v3862, %v3871
  %v3885 = vadd.f32 %v3863, %v3871
  %v3886 = vadd.f32 %v3864, %v3871
  %v3887 = vadd.f32 %v3865, %v3871
  %v3888 = vadd.f32 %v3866, %v3871
  %v3889 = vadd.f32 %v3873, %v626
  %v3890 = vadd.f32 %v3874, %v629
  %v3891 = vadd.f32 %v3875, %v634
  %v3892 = vadd.f32 %v3876, %v637
  %v3893 = vadd.f32 %v3877, %v642
  %v3894 = vadd.f32 %v3878, %v645
  %v3895 = vadd.f32 %v3879, %v650
  %v3896 = vadd.f32 %v3880, %v653
  %v3897 = vadd.f32 %v3881, %v658
  %v3898 = vadd.f32 %v3882, %v661
  %v3899 = vadd.f32 %v3883, %v666
  %v3900 = vadd.f32 %v3884, %v669
  %v3901 = vadd.f32 %v3885, %v674
  %v3902 = vadd.f32 %v3886, %v677
  %v3903 = vadd.f32 %v3887, %v682
  %v3904 = vadd.f32 %v3888, %v685
  %v3905 = vmax.f32 %v3889, 0.0
  %v3906 = vmax.f32 %v3890, 0.0
  %v3907 = vmax.f32 %v3891, 0.0
  %v3908 = vmax.f32 %v3892, 0.0
  %v3909 = vmax.f32 %v3893, 0.0
  %v3910 = vmax.f32 %v3894, 0.0
  %v3911 = vmax.f32 %v3895, 0.0
  %v3912 = vmax.f32 %v3896, 0.0
  %v3913 = vmax.f32 %v3897, 0.0
  %v3914 = vmax.f32 %v3898, 0.0
  %v3915 = vmax.f32 %v3899, 0.0
  %v3916 = vmax.f32 %v3900, 0.0
  %v3917 = vmax.f32 %v3901, 0.0
  %v3918 = vmax.f32 %v3902, 0.0
  %v3919 = vmax.f32 %v3903, 0.0
  %v3920 = vmax.f32 %v3904, 0.0
  %3921 = vst [vmem:[%s11] sm:$0xff] %v3905
  %3922 = vst [vmem:[%s11 + $0x8] sm:$0xff] %v3906
  %3923 = vst [vmem:[%s11 + $0x10] sm:$0xff] %v3907
  %3924 = vst [vmem:[%s11 + $0x18] sm:$0xff] %v3908
  %3925 = vst [vmem:[%s11 + $0x20] sm:$0xff] %v3909
  %3926 = vst [vmem:[%s11 + $0x28] sm:$0xff] %v3910
  %3927 = vst [vmem:[%s11 + $0x30] sm:$0xff] %v3911
  %3928 = vst [vmem:[%s11 + $0x38] sm:$0xff] %v3912
  %3929 = vst [vmem:[%s11 + $0x40] sm:$0xff] %v3913
  %3930 = vst [vmem:[%s11 + $0x48] sm:$0xff] %v3914
  %3931 = vst [vmem:[%s11 + $0x50] sm:$0xff] %v3915
  %3932 = vst [vmem:[%s11 + $0x58] sm:$0xff] %v3916
  %3933 = vst [vmem:[%s11 + $0x60] sm:$0xff] %v3917
  %3934 = vst [vmem:[%s11 + $0x68] sm:$0xff] %v3918
  %3935 = vst [vmem:[%s11 + $0x70] sm:$0xff] %v3919
  %3936 = vst [vmem:[%s11 + $0x78] sm:$0xff] %v3920
  // Predicated region
  $region46: #{bottleneck_forward.1} parent=0 // pred_check
    _
  $region47: #{bottleneck_forward.1} parent=0 // pred_check_branch
    %3938 = sbr.rel (0) target = $region49
  $region48: #{bottleneck_forward.1} parent=0 // pred_region
    _
  $region49: #{bottleneck_forward.1} parent=0 // pred_fallthru
    _
  // Predicated region
  $region50: #{bottleneck_forward.1} parent=0 // pred_check
    _
  $region51: #{bottleneck_forward.1} parent=0 // pred_check_branch
    %3940 = sbr.rel (0) target = $region53
  $region52: #{bottleneck_forward.1} parent=0 // pred_region
    _
  $region53: #{bottleneck_forward.1} parent=0 // pred_fallthru
    _

</llo_original>
